<compile_context>
chip_gen: v6e
topology: v6e:2x2x1
jax: 0.10.0
libtpu: 0.0.40
codegen_flags: <defaults>
</compile_context>

<pallas_src>
import numpy as np
import jax
import jax.numpy as jnp
from jax.experimental import pallas as pl
from jax.experimental.pallas import tpu as pltpu

# ---- small synthetic dims (consistent with the module's forward) ----
B = 2          # number of prompts / classes
L = 8          # context length
D = 32         # transformer width
H = 4          # attention heads
DH = D // H    # head dim
FF = 4 * D     # MLP hidden
P = 16         # projection (text embedding) dim
PPAD = 128     # lane-dense padded projection width (multiple of 128)
NL = 2         # transformer layers
EPS = 1e-5
BL = B * L     # folded batch*sequence rows


def _layer_norm(x, g, b):
    mu = jnp.mean(x, axis=-1, keepdims=True)
    var = jnp.mean((x - mu) ** 2, axis=-1, keepdims=True)
    return (x - mu) * jax.lax.rsqrt(var + EPS) * g + b


def text_encoder_kernel(x_ref, mask_ref,
                        ln0g_ref, ln0b_ref,
                        wq_ref, bq_ref, wk_ref, bk_ref, wv_ref, bv_ref,
                        wo_ref, bo_ref,
                        ln1g_ref, ln1b_ref,
                        wfc1_ref, bfc1_ref, wfc2_ref, bfc2_ref,
                        ln2g_ref, ln2b_ref,
                        wproj_ref, bproj_ref,
                        out_ref):
    # single grid step: all prompts folded into rows
    x = x_ref[...]                 # (B*L, D) f32
    mask = mask_ref[...]           # (B*L, B*L) additive mask (0 within prompt & valid key, else -1e9)
    scale = 1.0 / (DH ** 0.5)

    # embedding LayerNorm (prompts arrive as raw embeddings, BERT-style)
    x = _layer_norm(x, ln0g_ref[...], ln0b_ref[...])

    for l in range(NL):
        # ---- multi-head self-attention (post-LN BERT block) ----
        xb = x.astype(jnp.bfloat16)
        attn_out = jnp.zeros((BL, D), jnp.float32)
        for h in range(H):
            qh = jnp.dot(xb, wq_ref[l, h], preferred_element_type=jnp.float32) + bq_ref[l, h]
            kh = jnp.dot(xb, wk_ref[l, h], preferred_element_type=jnp.float32) + bk_ref[l, h]
            vh = jnp.dot(xb, wv_ref[l, h], preferred_element_type=jnp.float32) + bv_ref[l, h]
            # scores on folded rows; block-diagonal mask keeps prompts independent
            s = jnp.dot(qh.astype(jnp.bfloat16), kh.T.astype(jnp.bfloat16),
                        preferred_element_type=jnp.float32)
            s = s * scale + mask
            s = s - jnp.max(s, axis=-1, keepdims=True)
            e = jnp.exp(s)
            p_attn = e * pl.reciprocal(jnp.sum(e, axis=-1, keepdims=True), approx=True)
            ctx = jnp.dot(p_attn.astype(jnp.bfloat16), vh.astype(jnp.bfloat16),
                          preferred_element_type=jnp.float32)
            attn_out = attn_out + jnp.dot(ctx.astype(jnp.bfloat16), wo_ref[l, h],
                                          preferred_element_type=jnp.float32)
        x = _layer_norm(x + attn_out + bo_ref[l], ln1g_ref[l], ln1b_ref[l])

        # ---- MLP ----
        xb2 = x.astype(jnp.bfloat16)
        hmid = jnp.dot(xb2, wfc1_ref[l], preferred_element_type=jnp.float32) + bfc1_ref[l]
        hmid = jax.nn.gelu(hmid, approximate=True)
        mlp_out = jnp.dot(hmid.astype(jnp.bfloat16), wfc2_ref[l],
                          preferred_element_type=jnp.float32) + bfc2_ref[l]
        x = _layer_norm(x + mlp_out, ln2g_ref[l], ln2b_ref[l])

    # ---- CLS pooling -> projection -> L2 normalize (encode_text(..., True, ...)) ----
    cls = jnp.concatenate([x[b * L:b * L + 1, :] for b in range(B)], axis=0)   # (B, D)
    proj = jnp.dot(cls.astype(jnp.bfloat16), wproj_ref[...],
                   preferred_element_type=jnp.float32) + bproj_ref[...]        # (B, PPAD)
    # padded lanes are exactly zero, so the norm over PPAD lanes equals the norm over P lanes
    proj = proj * jax.lax.rsqrt(jnp.sum(proj * proj, axis=-1, keepdims=True) + 1e-12)
    out_ref[...] = proj


def text_encoder(prompts, tokenized_prompts, params):
    """prompts: (B, L, D) f32, tokenized_prompts: (B, L) int32 -> (B, P) f32."""
    x_flat = prompts.reshape(BL, D).astype(jnp.float32)

    # block-diagonal (per-prompt) + key-padding additive mask, prebuilt lane-dense
    bidx = jnp.arange(BL, dtype=jnp.int32) // L
    same_prompt = bidx[:, None] == bidx[None, :]
    key_valid = (tokenized_prompts.reshape(BL) != 0)[None, :]
    add_mask = jnp.where(same_prompt & key_valid, 0.0, -1e9).astype(jnp.float32)

    # lane-dense (128-wide) projection; zero padding keeps the L2 normalization exact
    wproj_pad = jnp.zeros((D, PPAD), jnp.float32).at[:, :P].set(params["wproj"])
    bproj_pad = jnp.zeros((1, PPAD), jnp.float32).at[:, :P].set(params["bproj"])

    bf16 = lambda a: a.astype(jnp.bfloat16)   # MXU operands only; LN/softmax stay f32
    weights = [
        params["ln0_g"], params["ln0_b"],
        bf16(params["wq"]), params["bq"],
        bf16(params["wk"]), params["bk"],
        bf16(params["wv"]), params["bv"],
        bf16(params["wo"]), params["bo"],
        params["ln1_g"], params["ln1_b"],
        bf16(params["wfc1"]), params["bfc1"],
        bf16(params["wfc2"]), params["bfc2"],
        params["ln2_g"], params["ln2_b"],
        bf16(wproj_pad), bproj_pad,
    ]

    def full_spec(a):
        nd = a.ndim
        return pl.BlockSpec(a.shape, lambda i, _nd=nd: (0,) * _nd)

    in_specs = [full_spec(x_flat), full_spec(add_mask)] + [full_spec(w) for w in weights]

    out = pl.pallas_call(
        text_encoder_kernel,
        grid=(1,),                                   # single step: batch folded into rows
        in_specs=in_specs,
        out_specs=pl.BlockSpec((B, PPAD), lambda i: (0, 0)),
        out_shape=jax.ShapeDtypeStruct((B, PPAD), jnp.float32),
        compiler_params=pltpu.CompilerParams(dimension_semantics=("arbitrary",)),
    )(x_flat, add_mask, *weights)
    return out[:, :P]


def init_params(key):
    ks = jax.random.split(key, 14)
    s = 0.02
    return {
        "ln0_g": jnp.ones((1, D), jnp.float32),
        "ln0_b": jnp.zeros((1, D), jnp.float32),
        "wq": s * jax.random.normal(ks[0], (NL, H, D, DH), jnp.float32),
        "bq": s * jax.random.normal(ks[1], (NL, H, 1, DH), jnp.float32),
        "wk": s * jax.random.normal(ks[2], (NL, H, D, DH), jnp.float32),
        "bk": s * jax.random.normal(ks[3], (NL, H, 1, DH), jnp.float32),
        "wv": s * jax.random.normal(ks[4], (NL, H, D, DH), jnp.float32),
        "bv": s * jax.random.normal(ks[5], (NL, H, 1, DH), jnp.float32),
        "wo": s * jax.random.normal(ks[6], (NL, H, DH, D), jnp.float32),
        "bo": s * jax.random.normal(ks[7], (NL, 1, D), jnp.float32),
        "ln1_g": jnp.ones((NL, 1, D), jnp.float32),
        "ln1_b": jnp.zeros((NL, 1, D), jnp.float32),
        "wfc1": s * jax.random.normal(ks[8], (NL, D, FF), jnp.float32),
        "bfc1": s * jax.random.normal(ks[9], (NL, 1, FF), jnp.float32),
        "wfc2": s * jax.random.normal(ks[10], (NL, FF, D), jnp.float32),
        "bfc2": s * jax.random.normal(ks[11], (NL, 1, D), jnp.float32),
        "ln2_g": jnp.ones((NL, 1, D), jnp.float32),
        "ln2_b": jnp.zeros((NL, 1, D), jnp.float32),
        "wproj": s * jax.random.normal(ks[12], (D, P), jnp.float32),
        "bproj": s * jax.random.normal(ks[13], (1, P), jnp.float32),
    }


def reference(prompts, tokenized_prompts, params):
    """Pure-JAX f32 reference mirroring the module math (per-prompt, per-head)."""
    add_mask = jnp.where(tokenized_prompts != 0, 0.0, -1e9).astype(jnp.float32)
    scale = 1.0 / (DH ** 0.5)

    def one(x, mask_row):
        mask = mask_row[None, :]
        x = _layer_norm(x, params["ln0_g"], params["ln0_b"])
        for l in range(NL):
            attn_out = jnp.zeros((L, D), jnp.float32)
            for h in range(H):
                q = x @ params["wq"][l, h] + params["bq"][l, h]
                k = x @ params["wk"][l, h] + params["bk"][l, h]
                v = x @ params["wv"][l, h] + params["bv"][l, h]
                s = q @ k.T * scale + mask
                s = s - jnp.max(s, axis=-1, keepdims=True)
                e = jnp.exp(s)
                p_attn = e / jnp.sum(e, axis=-1, keepdims=True)
                attn_out = attn_out + (p_attn @ v) @ params["wo"][l, h]
            x = _layer_norm(x + attn_out + params["bo"][l],
                            params["ln1_g"][l], params["ln1_b"][l])
            hmid = jax.nn.gelu(x @ params["wfc1"][l] + params["bfc1"][l], approximate=True)
            x = _layer_norm(x + hmid @ params["wfc2"][l] + params["bfc2"][l],
                            params["ln2_g"][l], params["ln2_b"][l])
        proj = x[0:1, :] @ params["wproj"] + params["bproj"]
        proj = proj * jax.lax.rsqrt(jnp.sum(proj * proj, -1, keepdims=True) + 1e-12)
        return proj[0]

    return jax.vmap(one)(prompts, add_mask)


if __name__ == "__main__":
    key = jax.random.PRNGKey(0)
    k_param, k_prompt, k_tok = jax.random.split(key, 3)
    params = init_params(k_param)

    # prompts: learned-context + token embeddings (B, L, D); tokenized_prompts: ids (B, L)
    prompts = jax.random.normal(k_prompt, (B, L, D), jnp.float32)
    tok = jax.random.randint(k_tok, (B, L), 1, 100).astype(jnp.int32)
    tok = tok.at[:, -2:].set(0)  # some padding positions (masked out of attention)

    out = jax.block_until_ready(text_encoder(prompts, tok, params))
    ref = jax.block_until_ready(reference(prompts, tok, params))

    assert out.shape == (B, P)
    # kernel uses bf16 MXU operands + approx reciprocal (f32 accumulation), hence 1e-2 tolerance
    np.testing.assert_allclose(np.asarray(out), np.asarray(ref), rtol=1e-2, atol=1e-2)
    np.testing.assert_allclose(np.linalg.norm(np.asarray(out), axis=-1),
                               np.ones((B,)), rtol=1e-3, atol=1e-3)
    print("KERNEL_OK")
</pallas_src>

<mosaic_0001>
module attributes {stable_mosaic.version = 11 : i64} {
  func.func @text_encoder_kernel(%arg0: i32, %arg1: memref<16x32xf32, #tpu.memory_space<vmem>>, %arg2: memref<16x16xf32, #tpu.memory_space<vmem>>, %arg3: memref<1x32xf32, #tpu.memory_space<vmem>>, %arg4: memref<1x32xf32, #tpu.memory_space<vmem>>, %arg5: memref<2x4x32x8xbf16, #tpu.memory_space<vmem>>, %arg6: memref<2x4x1x8xf32, #tpu.memory_space<vmem>>, %arg7: memref<2x4x32x8xbf16, #tpu.memory_space<vmem>>, %arg8: memref<2x4x1x8xf32, #tpu.memory_space<vmem>>, %arg9: memref<2x4x32x8xbf16, #tpu.memory_space<vmem>>, %arg10: memref<2x4x1x8xf32, #tpu.memory_space<vmem>>, %arg11: memref<2x4x8x32xbf16, #tpu.memory_space<vmem>>, %arg12: memref<2x1x32xf32, #tpu.memory_space<vmem>>, %arg13: memref<2x1x32xf32, #tpu.memory_space<vmem>>, %arg14: memref<2x1x32xf32, #tpu.memory_space<vmem>>, %arg15: memref<2x32x128xbf16, #tpu.memory_space<vmem>>, %arg16: memref<2x1x128xf32, #tpu.memory_space<vmem>>, %arg17: memref<2x128x32xbf16, #tpu.memory_space<vmem>>, %arg18: memref<2x1x32xf32, #tpu.memory_space<vmem>>, %arg19: memref<2x1x32xf32, #tpu.memory_space<vmem>>, %arg20: memref<2x1x32xf32, #tpu.memory_space<vmem>>, %arg21: memref<32x128xbf16, #tpu.memory_space<vmem>>, %arg22: memref<1x128xf32, #tpu.memory_space<vmem>>, %arg23: memref<2x128xf32, #tpu.memory_space<vmem>>) attributes {dimension_semantics = [#tpu.dimension_semantics<arbitrary>], iteration_bounds = array<i64: 1>, scalar_prefetch = 0 : i64, scratch_operands = 0 : i64, tpu.core_type = #tpu.core_type<tc>, window_params = [{pipeline_mode = #tpu.pipeline_mode<synchronous>, transform_indices = @transform_0, window_bounds = array<i64: 16, 32>}, {pipeline_mode = #tpu.pipeline_mode<synchronous>, transform_indices = @transform_1, window_bounds = array<i64: 16, 16>}, {pipeline_mode = #tpu.pipeline_mode<synchronous>, transform_indices = @transform_2, window_bounds = array<i64: 1, 32>}, {pipeline_mode = #tpu.pipeline_mode<synchronous>, transform_indices = @transform_3, window_bounds = array<i64: 1, 32>}, {pipeline_mode = #tpu.pipeline_mode<synchronous>, transform_indices = @transform_4, window_bounds = array<i64: 2, 4, 32, 8>}, {pipeline_mode = #tpu.pipeline_mode<synchronous>, transform_indices = @transform_5, window_bounds = array<i64: 2, 4, 1, 8>}, {pipeline_mode = #tpu.pipeline_mode<synchronous>, transform_indices = @transform_6, window_bounds = array<i64: 2, 4, 32, 8>}, {pipeline_mode = #tpu.pipeline_mode<synchronous>, transform_indices = @transform_7, window_bounds = array<i64: 2, 4, 1, 8>}, {pipeline_mode = #tpu.pipeline_mode<synchronous>, transform_indices = @transform_8, window_bounds = array<i64: 2, 4, 32, 8>}, {pipeline_mode = #tpu.pipeline_mode<synchronous>, transform_indices = @transform_9, window_bounds = array<i64: 2, 4, 1, 8>}, {pipeline_mode = #tpu.pipeline_mode<synchronous>, transform_indices = @transform_10, window_bounds = array<i64: 2, 4, 8, 32>}, {pipeline_mode = #tpu.pipeline_mode<synchronous>, transform_indices = @transform_11, window_bounds = array<i64: 2, 1, 32>}, {pipeline_mode = #tpu.pipeline_mode<synchronous>, transform_indices = @transform_12, window_bounds = array<i64: 2, 1, 32>}, {pipeline_mode = #tpu.pipeline_mode<synchronous>, transform_indices = @transform_13, window_bounds = array<i64: 2, 1, 32>}, {pipeline_mode = #tpu.pipeline_mode<synchronous>, transform_indices = @transform_14, window_bounds = array<i64: 2, 32, 128>}, {pipeline_mode = #tpu.pipeline_mode<synchronous>, transform_indices = @transform_15, window_bounds = array<i64: 2, 1, 128>}, {pipeline_mode = #tpu.pipeline_mode<synchronous>, transform_indices = @transform_16, window_bounds = array<i64: 2, 128, 32>}, {pipeline_mode = #tpu.pipeline_mode<synchronous>, transform_indices = @transform_17, window_bounds = array<i64: 2, 1, 32>}, {pipeline_mode = #tpu.pipeline_mode<synchronous>, transform_indices = @transform_18, window_bounds = array<i64: 2, 1, 32>}, {pipeline_mode = #tpu.pipeline_mode<synchronous>, transform_indices = @transform_19, window_bounds = array<i64: 2, 1, 32>}, {pipeline_mode = #tpu.pipeline_mode<synchronous>, transform_indices = @transform_20, window_bounds = array<i64: 32, 128>}, {pipeline_mode = #tpu.pipeline_mode<synchronous>, transform_indices = @transform_21, window_bounds = array<i64: 1, 128>}, {pipeline_mode = #tpu.pipeline_mode<synchronous>, transform_indices = @transform_22, window_bounds = array<i64: 2, 128>}]} {
    %c0 = arith.constant 0 : index
    %c0_0 = arith.constant 0 : index
    %0 = vector.load %arg1[%c0, %c0_0] : memref<16x32xf32, #tpu.memory_space<vmem>>, vector<16x32xf32>
    %c0_1 = arith.constant 0 : index
    %c0_2 = arith.constant 0 : index
    %1 = vector.load %arg2[%c0_1, %c0_2] : memref<16x16xf32, #tpu.memory_space<vmem>>, vector<16x16xf32>
    %c0_3 = arith.constant 0 : index
    %c0_4 = arith.constant 0 : index
    %2 = vector.load %arg3[%c0_3, %c0_4] : memref<1x32xf32, #tpu.memory_space<vmem>>, vector<1x32xf32>
    %c0_5 = arith.constant 0 : index
    %c0_6 = arith.constant 0 : index
    %3 = vector.load %arg4[%c0_5, %c0_6] : memref<1x32xf32, #tpu.memory_space<vmem>>, vector<1x32xf32>
    %cst = arith.constant dense<0.000000e+00> : vector<16xf32>
    %4 = vector.multi_reduction <add>, %0, %cst [1] : vector<16x32xf32> to vector<16xf32>
    %5 = vector.shape_cast %4 : vector<16xf32> to vector<16x1xf32>
    %cst_7 = arith.constant 3.200000e+01 : f32
    %6 = vector.broadcast %cst_7 : f32 to vector<16x1xf32>
    %7 = arith.divf %5, %6 : vector<16x1xf32>
    %8 = vector.broadcast %7 : vector<16x1xf32> to vector<16x32xf32>
    %9 = arith.subf %0, %8 : vector<16x32xf32>
    %10 = arith.mulf %9, %9 : vector<16x32xf32>
    %cst_8 = arith.constant dense<0.000000e+00> : vector<16xf32>
    %11 = vector.multi_reduction <add>, %10, %cst_8 [1] : vector<16x32xf32> to vector<16xf32>
    %12 = vector.shape_cast %11 : vector<16xf32> to vector<16x1xf32>
    %cst_9 = arith.constant 3.200000e+01 : f32
    %13 = vector.broadcast %cst_9 : f32 to vector<16x1xf32>
    %14 = arith.divf %12, %13 : vector<16x1xf32>
    %15 = vector.broadcast %7 : vector<16x1xf32> to vector<16x32xf32>
    %16 = arith.subf %0, %15 : vector<16x32xf32>
    %cst_10 = arith.constant 9.99999974E-6 : f32
    %17 = vector.broadcast %cst_10 : f32 to vector<16x1xf32>
    %18 = arith.addf %14, %17 : vector<16x1xf32>
    %19 = math.rsqrt %18 : vector<16x1xf32>
    %20 = vector.broadcast %19 : vector<16x1xf32> to vector<16x32xf32>
    %21 = arith.mulf %16, %20 : vector<16x32xf32>
    %22 = vector.broadcast %2 : vector<1x32xf32> to vector<16x32xf32>
    %23 = arith.mulf %21, %22 : vector<16x32xf32>
    %24 = vector.broadcast %3 : vector<1x32xf32> to vector<16x32xf32>
    %25 = arith.addf %23, %24 : vector<16x32xf32>
    %26 = arith.truncf %25 : vector<16x32xf32> to vector<16x32xbf16>
    %cst_11 = arith.constant 0.000000e+00 : f32
    %27 = vector.broadcast %cst_11 : f32 to vector<16x32xf32>
    %c0_12 = arith.constant 0 : index
    %c0_13 = arith.constant 0 : index
    %c0_14 = arith.constant 0 : index
    %c0_15 = arith.constant 0 : index
    %28 = vector.load %arg5[%c0_12, %c0_13, %c0_14, %c0_15] : memref<2x4x32x8xbf16, #tpu.memory_space<vmem>>, vector<1x1x32x8xbf16>
    %29 = vector.shape_cast %28 : vector<1x1x32x8xbf16> to vector<32x8xbf16>
    %cst_16 = arith.constant dense<0.000000e+00> : vector<16x8xf32>
    %30 = tpu.matmul %26, %29, %cst_16 {dimension_numbers = #tpu.dot_dimension_numbers<[1], [0], [0], [1], [0, 0, 1, 1], [], []>} : vector<16x32xbf16>, vector<32x8xbf16>, vector<16x8xf32> -> vector<16x8xf32>
    %c0_17 = arith.constant 0 : index
    %c0_18 = arith.constant 0 : index
    %c0_19 = arith.constant 0 : index
    %c0_20 = arith.constant 0 : index
    %31 = vector.load %arg6[%c0_17, %c0_18, %c0_19, %c0_20] : memref<2x4x1x8xf32, #tpu.memory_space<vmem>>, vector<1x1x1x8xf32>
    %32 = vector.shape_cast %31 : vector<1x1x1x8xf32> to vector<1x8xf32>
    %33 = vector.broadcast %32 : vector<1x8xf32> to vector<16x8xf32>
    %34 = arith.addf %30, %33 : vector<16x8xf32>
    %c0_21 = arith.constant 0 : index
    %c0_22 = arith.constant 0 : index
    %c0_23 = arith.constant 0 : index
    %c0_24 = arith.constant 0 : index
    %35 = vector.load %arg7[%c0_21, %c0_22, %c0_23, %c0_24] : memref<2x4x32x8xbf16, #tpu.memory_space<vmem>>, vector<1x1x32x8xbf16>
    %36 = vector.shape_cast %35 : vector<1x1x32x8xbf16> to vector<32x8xbf16>
    %cst_25 = arith.constant dense<0.000000e+00> : vector<16x8xf32>
    %37 = tpu.matmul %26, %36, %cst_25 {dimension_numbers = #tpu.dot_dimension_numbers<[1], [0], [0], [1], [0, 0, 1, 1], [], []>} : vector<16x32xbf16>, vector<32x8xbf16>, vector<16x8xf32> -> vector<16x8xf32>
    %c0_26 = arith.constant 0 : index
    %c0_27 = arith.constant 0 : index
    %c0_28 = arith.constant 0 : index
    %c0_29 = arith.constant 0 : index
    %38 = vector.load %arg8[%c0_26, %c0_27, %c0_28, %c0_29] : memref<2x4x1x8xf32, #tpu.memory_space<vmem>>, vector<1x1x1x8xf32>
    %39 = vector.shape_cast %38 : vector<1x1x1x8xf32> to vector<1x8xf32>
    %40 = vector.broadcast %39 : vector<1x8xf32> to vector<16x8xf32>
    %41 = arith.addf %37, %40 : vector<16x8xf32>
    %c0_30 = arith.constant 0 : index
    %c0_31 = arith.constant 0 : index
    %c0_32 = arith.constant 0 : index
    %c0_33 = arith.constant 0 : index
    %42 = vector.load %arg9[%c0_30, %c0_31, %c0_32, %c0_33] : memref<2x4x32x8xbf16, #tpu.memory_space<vmem>>, vector<1x1x32x8xbf16>
    %43 = vector.shape_cast %42 : vector<1x1x32x8xbf16> to vector<32x8xbf16>
    %cst_34 = arith.constant dense<0.000000e+00> : vector<16x8xf32>
    %44 = tpu.matmul %26, %43, %cst_34 {dimension_numbers = #tpu.dot_dimension_numbers<[1], [0], [0], [1], [0, 0, 1, 1], [], []>} : vector<16x32xbf16>, vector<32x8xbf16>, vector<16x8xf32> -> vector<16x8xf32>
    %c0_35 = arith.constant 0 : index
    %c0_36 = arith.constant 0 : index
    %c0_37 = arith.constant 0 : index
    %c0_38 = arith.constant 0 : index
    %45 = vector.load %arg10[%c0_35, %c0_36, %c0_37, %c0_38] : memref<2x4x1x8xf32, #tpu.memory_space<vmem>>, vector<1x1x1x8xf32>
    %46 = vector.shape_cast %45 : vector<1x1x1x8xf32> to vector<1x8xf32>
    %47 = vector.broadcast %46 : vector<1x8xf32> to vector<16x8xf32>
    %48 = arith.addf %44, %47 : vector<16x8xf32>
    %49 = arith.truncf %34 : vector<16x8xf32> to vector<16x8xbf16>
    %50 = tpu.transpose %41, [1, 0] : vector<16x8xf32> -> vector<8x16xf32>
    %51 = arith.truncf %50 : vector<8x16xf32> to vector<8x16xbf16>
    %cst_39 = arith.constant dense<0.000000e+00> : vector<16x16xf32>
    %52 = tpu.matmul %49, %51, %cst_39 {dimension_numbers = #tpu.dot_dimension_numbers<[1], [0], [0], [1], [0, 0, 1, 1], [], []>} : vector<16x8xbf16>, vector<8x16xbf16>, vector<16x16xf32> -> vector<16x16xf32>
    %cst_40 = arith.constant 0.353553385 : f32
    %53 = vector.broadcast %cst_40 : f32 to vector<16x16xf32>
    %54 = arith.mulf %52, %53 : vector<16x16xf32>
    %55 = arith.addf %54, %1 : vector<16x16xf32>
    %cst_41 = arith.constant dense<0xFF800000> : vector<16xf32>
    %56 = vector.multi_reduction <maximumf>, %55, %cst_41 [1] : vector<16x16xf32> to vector<16xf32>
    %57 = vector.shape_cast %56 : vector<16xf32> to vector<16x1xf32>
    %58 = vector.broadcast %57 : vector<16x1xf32> to vector<16x16xf32>
    %59 = arith.subf %55, %58 : vector<16x16xf32>
    %60 = math.exp %59 : vector<16x16xf32>
    %cst_42 = arith.constant dense<0.000000e+00> : vector<16xf32>
    %61 = vector.multi_reduction <add>, %60, %cst_42 [1] : vector<16x16xf32> to vector<16xf32>
    %62 = vector.shape_cast %61 : vector<16xf32> to vector<16x1xf32>
    %63 = tpu.reciprocal %62 {approx = true} : vector<16x1xf32> -> vector<16x1xf32>
    %64 = vector.broadcast %63 : vector<16x1xf32> to vector<16x16xf32>
    %65 = arith.mulf %60, %64 : vector<16x16xf32>
    %66 = arith.truncf %65 : vector<16x16xf32> to vector<16x16xbf16>
    %67 = arith.truncf %48 : vector<16x8xf32> to vector<16x8xbf16>
    %cst_43 = arith.constant dense<0.000000e+00> : vector<16x8xf32>
    %68 = tpu.matmul %66, %67, %cst_43 {dimension_numbers = #tpu.dot_dimension_numbers<[1], [0], [0], [1], [0, 0, 1, 1], [], []>} : vector<16x16xbf16>, vector<16x8xbf16>, vector<16x8xf32> -> vector<16x8xf32>
    %69 = arith.truncf %68 : vector<16x8xf32> to vector<16x8xbf16>
    %c0_44 = arith.constant 0 : index
    %c0_45 = arith.constant 0 : index
    %c0_46 = arith.constant 0 : index
    %c0_47 = arith.constant 0 : index
    %70 = vector.load %arg11[%c0_44, %c0_45, %c0_46, %c0_47] : memref<2x4x8x32xbf16, #tpu.memory_space<vmem>>, vector<1x1x8x32xbf16>
    %71 = vector.shape_cast %70 : vector<1x1x8x32xbf16> to vector<8x32xbf16>
    %cst_48 = arith.constant dense<0.000000e+00> : vector<16x32xf32>
    %72 = tpu.matmul %69, %71, %cst_48 {dimension_numbers = #tpu.dot_dimension_numbers<[1], [0], [0], [1], [0, 0, 1, 1], [], []>} : vector<16x8xbf16>, vector<8x32xbf16>, vector<16x32xf32> -> vector<16x32xf32>
    %73 = arith.addf %27, %72 : vector<16x32xf32>
    %c0_49 = arith.constant 0 : index
    %c1 = arith.constant 1 : index
    %c0_50 = arith.constant 0 : index
    %c0_51 = arith.constant 0 : index
    %74 = vector.load %arg5[%c0_49, %c1, %c0_50, %c0_51] : memref<2x4x32x8xbf16, #tpu.memory_space<vmem>>, vector<1x1x32x8xbf16>
    %75 = vector.shape_cast %74 : vector<1x1x32x8xbf16> to vector<32x8xbf16>
    %cst_52 = arith.constant dense<0.000000e+00> : vector<16x8xf32>
    %76 = tpu.matmul %26, %75, %cst_52 {dimension_numbers = #tpu.dot_dimension_numbers<[1], [0], [0], [1], [0, 0, 1, 1], [], []>} : vector<16x32xbf16>, vector<32x8xbf16>, vector<16x8xf32> -> vector<16x8xf32>
    %c0_53 = arith.constant 0 : index
    %c1_54 = arith.constant 1 : index
    %c0_55 = arith.constant 0 : index
    %c0_56 = arith.constant 0 : index
    %77 = vector.load %arg6[%c0_53, %c1_54, %c0_55, %c0_56] : memref<2x4x1x8xf32, #tpu.memory_space<vmem>>, vector<1x1x1x8xf32>
    %78 = vector.shape_cast %77 : vector<1x1x1x8xf32> to vector<1x8xf32>
    %79 = vector.broadcast %78 : vector<1x8xf32> to vector<16x8xf32>
    %80 = arith.addf %76, %79 : vector<16x8xf32>
    %c0_57 = arith.constant 0 : index
    %c1_58 = arith.constant 1 : index
    %c0_59 = arith.constant 0 : index
    %c0_60 = arith.constant 0 : index
    %81 = vector.load %arg7[%c0_57, %c1_58, %c0_59, %c0_60] : memref<2x4x32x8xbf16, #tpu.memory_space<vmem>>, vector<1x1x32x8xbf16>
    %82 = vector.shape_cast %81 : vector<1x1x32x8xbf16> to vector<32x8xbf16>
    %cst_61 = arith.constant dense<0.000000e+00> : vector<16x8xf32>
    %83 = tpu.matmul %26, %82, %cst_61 {dimension_numbers = #tpu.dot_dimension_numbers<[1], [0], [0], [1], [0, 0, 1, 1], [], []>} : vector<16x32xbf16>, vector<32x8xbf16>, vector<16x8xf32> -> vector<16x8xf32>
    %c0_62 = arith.constant 0 : index
    %c1_63 = arith.constant 1 : index
    %c0_64 = arith.constant 0 : index
    %c0_65 = arith.constant 0 : index
    %84 = vector.load %arg8[%c0_62, %c1_63, %c0_64, %c0_65] : memref<2x4x1x8xf32, #tpu.memory_space<vmem>>, vector<1x1x1x8xf32>
    %85 = vector.shape_cast %84 : vector<1x1x1x8xf32> to vector<1x8xf32>
    %86 = vector.broadcast %85 : vector<1x8xf32> to vector<16x8xf32>
    %87 = arith.addf %83, %86 : vector<16x8xf32>
    %c0_66 = arith.constant 0 : index
    %c1_67 = arith.constant 1 : index
    %c0_68 = arith.constant 0 : index
    %c0_69 = arith.constant 0 : index
    %88 = vector.load %arg9[%c0_66, %c1_67, %c0_68, %c0_69] : memref<2x4x32x8xbf16, #tpu.memory_space<vmem>>, vector<1x1x32x8xbf16>
    %89 = vector.shape_cast %88 : vector<1x1x32x8xbf16> to vector<32x8xbf16>
    %cst_70 = arith.constant dense<0.000000e+00> : vector<16x8xf32>
    %90 = tpu.matmul %26, %89, %cst_70 {dimension_numbers = #tpu.dot_dimension_numbers<[1], [0], [0], [1], [0, 0, 1, 1], [], []>} : vector<16x32xbf16>, vector<32x8xbf16>, vector<16x8xf32> -> vector<16x8xf32>
    %c0_71 = arith.constant 0 : index
    %c1_72 = arith.constant 1 : index
    %c0_73 = arith.constant 0 : index
    %c0_74 = arith.constant 0 : index
    %91 = vector.load %arg10[%c0_71, %c1_72, %c0_73, %c0_74] : memref<2x4x1x8xf32, #tpu.memory_space<vmem>>, vector<1x1x1x8xf32>
    %92 = vector.shape_cast %91 : vector<1x1x1x8xf32> to vector<1x8xf32>
    %93 = vector.broadcast %92 : vector<1x8xf32> to vector<16x8xf32>
    %94 = arith.addf %90, %93 : vector<16x8xf32>
    %95 = arith.truncf %80 : vector<16x8xf32> to vector<16x8xbf16>
    %96 = tpu.transpose %87, [1, 0] : vector<16x8xf32> -> vector<8x16xf32>
    %97 = arith.truncf %96 : vector<8x16xf32> to vector<8x16xbf16>
    %cst_75 = arith.constant dense<0.000000e+00> : vector<16x16xf32>
    %98 = tpu.matmul %95, %97, %cst_75 {dimension_numbers = #tpu.dot_dimension_numbers<[1], [0], [0], [1], [0, 0, 1, 1], [], []>} : vector<16x8xbf16>, vector<8x16xbf16>, vector<16x16xf32> -> vector<16x16xf32>
    %cst_76 = arith.constant 0.353553385 : f32
    %99 = vector.broadcast %cst_76 : f32 to vector<16x16xf32>
    %100 = arith.mulf %98, %99 : vector<16x16xf32>
    %101 = arith.addf %100, %1 : vector<16x16xf32>
    %cst_77 = arith.constant dense<0xFF800000> : vector<16xf32>
    %102 = vector.multi_reduction <maximumf>, %101, %cst_77 [1] : vector<16x16xf32> to vector<16xf32>
    %103 = vector.shape_cast %102 : vector<16xf32> to vector<16x1xf32>
    %104 = vector.broadcast %103 : vector<16x1xf32> to vector<16x16xf32>
    %105 = arith.subf %101, %104 : vector<16x16xf32>
    %106 = math.exp %105 : vector<16x16xf32>
    %cst_78 = arith.constant dense<0.000000e+00> : vector<16xf32>
    %107 = vector.multi_reduction <add>, %106, %cst_78 [1] : vector<16x16xf32> to vector<16xf32>
    %108 = vector.shape_cast %107 : vector<16xf32> to vector<16x1xf32>
    %109 = tpu.reciprocal %108 {approx = true} : vector<16x1xf32> -> vector<16x1xf32>
    %110 = vector.broadcast %109 : vector<16x1xf32> to vector<16x16xf32>
    %111 = arith.mulf %106, %110 : vector<16x16xf32>
    %112 = arith.truncf %111 : vector<16x16xf32> to vector<16x16xbf16>
    %113 = arith.truncf %94 : vector<16x8xf32> to vector<16x8xbf16>
    %cst_79 = arith.constant dense<0.000000e+00> : vector<16x8xf32>
    %114 = tpu.matmul %112, %113, %cst_79 {dimension_numbers = #tpu.dot_dimension_numbers<[1], [0], [0], [1], [0, 0, 1, 1], [], []>} : vector<16x16xbf16>, vector<16x8xbf16>, vector<16x8xf32> -> vector<16x8xf32>
    %115 = arith.truncf %114 : vector<16x8xf32> to vector<16x8xbf16>
    %c0_80 = arith.constant 0 : index
    %c1_81 = arith.constant 1 : index
    %c0_82 = arith.constant 0 : index
    %c0_83 = arith.constant 0 : index
    %116 = vector.load %arg11[%c0_80, %c1_81, %c0_82, %c0_83] : memref<2x4x8x32xbf16, #tpu.memory_space<vmem>>, vector<1x1x8x32xbf16>
    %117 = vector.shape_cast %116 : vector<1x1x8x32xbf16> to vector<8x32xbf16>
    %cst_84 = arith.constant dense<0.000000e+00> : vector<16x32xf32>
    %118 = tpu.matmul %115, %117, %cst_84 {dimension_numbers = #tpu.dot_dimension_numbers<[1], [0], [0], [1], [0, 0, 1, 1], [], []>} : vector<16x8xbf16>, vector<8x32xbf16>, vector<16x32xf32> -> vector<16x32xf32>
    %119 = arith.addf %73, %118 : vector<16x32xf32>
    %c0_85 = arith.constant 0 : index
    %c2 = arith.constant 2 : index
    %c0_86 = arith.constant 0 : index
    %c0_87 = arith.constant 0 : index
    %120 = vector.load %arg5[%c0_85, %c2, %c0_86, %c0_87] : memref<2x4x32x8xbf16, #tpu.memory_space<vmem>>, vector<1x1x32x8xbf16>
    %121 = vector.shape_cast %120 : vector<1x1x32x8xbf16> to vector<32x8xbf16>
    %cst_88 = arith.constant dense<0.000000e+00> : vector<16x8xf32>
    %122 = tpu.matmul %26, %121, %cst_88 {dimension_numbers = #tpu.dot_dimension_numbers<[1], [0], [0], [1], [0, 0, 1, 1], [], []>} : vector<16x32xbf16>, vector<32x8xbf16>, vector<16x8xf32> -> vector<16x8xf32>
    %c0_89 = arith.constant 0 : index
    %c2_90 = arith.constant 2 : index
    %c0_91 = arith.constant 0 : index
    %c0_92 = arith.constant 0 : index
    %123 = vector.load %arg6[%c0_89, %c2_90, %c0_91, %c0_92] : memref<2x4x1x8xf32, #tpu.memory_space<vmem>>, vector<1x1x1x8xf32>
    %124 = vector.shape_cast %123 : vector<1x1x1x8xf32> to vector<1x8xf32>
    %125 = vector.broadcast %124 : vector<1x8xf32> to vector<16x8xf32>
    %126 = arith.addf %122, %125 : vector<16x8xf32>
    %c0_93 = arith.constant 0 : index
    %c2_94 = arith.constant 2 : index
    %c0_95 = arith.constant 0 : index
    %c0_96 = arith.constant 0 : index
    %127 = vector.load %arg7[%c0_93, %c2_94, %c0_95, %c0_96] : memref<2x4x32x8xbf16, #tpu.memory_space<vmem>>, vector<1x1x32x8xbf16>
    %128 = vector.shape_cast %127 : vector<1x1x32x8xbf16> to vector<32x8xbf16>
    %cst_97 = arith.constant dense<0.000000e+00> : vector<16x8xf32>
    %129 = tpu.matmul %26, %128, %cst_97 {dimension_numbers = #tpu.dot_dimension_numbers<[1], [0], [0], [1], [0, 0, 1, 1], [], []>} : vector<16x32xbf16>, vector<32x8xbf16>, vector<16x8xf32> -> vector<16x8xf32>
    %c0_98 = arith.constant 0 : index
    %c2_99 = arith.constant 2 : index
    %c0_100 = arith.constant 0 : index
    %c0_101 = arith.constant 0 : index
    %130 = vector.load %arg8[%c0_98, %c2_99, %c0_100, %c0_101] : memref<2x4x1x8xf32, #tpu.memory_space<vmem>>, vector<1x1x1x8xf32>
    %131 = vector.shape_cast %130 : vector<1x1x1x8xf32> to vector<1x8xf32>
    %132 = vector.broadcast %131 : vector<1x8xf32> to vector<16x8xf32>
    %133 = arith.addf %129, %132 : vector<16x8xf32>
    %c0_102 = arith.constant 0 : index
    %c2_103 = arith.constant 2 : index
    %c0_104 = arith.constant 0 : index
    %c0_105 = arith.constant 0 : index
    %134 = vector.load %arg9[%c0_102, %c2_103, %c0_104, %c0_105] : memref<2x4x32x8xbf16, #tpu.memory_space<vmem>>, vector<1x1x32x8xbf16>
    %135 = vector.shape_cast %134 : vector<1x1x32x8xbf16> to vector<32x8xbf16>
    %cst_106 = arith.constant dense<0.000000e+00> : vector<16x8xf32>
    %136 = tpu.matmul %26, %135, %cst_106 {dimension_numbers = #tpu.dot_dimension_numbers<[1], [0], [0], [1], [0, 0, 1, 1], [], []>} : vector<16x32xbf16>, vector<32x8xbf16>, vector<16x8xf32> -> vector<16x8xf32>
    %c0_107 = arith.constant 0 : index
    %c2_108 = arith.constant 2 : index
    %c0_109 = arith.constant 0 : index
    %c0_110 = arith.constant 0 : index
    %137 = vector.load %arg10[%c0_107, %c2_108, %c0_109, %c0_110] : memref<2x4x1x8xf32, #tpu.memory_space<vmem>>, vector<1x1x1x8xf32>
    %138 = vector.shape_cast %137 : vector<1x1x1x8xf32> to vector<1x8xf32>
    %139 = vector.broadcast %138 : vector<1x8xf32> to vector<16x8xf32>
    %140 = arith.addf %136, %139 : vector<16x8xf32>
    %141 = arith.truncf %126 : vector<16x8xf32> to vector<16x8xbf16>
    %142 = tpu.transpose %133, [1, 0] : vector<16x8xf32> -> vector<8x16xf32>
    %143 = arith.truncf %142 : vector<8x16xf32> to vector<8x16xbf16>
    %cst_111 = arith.constant dense<0.000000e+00> : vector<16x16xf32>
    %144 = tpu.matmul %141, %143, %cst_111 {dimension_numbers = #tpu.dot_dimension_numbers<[1], [0], [0], [1], [0, 0, 1, 1], [], []>} : vector<16x8xbf16>, vector<8x16xbf16>, vector<16x16xf32> -> vector<16x16xf32>
    %cst_112 = arith.constant 0.353553385 : f32
    %145 = vector.broadcast %cst_112 : f32 to vector<16x16xf32>
    %146 = arith.mulf %144, %145 : vector<16x16xf32>
    %147 = arith.addf %146, %1 : vector<16x16xf32>
    %cst_113 = arith.constant dense<0xFF800000> : vector<16xf32>
    %148 = vector.multi_reduction <maximumf>, %147, %cst_113 [1] : vector<16x16xf32> to vector<16xf32>
    %149 = vector.shape_cast %148 : vector<16xf32> to vector<16x1xf32>
    %150 = vector.broadcast %149 : vector<16x1xf32> to vector<16x16xf32>
    %151 = arith.subf %147, %150 : vector<16x16xf32>
    %152 = math.exp %151 : vector<16x16xf32>
    %cst_114 = arith.constant dense<0.000000e+00> : vector<16xf32>
    %153 = vector.multi_reduction <add>, %152, %cst_114 [1] : vector<16x16xf32> to vector<16xf32>
    %154 = vector.shape_cast %153 : vector<16xf32> to vector<16x1xf32>
    %155 = tpu.reciprocal %154 {approx = true} : vector<16x1xf32> -> vector<16x1xf32>
    %156 = vector.broadcast %155 : vector<16x1xf32> to vector<16x16xf32>
    %157 = arith.mulf %152, %156 : vector<16x16xf32>
    %158 = arith.truncf %157 : vector<16x16xf32> to vector<16x16xbf16>
    %159 = arith.truncf %140 : vector<16x8xf32> to vector<16x8xbf16>
    %cst_115 = arith.constant dense<0.000000e+00> : vector<16x8xf32>
    %160 = tpu.matmul %158, %159, %cst_115 {dimension_numbers = #tpu.dot_dimension_numbers<[1], [0], [0], [1], [0, 0, 1, 1], [], []>} : vector<16x16xbf16>, vector<16x8xbf16>, vector<16x8xf32> -> vector<16x8xf32>
    %161 = arith.truncf %160 : vector<16x8xf32> to vector<16x8xbf16>
    %c0_116 = arith.constant 0 : index
    %c2_117 = arith.constant 2 : index
    %c0_118 = arith.constant 0 : index
    %c0_119 = arith.constant 0 : index
    %162 = vector.load %arg11[%c0_116, %c2_117, %c0_118, %c0_119] : memref<2x4x8x32xbf16, #tpu.memory_space<vmem>>, vector<1x1x8x32xbf16>
    %163 = vector.shape_cast %162 : vector<1x1x8x32xbf16> to vector<8x32xbf16>
    %cst_120 = arith.constant dense<0.000000e+00> : vector<16x32xf32>
    %164 = tpu.matmul %161, %163, %cst_120 {dimension_numbers = #tpu.dot_dimension_numbers<[1], [0], [0], [1], [0, 0, 1, 1], [], []>} : vector<16x8xbf16>, vector<8x32xbf16>, vector<16x32xf32> -> vector<16x32xf32>
    %165 = arith.addf %119, %164 : vector<16x32xf32>
    %c0_121 = arith.constant 0 : index
    %c3 = arith.constant 3 : index
    %c0_122 = arith.constant 0 : index
    %c0_123 = arith.constant 0 : index
    %166 = vector.load %arg5[%c0_121, %c3, %c0_122, %c0_123] : memref<2x4x32x8xbf16, #tpu.memory_space<vmem>>, vector<1x1x32x8xbf16>
    %167 = vector.shape_cast %166 : vector<1x1x32x8xbf16> to vector<32x8xbf16>
    %cst_124 = arith.constant dense<0.000000e+00> : vector<16x8xf32>
    %168 = tpu.matmul %26, %167, %cst_124 {dimension_numbers = #tpu.dot_dimension_numbers<[1], [0], [0], [1], [0, 0, 1, 1], [], []>} : vector<16x32xbf16>, vector<32x8xbf16>, vector<16x8xf32> -> vector<16x8xf32>
    %c0_125 = arith.constant 0 : index
    %c3_126 = arith.constant 3 : index
    %c0_127 = arith.constant 0 : index
    %c0_128 = arith.constant 0 : index
    %169 = vector.load %arg6[%c0_125, %c3_126, %c0_127, %c0_128] : memref<2x4x1x8xf32, #tpu.memory_space<vmem>>, vector<1x1x1x8xf32>
    %170 = vector.shape_cast %169 : vector<1x1x1x8xf32> to vector<1x8xf32>
    %171 = vector.broadcast %170 : vector<1x8xf32> to vector<16x8xf32>
    %172 = arith.addf %168, %171 : vector<16x8xf32>
    %c0_129 = arith.constant 0 : index
    %c3_130 = arith.constant 3 : index
    %c0_131 = arith.constant 0 : index
    %c0_132 = arith.constant 0 : index
    %173 = vector.load %arg7[%c0_129, %c3_130, %c0_131, %c0_132] : memref<2x4x32x8xbf16, #tpu.memory_space<vmem>>, vector<1x1x32x8xbf16>
    %174 = vector.shape_cast %173 : vector<1x1x32x8xbf16> to vector<32x8xbf16>
    %cst_133 = arith.constant dense<0.000000e+00> : vector<16x8xf32>
    %175 = tpu.matmul %26, %174, %cst_133 {dimension_numbers = #tpu.dot_dimension_numbers<[1], [0], [0], [1], [0, 0, 1, 1], [], []>} : vector<16x32xbf16>, vector<32x8xbf16>, vector<16x8xf32> -> vector<16x8xf32>
    %c0_134 = arith.constant 0 : index
    %c3_135 = arith.constant 3 : index
    %c0_136 = arith.constant 0 : index
    %c0_137 = arith.constant 0 : index
    %176 = vector.load %arg8[%c0_134, %c3_135, %c0_136, %c0_137] : memref<2x4x1x8xf32, #tpu.memory_space<vmem>>, vector<1x1x1x8xf32>
    %177 = vector.shape_cast %176 : vector<1x1x1x8xf32> to vector<1x8xf32>
    %178 = vector.broadcast %177 : vector<1x8xf32> to vector<16x8xf32>
    %179 = arith.addf %175, %178 : vector<16x8xf32>
    %c0_138 = arith.constant 0 : index
    %c3_139 = arith.constant 3 : index
    %c0_140 = arith.constant 0 : index
    %c0_141 = arith.constant 0 : index
    %180 = vector.load %arg9[%c0_138, %c3_139, %c0_140, %c0_141] : memref<2x4x32x8xbf16, #tpu.memory_space<vmem>>, vector<1x1x32x8xbf16>
    %181 = vector.shape_cast %180 : vector<1x1x32x8xbf16> to vector<32x8xbf16>
    %cst_142 = arith.constant dense<0.000000e+00> : vector<16x8xf32>
    %182 = tpu.matmul %26, %181, %cst_142 {dimension_numbers = #tpu.dot_dimension_numbers<[1], [0], [0], [1], [0, 0, 1, 1], [], []>} : vector<16x32xbf16>, vector<32x8xbf16>, vector<16x8xf32> -> vector<16x8xf32>
    %c0_143 = arith.constant 0 : index
    %c3_144 = arith.constant 3 : index
    %c0_145 = arith.constant 0 : index
    %c0_146 = arith.constant 0 : index
    %183 = vector.load %arg10[%c0_143, %c3_144, %c0_145, %c0_146] : memref<2x4x1x8xf32, #tpu.memory_space<vmem>>, vector<1x1x1x8xf32>
    %184 = vector.shape_cast %183 : vector<1x1x1x8xf32> to vector<1x8xf32>
    %185 = vector.broadcast %184 : vector<1x8xf32> to vector<16x8xf32>
    %186 = arith.addf %182, %185 : vector<16x8xf32>
    %187 = arith.truncf %172 : vector<16x8xf32> to vector<16x8xbf16>
    %188 = tpu.transpose %179, [1, 0] : vector<16x8xf32> -> vector<8x16xf32>
    %189 = arith.truncf %188 : vector<8x16xf32> to vector<8x16xbf16>
    %cst_147 = arith.constant dense<0.000000e+00> : vector<16x16xf32>
    %190 = tpu.matmul %187, %189, %cst_147 {dimension_numbers = #tpu.dot_dimension_numbers<[1], [0], [0], [1], [0, 0, 1, 1], [], []>} : vector<16x8xbf16>, vector<8x16xbf16>, vector<16x16xf32> -> vector<16x16xf32>
    %cst_148 = arith.constant 0.353553385 : f32
    %191 = vector.broadcast %cst_148 : f32 to vector<16x16xf32>
    %192 = arith.mulf %190, %191 : vector<16x16xf32>
    %193 = arith.addf %192, %1 : vector<16x16xf32>
    %cst_149 = arith.constant dense<0xFF800000> : vector<16xf32>
    %194 = vector.multi_reduction <maximumf>, %193, %cst_149 [1] : vector<16x16xf32> to vector<16xf32>
    %195 = vector.shape_cast %194 : vector<16xf32> to vector<16x1xf32>
    %196 = vector.broadcast %195 : vector<16x1xf32> to vector<16x16xf32>
    %197 = arith.subf %193, %196 : vector<16x16xf32>
    %198 = math.exp %197 : vector<16x16xf32>
    %cst_150 = arith.constant dense<0.000000e+00> : vector<16xf32>
    %199 = vector.multi_reduction <add>, %198, %cst_150 [1] : vector<16x16xf32> to vector<16xf32>
    %200 = vector.shape_cast %199 : vector<16xf32> to vector<16x1xf32>
    %201 = tpu.reciprocal %200 {approx = true} : vector<16x1xf32> -> vector<16x1xf32>
    %202 = vector.broadcast %201 : vector<16x1xf32> to vector<16x16xf32>
    %203 = arith.mulf %198, %202 : vector<16x16xf32>
    %204 = arith.truncf %203 : vector<16x16xf32> to vector<16x16xbf16>
    %205 = arith.truncf %186 : vector<16x8xf32> to vector<16x8xbf16>
    %cst_151 = arith.constant dense<0.000000e+00> : vector<16x8xf32>
    %206 = tpu.matmul %204, %205, %cst_151 {dimension_numbers = #tpu.dot_dimension_numbers<[1], [0], [0], [1], [0, 0, 1, 1], [], []>} : vector<16x16xbf16>, vector<16x8xbf16>, vector<16x8xf32> -> vector<16x8xf32>
    %207 = arith.truncf %206 : vector<16x8xf32> to vector<16x8xbf16>
    %c0_152 = arith.constant 0 : index
    %c3_153 = arith.constant 3 : index
    %c0_154 = arith.constant 0 : index
    %c0_155 = arith.constant 0 : index
    %208 = vector.load %arg11[%c0_152, %c3_153, %c0_154, %c0_155] : memref<2x4x8x32xbf16, #tpu.memory_space<vmem>>, vector<1x1x8x32xbf16>
    %209 = vector.shape_cast %208 : vector<1x1x8x32xbf16> to vector<8x32xbf16>
    %cst_156 = arith.constant dense<0.000000e+00> : vector<16x32xf32>
    %210 = tpu.matmul %207, %209, %cst_156 {dimension_numbers = #tpu.dot_dimension_numbers<[1], [0], [0], [1], [0, 0, 1, 1], [], []>} : vector<16x8xbf16>, vector<8x32xbf16>, vector<16x32xf32> -> vector<16x32xf32>
    %211 = arith.addf %165, %210 : vector<16x32xf32>
    %212 = arith.addf %25, %211 : vector<16x32xf32>
    %c0_157 = arith.constant 0 : index
    %c0_158 = arith.constant 0 : index
    %c0_159 = arith.constant 0 : index
    %213 = vector.load %arg12[%c0_157, %c0_158, %c0_159] : memref<2x1x32xf32, #tpu.memory_space<vmem>>, vector<1x1x32xf32>
    %214 = vector.shape_cast %213 : vector<1x1x32xf32> to vector<1x32xf32>
    %215 = vector.broadcast %214 : vector<1x32xf32> to vector<16x32xf32>
    %216 = arith.addf %212, %215 : vector<16x32xf32>
    %c0_160 = arith.constant 0 : index
    %c0_161 = arith.constant 0 : index
    %c0_162 = arith.constant 0 : index
    %217 = vector.load %arg13[%c0_160, %c0_161, %c0_162] : memref<2x1x32xf32, #tpu.memory_space<vmem>>, vector<1x1x32xf32>
    %218 = vector.shape_cast %217 : vector<1x1x32xf32> to vector<1x32xf32>
    %c0_163 = arith.constant 0 : index
    %c0_164 = arith.constant 0 : index
    %c0_165 = arith.constant 0 : index
    %219 = vector.load %arg14[%c0_163, %c0_164, %c0_165] : memref<2x1x32xf32, #tpu.memory_space<vmem>>, vector<1x1x32xf32>
    %220 = vector.shape_cast %219 : vector<1x1x32xf32> to vector<1x32xf32>
    %cst_166 = arith.constant dense<0.000000e+00> : vector<16xf32>
    %221 = vector.multi_reduction <add>, %216, %cst_166 [1] : vector<16x32xf32> to vector<16xf32>
    %222 = vector.shape_cast %221 : vector<16xf32> to vector<16x1xf32>
    %cst_167 = arith.constant 3.200000e+01 : f32
    %223 = vector.broadcast %cst_167 : f32 to vector<16x1xf32>
    %224 = arith.divf %222, %223 : vector<16x1xf32>
    %225 = vector.broadcast %224 : vector<16x1xf32> to vector<16x32xf32>
    %226 = arith.subf %216, %225 : vector<16x32xf32>
    %227 = arith.mulf %226, %226 : vector<16x32xf32>
    %cst_168 = arith.constant dense<0.000000e+00> : vector<16xf32>
    %228 = vector.multi_reduction <add>, %227, %cst_168 [1] : vector<16x32xf32> to vector<16xf32>
    %229 = vector.shape_cast %228 : vector<16xf32> to vector<16x1xf32>
    %cst_169 = arith.constant 3.200000e+01 : f32
    %230 = vector.broadcast %cst_169 : f32 to vector<16x1xf32>
    %231 = arith.divf %229, %230 : vector<16x1xf32>
    %232 = vector.broadcast %224 : vector<16x1xf32> to vector<16x32xf32>
    %233 = arith.subf %216, %232 : vector<16x32xf32>
    %cst_170 = arith.constant 9.99999974E-6 : f32
    %234 = vector.broadcast %cst_170 : f32 to vector<16x1xf32>
    %235 = arith.addf %231, %234 : vector<16x1xf32>
    %236 = math.rsqrt %235 : vector<16x1xf32>
    %237 = vector.broadcast %236 : vector<16x1xf32> to vector<16x32xf32>
    %238 = arith.mulf %233, %237 : vector<16x32xf32>
    %239 = vector.broadcast %218 : vector<1x32xf32> to vector<16x32xf32>
    %240 = arith.mulf %238, %239 : vector<16x32xf32>
    %241 = vector.broadcast %220 : vector<1x32xf32> to vector<16x32xf32>
    %242 = arith.addf %240, %241 : vector<16x32xf32>
    %243 = arith.truncf %242 : vector<16x32xf32> to vector<16x32xbf16>
    %c0_171 = arith.constant 0 : index
    %c0_172 = arith.constant 0 : index
    %c0_173 = arith.constant 0 : index
    %244 = vector.load %arg15[%c0_171, %c0_172, %c0_173] : memref<2x32x128xbf16, #tpu.memory_space<vmem>>, vector<1x32x128xbf16>
    %245 = vector.shape_cast %244 : vector<1x32x128xbf16> to vector<32x128xbf16>
    %cst_174 = arith.constant dense<0.000000e+00> : vector<16x128xf32>
    %246 = tpu.matmul %243, %245, %cst_174 {dimension_numbers = #tpu.dot_dimension_numbers<[1], [0], [0], [1], [0, 0, 1, 1], [], []>} : vector<16x32xbf16>, vector<32x128xbf16>, vector<16x128xf32> -> vector<16x128xf32>
    %c0_175 = arith.constant 0 : index
    %c0_176 = arith.constant 0 : index
    %c0_177 = arith.constant 0 : index
    %247 = vector.load %arg16[%c0_175, %c0_176, %c0_177] : memref<2x1x128xf32, #tpu.memory_space<vmem>>, vector<1x1x128xf32>
    %248 = vector.shape_cast %247 : vector<1x1x128xf32> to vector<1x128xf32>
    %249 = vector.broadcast %248 : vector<1x128xf32> to vector<16x128xf32>
    %250 = arith.addf %246, %249 : vector<16x128xf32>
    %251 = arith.mulf %250, %250 : vector<16x128xf32>
    %252 = arith.mulf %250, %251 : vector<16x128xf32>
    %cst_178 = arith.constant 4.471500e-02 : f32
    %253 = vector.broadcast %cst_178 : f32 to vector<16x128xf32>
    %254 = arith.mulf %253, %252 : vector<16x128xf32>
    %255 = arith.addf %250, %254 : vector<16x128xf32>
    %cst_179 = arith.constant 0.797884583 : f32
    %256 = vector.broadcast %cst_179 : f32 to vector<16x128xf32>
    %257 = arith.mulf %256, %255 : vector<16x128xf32>
    %258 = math.tanh %257 : vector<16x128xf32>
    %cst_180 = arith.constant 1.000000e+00 : f32
    %259 = vector.broadcast %cst_180 : f32 to vector<16x128xf32>
    %260 = arith.addf %259, %258 : vector<16x128xf32>
    %cst_181 = arith.constant 5.000000e-01 : f32
    %261 = vector.broadcast %cst_181 : f32 to vector<16x128xf32>
    %262 = arith.mulf %261, %260 : vector<16x128xf32>
    %263 = arith.mulf %250, %262 : vector<16x128xf32>
    %264 = arith.truncf %263 : vector<16x128xf32> to vector<16x128xbf16>
    %c0_182 = arith.constant 0 : index
    %c0_183 = arith.constant 0 : index
    %c0_184 = arith.constant 0 : index
    %265 = vector.load %arg17[%c0_182, %c0_183, %c0_184] : memref<2x128x32xbf16, #tpu.memory_space<vmem>>, vector<1x128x32xbf16>
    %266 = vector.shape_cast %265 : vector<1x128x32xbf16> to vector<128x32xbf16>
    %cst_185 = arith.constant dense<0.000000e+00> : vector<16x32xf32>
    %267 = tpu.matmul %264, %266, %cst_185 {dimension_numbers = #tpu.dot_dimension_numbers<[1], [0], [0], [1], [0, 0, 1, 1], [], []>} : vector<16x128xbf16>, vector<128x32xbf16>, vector<16x32xf32> -> vector<16x32xf32>
    %c0_186 = arith.constant 0 : index
    %c0_187 = arith.constant 0 : index
    %c0_188 = arith.constant 0 : index
    %268 = vector.load %arg18[%c0_186, %c0_187, %c0_188] : memref<2x1x32xf32, #tpu.memory_space<vmem>>, vector<1x1x32xf32>
    %269 = vector.shape_cast %268 : vector<1x1x32xf32> to vector<1x32xf32>
    %270 = vector.broadcast %269 : vector<1x32xf32> to vector<16x32xf32>
    %271 = arith.addf %267, %270 : vector<16x32xf32>
    %272 = arith.addf %242, %271 : vector<16x32xf32>
    %c0_189 = arith.constant 0 : index
    %c0_190 = arith.constant 0 : index
    %c0_191 = arith.constant 0 : index
    %273 = vector.load %arg19[%c0_189, %c0_190, %c0_191] : memref<2x1x32xf32, #tpu.memory_space<vmem>>, vector<1x1x32xf32>
    %274 = vector.shape_cast %273 : vector<1x1x32xf32> to vector<1x32xf32>
    %c0_192 = arith.constant 0 : index
    %c0_193 = arith.constant 0 : index
    %c0_194 = arith.constant 0 : index
    %275 = vector.load %arg20[%c0_192, %c0_193, %c0_194] : memref<2x1x32xf32, #tpu.memory_space<vmem>>, vector<1x1x32xf32>
    %276 = vector.shape_cast %275 : vector<1x1x32xf32> to vector<1x32xf32>
    %cst_195 = arith.constant dense<0.000000e+00> : vector<16xf32>
    %277 = vector.multi_reduction <add>, %272, %cst_195 [1] : vector<16x32xf32> to vector<16xf32>
    %278 = vector.shape_cast %277 : vector<16xf32> to vector<16x1xf32>
    %cst_196 = arith.constant 3.200000e+01 : f32
    %279 = vector.broadcast %cst_196 : f32 to vector<16x1xf32>
    %280 = arith.divf %278, %279 : vector<16x1xf32>
    %281 = vector.broadcast %280 : vector<16x1xf32> to vector<16x32xf32>
    %282 = arith.subf %272, %281 : vector<16x32xf32>
    %283 = arith.mulf %282, %282 : vector<16x32xf32>
    %cst_197 = arith.constant dense<0.000000e+00> : vector<16xf32>
    %284 = vector.multi_reduction <add>, %283, %cst_197 [1] : vector<16x32xf32> to vector<16xf32>
    %285 = vector.shape_cast %284 : vector<16xf32> to vector<16x1xf32>
    %cst_198 = arith.constant 3.200000e+01 : f32
    %286 = vector.broadcast %cst_198 : f32 to vector<16x1xf32>
    %287 = arith.divf %285, %286 : vector<16x1xf32>
    %288 = vector.broadcast %280 : vector<16x1xf32> to vector<16x32xf32>
    %289 = arith.subf %272, %288 : vector<16x32xf32>
    %cst_199 = arith.constant 9.99999974E-6 : f32
    %290 = vector.broadcast %cst_199 : f32 to vector<16x1xf32>
    %291 = arith.addf %287, %290 : vector<16x1xf32>
    %292 = math.rsqrt %291 : vector<16x1xf32>
    %293 = vector.broadcast %292 : vector<16x1xf32> to vector<16x32xf32>
    %294 = arith.mulf %289, %293 : vector<16x32xf32>
    %295 = vector.broadcast %274 : vector<1x32xf32> to vector<16x32xf32>
    %296 = arith.mulf %294, %295 : vector<16x32xf32>
    %297 = vector.broadcast %276 : vector<1x32xf32> to vector<16x32xf32>
    %298 = arith.addf %296, %297 : vector<16x32xf32>
    %299 = arith.truncf %298 : vector<16x32xf32> to vector<16x32xbf16>
    %cst_200 = arith.constant 0.000000e+00 : f32
    %300 = vector.broadcast %cst_200 : f32 to vector<16x32xf32>
    %c1_201 = arith.constant 1 : index
    %c0_202 = arith.constant 0 : index
    %c0_203 = arith.constant 0 : index
    %c0_204 = arith.constant 0 : index
    %301 = vector.load %arg5[%c1_201, %c0_202, %c0_203, %c0_204] : memref<2x4x32x8xbf16, #tpu.memory_space<vmem>>, vector<1x1x32x8xbf16>
    %302 = vector.shape_cast %301 : vector<1x1x32x8xbf16> to vector<32x8xbf16>
    %cst_205 = arith.constant dense<0.000000e+00> : vector<16x8xf32>
    %303 = tpu.matmul %299, %302, %cst_205 {dimension_numbers = #tpu.dot_dimension_numbers<[1], [0], [0], [1], [0, 0, 1, 1], [], []>} : vector<16x32xbf16>, vector<32x8xbf16>, vector<16x8xf32> -> vector<16x8xf32>
    %c1_206 = arith.constant 1 : index
    %c0_207 = arith.constant 0 : index
    %c0_208 = arith.constant 0 : index
    %c0_209 = arith.constant 0 : index
    %304 = vector.load %arg6[%c1_206, %c0_207, %c0_208, %c0_209] : memref<2x4x1x8xf32, #tpu.memory_space<vmem>>, vector<1x1x1x8xf32>
    %305 = vector.shape_cast %304 : vector<1x1x1x8xf32> to vector<1x8xf32>
    %306 = vector.broadcast %305 : vector<1x8xf32> to vector<16x8xf32>
    %307 = arith.addf %303, %306 : vector<16x8xf32>
    %c1_210 = arith.constant 1 : index
    %c0_211 = arith.constant 0 : index
    %c0_212 = arith.constant 0 : index
    %c0_213 = arith.constant 0 : index
    %308 = vector.load %arg7[%c1_210, %c0_211, %c0_212, %c0_213] : memref<2x4x32x8xbf16, #tpu.memory_space<vmem>>, vector<1x1x32x8xbf16>
    %309 = vector.shape_cast %308 : vector<1x1x32x8xbf16> to vector<32x8xbf16>
    %cst_214 = arith.constant dense<0.000000e+00> : vector<16x8xf32>
    %310 = tpu.matmul %299, %309, %cst_214 {dimension_numbers = #tpu.dot_dimension_numbers<[1], [0], [0], [1], [0, 0, 1, 1], [], []>} : vector<16x32xbf16>, vector<32x8xbf16>, vector<16x8xf32> -> vector<16x8xf32>
    %c1_215 = arith.constant 1 : index
    %c0_216 = arith.constant 0 : index
    %c0_217 = arith.constant 0 : index
    %c0_218 = arith.constant 0 : index
    %311 = vector.load %arg8[%c1_215, %c0_216, %c0_217, %c0_218] : memref<2x4x1x8xf32, #tpu.memory_space<vmem>>, vector<1x1x1x8xf32>
    %312 = vector.shape_cast %311 : vector<1x1x1x8xf32> to vector<1x8xf32>
    %313 = vector.broadcast %312 : vector<1x8xf32> to vector<16x8xf32>
    %314 = arith.addf %310, %313 : vector<16x8xf32>
    %c1_219 = arith.constant 1 : index
    %c0_220 = arith.constant 0 : index
    %c0_221 = arith.constant 0 : index
    %c0_222 = arith.constant 0 : index
    %315 = vector.load %arg9[%c1_219, %c0_220, %c0_221, %c0_222] : memref<2x4x32x8xbf16, #tpu.memory_space<vmem>>, vector<1x1x32x8xbf16>
    %316 = vector.shape_cast %315 : vector<1x1x32x8xbf16> to vector<32x8xbf16>
    %cst_223 = arith.constant dense<0.000000e+00> : vector<16x8xf32>
    %317 = tpu.matmul %299, %316, %cst_223 {dimension_numbers = #tpu.dot_dimension_numbers<[1], [0], [0], [1], [0, 0, 1, 1], [], []>} : vector<16x32xbf16>, vector<32x8xbf16>, vector<16x8xf32> -> vector<16x8xf32>
    %c1_224 = arith.constant 1 : index
    %c0_225 = arith.constant 0 : index
    %c0_226 = arith.constant 0 : index
    %c0_227 = arith.constant 0 : index
    %318 = vector.load %arg10[%c1_224, %c0_225, %c0_226, %c0_227] : memref<2x4x1x8xf32, #tpu.memory_space<vmem>>, vector<1x1x1x8xf32>
    %319 = vector.shape_cast %318 : vector<1x1x1x8xf32> to vector<1x8xf32>
    %320 = vector.broadcast %319 : vector<1x8xf32> to vector<16x8xf32>
    %321 = arith.addf %317, %320 : vector<16x8xf32>
    %322 = arith.truncf %307 : vector<16x8xf32> to vector<16x8xbf16>
    %323 = tpu.transpose %314, [1, 0] : vector<16x8xf32> -> vector<8x16xf32>
    %324 = arith.truncf %323 : vector<8x16xf32> to vector<8x16xbf16>
    %cst_228 = arith.constant dense<0.000000e+00> : vector<16x16xf32>
    %325 = tpu.matmul %322, %324, %cst_228 {dimension_numbers = #tpu.dot_dimension_numbers<[1], [0], [0], [1], [0, 0, 1, 1], [], []>} : vector<16x8xbf16>, vector<8x16xbf16>, vector<16x16xf32> -> vector<16x16xf32>
    %cst_229 = arith.constant 0.353553385 : f32
    %326 = vector.broadcast %cst_229 : f32 to vector<16x16xf32>
    %327 = arith.mulf %325, %326 : vector<16x16xf32>
    %328 = arith.addf %327, %1 : vector<16x16xf32>
    %cst_230 = arith.constant dense<0xFF800000> : vector<16xf32>
    %329 = vector.multi_reduction <maximumf>, %328, %cst_230 [1] : vector<16x16xf32> to vector<16xf32>
    %330 = vector.shape_cast %329 : vector<16xf32> to vector<16x1xf32>
    %331 = vector.broadcast %330 : vector<16x1xf32> to vector<16x16xf32>
    %332 = arith.subf %328, %331 : vector<16x16xf32>
    %333 = math.exp %332 : vector<16x16xf32>
    %cst_231 = arith.constant dense<0.000000e+00> : vector<16xf32>
    %334 = vector.multi_reduction <add>, %333, %cst_231 [1] : vector<16x16xf32> to vector<16xf32>
    %335 = vector.shape_cast %334 : vector<16xf32> to vector<16x1xf32>
    %336 = tpu.reciprocal %335 {approx = true} : vector<16x1xf32> -> vector<16x1xf32>
    %337 = vector.broadcast %336 : vector<16x1xf32> to vector<16x16xf32>
    %338 = arith.mulf %333, %337 : vector<16x16xf32>
    %339 = arith.truncf %338 : vector<16x16xf32> to vector<16x16xbf16>
    %340 = arith.truncf %321 : vector<16x8xf32> to vector<16x8xbf16>
    %cst_232 = arith.constant dense<0.000000e+00> : vector<16x8xf32>
    %341 = tpu.matmul %339, %340, %cst_232 {dimension_numbers = #tpu.dot_dimension_numbers<[1], [0], [0], [1], [0, 0, 1, 1], [], []>} : vector<16x16xbf16>, vector<16x8xbf16>, vector<16x8xf32> -> vector<16x8xf32>
    %342 = arith.truncf %341 : vector<16x8xf32> to vector<16x8xbf16>
    %c1_233 = arith.constant 1 : index
    %c0_234 = arith.constant 0 : index
    %c0_235 = arith.constant 0 : index
    %c0_236 = arith.constant 0 : index
    %343 = vector.load %arg11[%c1_233, %c0_234, %c0_235, %c0_236] : memref<2x4x8x32xbf16, #tpu.memory_space<vmem>>, vector<1x1x8x32xbf16>
    %344 = vector.shape_cast %343 : vector<1x1x8x32xbf16> to vector<8x32xbf16>
    %cst_237 = arith.constant dense<0.000000e+00> : vector<16x32xf32>
    %345 = tpu.matmul %342, %344, %cst_237 {dimension_numbers = #tpu.dot_dimension_numbers<[1], [0], [0], [1], [0, 0, 1, 1], [], []>} : vector<16x8xbf16>, vector<8x32xbf16>, vector<16x32xf32> -> vector<16x32xf32>
    %346 = arith.addf %300, %345 : vector<16x32xf32>
    %c1_238 = arith.constant 1 : index
    %c1_239 = arith.constant 1 : index
    %c0_240 = arith.constant 0 : index
    %c0_241 = arith.constant 0 : index
    %347 = vector.load %arg5[%c1_238, %c1_239, %c0_240, %c0_241] : memref<2x4x32x8xbf16, #tpu.memory_space<vmem>>, vector<1x1x32x8xbf16>
    %348 = vector.shape_cast %347 : vector<1x1x32x8xbf16> to vector<32x8xbf16>
    %cst_242 = arith.constant dense<0.000000e+00> : vector<16x8xf32>
    %349 = tpu.matmul %299, %348, %cst_242 {dimension_numbers = #tpu.dot_dimension_numbers<[1], [0], [0], [1], [0, 0, 1, 1], [], []>} : vector<16x32xbf16>, vector<32x8xbf16>, vector<16x8xf32> -> vector<16x8xf32>
    %c1_243 = arith.constant 1 : index
    %c1_244 = arith.constant 1 : index
    %c0_245 = arith.constant 0 : index
    %c0_246 = arith.constant 0 : index
    %350 = vector.load %arg6[%c1_243, %c1_244, %c0_245, %c0_246] : memref<2x4x1x8xf32, #tpu.memory_space<vmem>>, vector<1x1x1x8xf32>
    %351 = vector.shape_cast %350 : vector<1x1x1x8xf32> to vector<1x8xf32>
    %352 = vector.broadcast %351 : vector<1x8xf32> to vector<16x8xf32>
    %353 = arith.addf %349, %352 : vector<16x8xf32>
    %c1_247 = arith.constant 1 : index
    %c1_248 = arith.constant 1 : index
    %c0_249 = arith.constant 0 : index
    %c0_250 = arith.constant 0 : index
    %354 = vector.load %arg7[%c1_247, %c1_248, %c0_249, %c0_250] : memref<2x4x32x8xbf16, #tpu.memory_space<vmem>>, vector<1x1x32x8xbf16>
    %355 = vector.shape_cast %354 : vector<1x1x32x8xbf16> to vector<32x8xbf16>
    %cst_251 = arith.constant dense<0.000000e+00> : vector<16x8xf32>
    %356 = tpu.matmul %299, %355, %cst_251 {dimension_numbers = #tpu.dot_dimension_numbers<[1], [0], [0], [1], [0, 0, 1, 1], [], []>} : vector<16x32xbf16>, vector<32x8xbf16>, vector<16x8xf32> -> vector<16x8xf32>
    %c1_252 = arith.constant 1 : index
    %c1_253 = arith.constant 1 : index
    %c0_254 = arith.constant 0 : index
    %c0_255 = arith.constant 0 : index
    %357 = vector.load %arg8[%c1_252, %c1_253, %c0_254, %c0_255] : memref<2x4x1x8xf32, #tpu.memory_space<vmem>>, vector<1x1x1x8xf32>
    %358 = vector.shape_cast %357 : vector<1x1x1x8xf32> to vector<1x8xf32>
    %359 = vector.broadcast %358 : vector<1x8xf32> to vector<16x8xf32>
    %360 = arith.addf %356, %359 : vector<16x8xf32>
    %c1_256 = arith.constant 1 : index
    %c1_257 = arith.constant 1 : index
    %c0_258 = arith.constant 0 : index
    %c0_259 = arith.constant 0 : index
    %361 = vector.load %arg9[%c1_256, %c1_257, %c0_258, %c0_259] : memref<2x4x32x8xbf16, #tpu.memory_space<vmem>>, vector<1x1x32x8xbf16>
    %362 = vector.shape_cast %361 : vector<1x1x32x8xbf16> to vector<32x8xbf16>
    %cst_260 = arith.constant dense<0.000000e+00> : vector<16x8xf32>
    %363 = tpu.matmul %299, %362, %cst_260 {dimension_numbers = #tpu.dot_dimension_numbers<[1], [0], [0], [1], [0, 0, 1, 1], [], []>} : vector<16x32xbf16>, vector<32x8xbf16>, vector<16x8xf32> -> vector<16x8xf32>
    %c1_261 = arith.constant 1 : index
    %c1_262 = arith.constant 1 : index
    %c0_263 = arith.constant 0 : index
    %c0_264 = arith.constant 0 : index
    %364 = vector.load %arg10[%c1_261, %c1_262, %c0_263, %c0_264] : memref<2x4x1x8xf32, #tpu.memory_space<vmem>>, vector<1x1x1x8xf32>
    %365 = vector.shape_cast %364 : vector<1x1x1x8xf32> to vector<1x8xf32>
    %366 = vector.broadcast %365 : vector<1x8xf32> to vector<16x8xf32>
    %367 = arith.addf %363, %366 : vector<16x8xf32>
    %368 = arith.truncf %353 : vector<16x8xf32> to vector<16x8xbf16>
    %369 = tpu.transpose %360, [1, 0] : vector<16x8xf32> -> vector<8x16xf32>
    %370 = arith.truncf %369 : vector<8x16xf32> to vector<8x16xbf16>
    %cst_265 = arith.constant dense<0.000000e+00> : vector<16x16xf32>
    %371 = tpu.matmul %368, %370, %cst_265 {dimension_numbers = #tpu.dot_dimension_numbers<[1], [0], [0], [1], [0, 0, 1, 1], [], []>} : vector<16x8xbf16>, vector<8x16xbf16>, vector<16x16xf32> -> vector<16x16xf32>
    %cst_266 = arith.constant 0.353553385 : f32
    %372 = vector.broadcast %cst_266 : f32 to vector<16x16xf32>
    %373 = arith.mulf %371, %372 : vector<16x16xf32>
    %374 = arith.addf %373, %1 : vector<16x16xf32>
    %cst_267 = arith.constant dense<0xFF800000> : vector<16xf32>
    %375 = vector.multi_reduction <maximumf>, %374, %cst_267 [1] : vector<16x16xf32> to vector<16xf32>
    %376 = vector.shape_cast %375 : vector<16xf32> to vector<16x1xf32>
    %377 = vector.broadcast %376 : vector<16x1xf32> to vector<16x16xf32>
    %378 = arith.subf %374, %377 : vector<16x16xf32>
    %379 = math.exp %378 : vector<16x16xf32>
    %cst_268 = arith.constant dense<0.000000e+00> : vector<16xf32>
    %380 = vector.multi_reduction <add>, %379, %cst_268 [1] : vector<16x16xf32> to vector<16xf32>
    %381 = vector.shape_cast %380 : vector<16xf32> to vector<16x1xf32>
    %382 = tpu.reciprocal %381 {approx = true} : vector<16x1xf32> -> vector<16x1xf32>
    %383 = vector.broadcast %382 : vector<16x1xf32> to vector<16x16xf32>
    %384 = arith.mulf %379, %383 : vector<16x16xf32>
    %385 = arith.truncf %384 : vector<16x16xf32> to vector<16x16xbf16>
    %386 = arith.truncf %367 : vector<16x8xf32> to vector<16x8xbf16>
    %cst_269 = arith.constant dense<0.000000e+00> : vector<16x8xf32>
    %387 = tpu.matmul %385, %386, %cst_269 {dimension_numbers = #tpu.dot_dimension_numbers<[1], [0], [0], [1], [0, 0, 1, 1], [], []>} : vector<16x16xbf16>, vector<16x8xbf16>, vector<16x8xf32> -> vector<16x8xf32>
    %388 = arith.truncf %387 : vector<16x8xf32> to vector<16x8xbf16>
    %c1_270 = arith.constant 1 : index
    %c1_271 = arith.constant 1 : index
    %c0_272 = arith.constant 0 : index
    %c0_273 = arith.constant 0 : index
    %389 = vector.load %arg11[%c1_270, %c1_271, %c0_272, %c0_273] : memref<2x4x8x32xbf16, #tpu.memory_space<vmem>>, vector<1x1x8x32xbf16>
    %390 = vector.shape_cast %389 : vector<1x1x8x32xbf16> to vector<8x32xbf16>
    %cst_274 = arith.constant dense<0.000000e+00> : vector<16x32xf32>
    %391 = tpu.matmul %388, %390, %cst_274 {dimension_numbers = #tpu.dot_dimension_numbers<[1], [0], [0], [1], [0, 0, 1, 1], [], []>} : vector<16x8xbf16>, vector<8x32xbf16>, vector<16x32xf32> -> vector<16x32xf32>
    %392 = arith.addf %346, %391 : vector<16x32xf32>
    %c1_275 = arith.constant 1 : index
    %c2_276 = arith.constant 2 : index
    %c0_277 = arith.constant 0 : index
    %c0_278 = arith.constant 0 : index
    %393 = vector.load %arg5[%c1_275, %c2_276, %c0_277, %c0_278] : memref<2x4x32x8xbf16, #tpu.memory_space<vmem>>, vector<1x1x32x8xbf16>
    %394 = vector.shape_cast %393 : vector<1x1x32x8xbf16> to vector<32x8xbf16>
    %cst_279 = arith.constant dense<0.000000e+00> : vector<16x8xf32>
    %395 = tpu.matmul %299, %394, %cst_279 {dimension_numbers = #tpu.dot_dimension_numbers<[1], [0], [0], [1], [0, 0, 1, 1], [], []>} : vector<16x32xbf16>, vector<32x8xbf16>, vector<16x8xf32> -> vector<16x8xf32>
    %c1_280 = arith.constant 1 : index
    %c2_281 = arith.constant 2 : index
    %c0_282 = arith.constant 0 : index
    %c0_283 = arith.constant 0 : index
    %396 = vector.load %arg6[%c1_280, %c2_281, %c0_282, %c0_283] : memref<2x4x1x8xf32, #tpu.memory_space<vmem>>, vector<1x1x1x8xf32>
    %397 = vector.shape_cast %396 : vector<1x1x1x8xf32> to vector<1x8xf32>
    %398 = vector.broadcast %397 : vector<1x8xf32> to vector<16x8xf32>
    %399 = arith.addf %395, %398 : vector<16x8xf32>
    %c1_284 = arith.constant 1 : index
    %c2_285 = arith.constant 2 : index
    %c0_286 = arith.constant 0 : index
    %c0_287 = arith.constant 0 : index
    %400 = vector.load %arg7[%c1_284, %c2_285, %c0_286, %c0_287] : memref<2x4x32x8xbf16, #tpu.memory_space<vmem>>, vector<1x1x32x8xbf16>
    %401 = vector.shape_cast %400 : vector<1x1x32x8xbf16> to vector<32x8xbf16>
    %cst_288 = arith.constant dense<0.000000e+00> : vector<16x8xf32>
    %402 = tpu.matmul %299, %401, %cst_288 {dimension_numbers = #tpu.dot_dimension_numbers<[1], [0], [0], [1], [0, 0, 1, 1], [], []>} : vector<16x32xbf16>, vector<32x8xbf16>, vector<16x8xf32> -> vector<16x8xf32>
    %c1_289 = arith.constant 1 : index
    %c2_290 = arith.constant 2 : index
    %c0_291 = arith.constant 0 : index
    %c0_292 = arith.constant 0 : index
    %403 = vector.load %arg8[%c1_289, %c2_290, %c0_291, %c0_292] : memref<2x4x1x8xf32, #tpu.memory_space<vmem>>, vector<1x1x1x8xf32>
    %404 = vector.shape_cast %403 : vector<1x1x1x8xf32> to vector<1x8xf32>
    %405 = vector.broadcast %404 : vector<1x8xf32> to vector<16x8xf32>
    %406 = arith.addf %402, %405 : vector<16x8xf32>
    %c1_293 = arith.constant 1 : index
    %c2_294 = arith.constant 2 : index
    %c0_295 = arith.constant 0 : index
    %c0_296 = arith.constant 0 : index
    %407 = vector.load %arg9[%c1_293, %c2_294, %c0_295, %c0_296] : memref<2x4x32x8xbf16, #tpu.memory_space<vmem>>, vector<1x1x32x8xbf16>
    %408 = vector.shape_cast %407 : vector<1x1x32x8xbf16> to vector<32x8xbf16>
    %cst_297 = arith.constant dense<0.000000e+00> : vector<16x8xf32>
    %409 = tpu.matmul %299, %408, %cst_297 {dimension_numbers = #tpu.dot_dimension_numbers<[1], [0], [0], [1], [0, 0, 1, 1], [], []>} : vector<16x32xbf16>, vector<32x8xbf16>, vector<16x8xf32> -> vector<16x8xf32>
    %c1_298 = arith.constant 1 : index
    %c2_299 = arith.constant 2 : index
    %c0_300 = arith.constant 0 : index
    %c0_301 = arith.constant 0 : index
    %410 = vector.load %arg10[%c1_298, %c2_299, %c0_300, %c0_301] : memref<2x4x1x8xf32, #tpu.memory_space<vmem>>, vector<1x1x1x8xf32>
    %411 = vector.shape_cast %410 : vector<1x1x1x8xf32> to vector<1x8xf32>
    %412 = vector.broadcast %411 : vector<1x8xf32> to vector<16x8xf32>
    %413 = arith.addf %409, %412 : vector<16x8xf32>
    %414 = arith.truncf %399 : vector<16x8xf32> to vector<16x8xbf16>
    %415 = tpu.transpose %406, [1, 0] : vector<16x8xf32> -> vector<8x16xf32>
    %416 = arith.truncf %415 : vector<8x16xf32> to vector<8x16xbf16>
    %cst_302 = arith.constant dense<0.000000e+00> : vector<16x16xf32>
    %417 = tpu.matmul %414, %416, %cst_302 {dimension_numbers = #tpu.dot_dimension_numbers<[1], [0], [0], [1], [0, 0, 1, 1], [], []>} : vector<16x8xbf16>, vector<8x16xbf16>, vector<16x16xf32> -> vector<16x16xf32>
    %cst_303 = arith.constant 0.353553385 : f32
    %418 = vector.broadcast %cst_303 : f32 to vector<16x16xf32>
    %419 = arith.mulf %417, %418 : vector<16x16xf32>
    %420 = arith.addf %419, %1 : vector<16x16xf32>
    %cst_304 = arith.constant dense<0xFF800000> : vector<16xf32>
    %421 = vector.multi_reduction <maximumf>, %420, %cst_304 [1] : vector<16x16xf32> to vector<16xf32>
    %422 = vector.shape_cast %421 : vector<16xf32> to vector<16x1xf32>
    %423 = vector.broadcast %422 : vector<16x1xf32> to vector<16x16xf32>
    %424 = arith.subf %420, %423 : vector<16x16xf32>
    %425 = math.exp %424 : vector<16x16xf32>
    %cst_305 = arith.constant dense<0.000000e+00> : vector<16xf32>
    %426 = vector.multi_reduction <add>, %425, %cst_305 [1] : vector<16x16xf32> to vector<16xf32>
    %427 = vector.shape_cast %426 : vector<16xf32> to vector<16x1xf32>
    %428 = tpu.reciprocal %427 {approx = true} : vector<16x1xf32> -> vector<16x1xf32>
    %429 = vector.broadcast %428 : vector<16x1xf32> to vector<16x16xf32>
    %430 = arith.mulf %425, %429 : vector<16x16xf32>
    %431 = arith.truncf %430 : vector<16x16xf32> to vector<16x16xbf16>
    %432 = arith.truncf %413 : vector<16x8xf32> to vector<16x8xbf16>
    %cst_306 = arith.constant dense<0.000000e+00> : vector<16x8xf32>
    %433 = tpu.matmul %431, %432, %cst_306 {dimension_numbers = #tpu.dot_dimension_numbers<[1], [0], [0], [1], [0, 0, 1, 1], [], []>} : vector<16x16xbf16>, vector<16x8xbf16>, vector<16x8xf32> -> vector<16x8xf32>
    %434 = arith.truncf %433 : vector<16x8xf32> to vector<16x8xbf16>
    %c1_307 = arith.constant 1 : index
    %c2_308 = arith.constant 2 : index
    %c0_309 = arith.constant 0 : index
    %c0_310 = arith.constant 0 : index
    %435 = vector.load %arg11[%c1_307, %c2_308, %c0_309, %c0_310] : memref<2x4x8x32xbf16, #tpu.memory_space<vmem>>, vector<1x1x8x32xbf16>
    %436 = vector.shape_cast %435 : vector<1x1x8x32xbf16> to vector<8x32xbf16>
    %cst_311 = arith.constant dense<0.000000e+00> : vector<16x32xf32>
    %437 = tpu.matmul %434, %436, %cst_311 {dimension_numbers = #tpu.dot_dimension_numbers<[1], [0], [0], [1], [0, 0, 1, 1], [], []>} : vector<16x8xbf16>, vector<8x32xbf16>, vector<16x32xf32> -> vector<16x32xf32>
    %438 = arith.addf %392, %437 : vector<16x32xf32>
    %c1_312 = arith.constant 1 : index
    %c3_313 = arith.constant 3 : index
    %c0_314 = arith.constant 0 : index
    %c0_315 = arith.constant 0 : index
    %439 = vector.load %arg5[%c1_312, %c3_313, %c0_314, %c0_315] : memref<2x4x32x8xbf16, #tpu.memory_space<vmem>>, vector<1x1x32x8xbf16>
    %440 = vector.shape_cast %439 : vector<1x1x32x8xbf16> to vector<32x8xbf16>
    %cst_316 = arith.constant dense<0.000000e+00> : vector<16x8xf32>
    %441 = tpu.matmul %299, %440, %cst_316 {dimension_numbers = #tpu.dot_dimension_numbers<[1], [0], [0], [1], [0, 0, 1, 1], [], []>} : vector<16x32xbf16>, vector<32x8xbf16>, vector<16x8xf32> -> vector<16x8xf32>
    %c1_317 = arith.constant 1 : index
    %c3_318 = arith.constant 3 : index
    %c0_319 = arith.constant 0 : index
    %c0_320 = arith.constant 0 : index
    %442 = vector.load %arg6[%c1_317, %c3_318, %c0_319, %c0_320] : memref<2x4x1x8xf32, #tpu.memory_space<vmem>>, vector<1x1x1x8xf32>
    %443 = vector.shape_cast %442 : vector<1x1x1x8xf32> to vector<1x8xf32>
    %444 = vector.broadcast %443 : vector<1x8xf32> to vector<16x8xf32>
    %445 = arith.addf %441, %444 : vector<16x8xf32>
    %c1_321 = arith.constant 1 : index
    %c3_322 = arith.constant 3 : index
    %c0_323 = arith.constant 0 : index
    %c0_324 = arith.constant 0 : index
    %446 = vector.load %arg7[%c1_321, %c3_322, %c0_323, %c0_324] : memref<2x4x32x8xbf16, #tpu.memory_space<vmem>>, vector<1x1x32x8xbf16>
    %447 = vector.shape_cast %446 : vector<1x1x32x8xbf16> to vector<32x8xbf16>
    %cst_325 = arith.constant dense<0.000000e+00> : vector<16x8xf32>
    %448 = tpu.matmul %299, %447, %cst_325 {dimension_numbers = #tpu.dot_dimension_numbers<[1], [0], [0], [1], [0, 0, 1, 1], [], []>} : vector<16x32xbf16>, vector<32x8xbf16>, vector<16x8xf32> -> vector<16x8xf32>
    %c1_326 = arith.constant 1 : index
    %c3_327 = arith.constant 3 : index
    %c0_328 = arith.constant 0 : index
    %c0_329 = arith.constant 0 : index
    %449 = vector.load %arg8[%c1_326, %c3_327, %c0_328, %c0_329] : memref<2x4x1x8xf32, #tpu.memory_space<vmem>>, vector<1x1x1x8xf32>
    %450 = vector.shape_cast %449 : vector<1x1x1x8xf32> to vector<1x8xf32>
    %451 = vector.broadcast %450 : vector<1x8xf32> to vector<16x8xf32>
    %452 = arith.addf %448, %451 : vector<16x8xf32>
    %c1_330 = arith.constant 1 : index
    %c3_331 = arith.constant 3 : index
    %c0_332 = arith.constant 0 : index
    %c0_333 = arith.constant 0 : index
    %453 = vector.load %arg9[%c1_330, %c3_331, %c0_332, %c0_333] : memref<2x4x32x8xbf16, #tpu.memory_space<vmem>>, vector<1x1x32x8xbf16>
    %454 = vector.shape_cast %453 : vector<1x1x32x8xbf16> to vector<32x8xbf16>
    %cst_334 = arith.constant dense<0.000000e+00> : vector<16x8xf32>
    %455 = tpu.matmul %299, %454, %cst_334 {dimension_numbers = #tpu.dot_dimension_numbers<[1], [0], [0], [1], [0, 0, 1, 1], [], []>} : vector<16x32xbf16>, vector<32x8xbf16>, vector<16x8xf32> -> vector<16x8xf32>
    %c1_335 = arith.constant 1 : index
    %c3_336 = arith.constant 3 : index
    %c0_337 = arith.constant 0 : index
    %c0_338 = arith.constant 0 : index
    %456 = vector.load %arg10[%c1_335, %c3_336, %c0_337, %c0_338] : memref<2x4x1x8xf32, #tpu.memory_space<vmem>>, vector<1x1x1x8xf32>
    %457 = vector.shape_cast %456 : vector<1x1x1x8xf32> to vector<1x8xf32>
    %458 = vector.broadcast %457 : vector<1x8xf32> to vector<16x8xf32>
    %459 = arith.addf %455, %458 : vector<16x8xf32>
    %460 = arith.truncf %445 : vector<16x8xf32> to vector<16x8xbf16>
    %461 = tpu.transpose %452, [1, 0] : vector<16x8xf32> -> vector<8x16xf32>
    %462 = arith.truncf %461 : vector<8x16xf32> to vector<8x16xbf16>
    %cst_339 = arith.constant dense<0.000000e+00> : vector<16x16xf32>
    %463 = tpu.matmul %460, %462, %cst_339 {dimension_numbers = #tpu.dot_dimension_numbers<[1], [0], [0], [1], [0, 0, 1, 1], [], []>} : vector<16x8xbf16>, vector<8x16xbf16>, vector<16x16xf32> -> vector<16x16xf32>
    %cst_340 = arith.constant 0.353553385 : f32
    %464 = vector.broadcast %cst_340 : f32 to vector<16x16xf32>
    %465 = arith.mulf %463, %464 : vector<16x16xf32>
    %466 = arith.addf %465, %1 : vector<16x16xf32>
    %cst_341 = arith.constant dense<0xFF800000> : vector<16xf32>
    %467 = vector.multi_reduction <maximumf>, %466, %cst_341 [1] : vector<16x16xf32> to vector<16xf32>
    %468 = vector.shape_cast %467 : vector<16xf32> to vector<16x1xf32>
    %469 = vector.broadcast %468 : vector<16x1xf32> to vector<16x16xf32>
    %470 = arith.subf %466, %469 : vector<16x16xf32>
    %471 = math.exp %470 : vector<16x16xf32>
    %cst_342 = arith.constant dense<0.000000e+00> : vector<16xf32>
    %472 = vector.multi_reduction <add>, %471, %cst_342 [1] : vector<16x16xf32> to vector<16xf32>
    %473 = vector.shape_cast %472 : vector<16xf32> to vector<16x1xf32>
    %474 = tpu.reciprocal %473 {approx = true} : vector<16x1xf32> -> vector<16x1xf32>
    %475 = vector.broadcast %474 : vector<16x1xf32> to vector<16x16xf32>
    %476 = arith.mulf %471, %475 : vector<16x16xf32>
    %477 = arith.truncf %476 : vector<16x16xf32> to vector<16x16xbf16>
    %478 = arith.truncf %459 : vector<16x8xf32> to vector<16x8xbf16>
    %cst_343 = arith.constant dense<0.000000e+00> : vector<16x8xf32>
    %479 = tpu.matmul %477, %478, %cst_343 {dimension_numbers = #tpu.dot_dimension_numbers<[1], [0], [0], [1], [0, 0, 1, 1], [], []>} : vector<16x16xbf16>, vector<16x8xbf16>, vector<16x8xf32> -> vector<16x8xf32>
    %480 = arith.truncf %479 : vector<16x8xf32> to vector<16x8xbf16>
    %c1_344 = arith.constant 1 : index
    %c3_345 = arith.constant 3 : index
    %c0_346 = arith.constant 0 : index
    %c0_347 = arith.constant 0 : index
    %481 = vector.load %arg11[%c1_344, %c3_345, %c0_346, %c0_347] : memref<2x4x8x32xbf16, #tpu.memory_space<vmem>>, vector<1x1x8x32xbf16>
    %482 = vector.shape_cast %481 : vector<1x1x8x32xbf16> to vector<8x32xbf16>
    %cst_348 = arith.constant dense<0.000000e+00> : vector<16x32xf32>
    %483 = tpu.matmul %480, %482, %cst_348 {dimension_numbers = #tpu.dot_dimension_numbers<[1], [0], [0], [1], [0, 0, 1, 1], [], []>} : vector<16x8xbf16>, vector<8x32xbf16>, vector<16x32xf32> -> vector<16x32xf32>
    %484 = arith.addf %438, %483 : vector<16x32xf32>
    %485 = arith.addf %298, %484 : vector<16x32xf32>
    %c1_349 = arith.constant 1 : index
    %c0_350 = arith.constant 0 : index
    %c0_351 = arith.constant 0 : index
    %486 = vector.load %arg12[%c1_349, %c0_350, %c0_351] : memref<2x1x32xf32, #tpu.memory_space<vmem>>, vector<1x1x32xf32>
    %487 = vector.shape_cast %486 : vector<1x1x32xf32> to vector<1x32xf32>
    %488 = vector.broadcast %487 : vector<1x32xf32> to vector<16x32xf32>
    %489 = arith.addf %485, %488 : vector<16x32xf32>
    %c1_352 = arith.constant 1 : index
    %c0_353 = arith.constant 0 : index
    %c0_354 = arith.constant 0 : index
    %490 = vector.load %arg13[%c1_352, %c0_353, %c0_354] : memref<2x1x32xf32, #tpu.memory_space<vmem>>, vector<1x1x32xf32>
    %491 = vector.shape_cast %490 : vector<1x1x32xf32> to vector<1x32xf32>
    %c1_355 = arith.constant 1 : index
    %c0_356 = arith.constant 0 : index
    %c0_357 = arith.constant 0 : index
    %492 = vector.load %arg14[%c1_355, %c0_356, %c0_357] : memref<2x1x32xf32, #tpu.memory_space<vmem>>, vector<1x1x32xf32>
    %493 = vector.shape_cast %492 : vector<1x1x32xf32> to vector<1x32xf32>
    %cst_358 = arith.constant dense<0.000000e+00> : vector<16xf32>
    %494 = vector.multi_reduction <add>, %489, %cst_358 [1] : vector<16x32xf32> to vector<16xf32>
    %495 = vector.shape_cast %494 : vector<16xf32> to vector<16x1xf32>
    %cst_359 = arith.constant 3.200000e+01 : f32
    %496 = vector.broadcast %cst_359 : f32 to vector<16x1xf32>
    %497 = arith.divf %495, %496 : vector<16x1xf32>
    %498 = vector.broadcast %497 : vector<16x1xf32> to vector<16x32xf32>
    %499 = arith.subf %489, %498 : vector<16x32xf32>
    %500 = arith.mulf %499, %499 : vector<16x32xf32>
    %cst_360 = arith.constant dense<0.000000e+00> : vector<16xf32>
    %501 = vector.multi_reduction <add>, %500, %cst_360 [1] : vector<16x32xf32> to vector<16xf32>
    %502 = vector.shape_cast %501 : vector<16xf32> to vector<16x1xf32>
    %cst_361 = arith.constant 3.200000e+01 : f32
    %503 = vector.broadcast %cst_361 : f32 to vector<16x1xf32>
    %504 = arith.divf %502, %503 : vector<16x1xf32>
    %505 = vector.broadcast %497 : vector<16x1xf32> to vector<16x32xf32>
    %506 = arith.subf %489, %505 : vector<16x32xf32>
    %cst_362 = arith.constant 9.99999974E-6 : f32
    %507 = vector.broadcast %cst_362 : f32 to vector<16x1xf32>
    %508 = arith.addf %504, %507 : vector<16x1xf32>
    %509 = math.rsqrt %508 : vector<16x1xf32>
    %510 = vector.broadcast %509 : vector<16x1xf32> to vector<16x32xf32>
    %511 = arith.mulf %506, %510 : vector<16x32xf32>
    %512 = vector.broadcast %491 : vector<1x32xf32> to vector<16x32xf32>
    %513 = arith.mulf %511, %512 : vector<16x32xf32>
    %514 = vector.broadcast %493 : vector<1x32xf32> to vector<16x32xf32>
    %515 = arith.addf %513, %514 : vector<16x32xf32>
    %516 = arith.truncf %515 : vector<16x32xf32> to vector<16x32xbf16>
    %c1_363 = arith.constant 1 : index
    %c0_364 = arith.constant 0 : index
    %c0_365 = arith.constant 0 : index
    %517 = vector.load %arg15[%c1_363, %c0_364, %c0_365] : memref<2x32x128xbf16, #tpu.memory_space<vmem>>, vector<1x32x128xbf16>
    %518 = vector.shape_cast %517 : vector<1x32x128xbf16> to vector<32x128xbf16>
    %cst_366 = arith.constant dense<0.000000e+00> : vector<16x128xf32>
    %519 = tpu.matmul %516, %518, %cst_366 {dimension_numbers = #tpu.dot_dimension_numbers<[1], [0], [0], [1], [0, 0, 1, 1], [], []>} : vector<16x32xbf16>, vector<32x128xbf16>, vector<16x128xf32> -> vector<16x128xf32>
    %c1_367 = arith.constant 1 : index
    %c0_368 = arith.constant 0 : index
    %c0_369 = arith.constant 0 : index
    %520 = vector.load %arg16[%c1_367, %c0_368, %c0_369] : memref<2x1x128xf32, #tpu.memory_space<vmem>>, vector<1x1x128xf32>
    %521 = vector.shape_cast %520 : vector<1x1x128xf32> to vector<1x128xf32>
    %522 = vector.broadcast %521 : vector<1x128xf32> to vector<16x128xf32>
    %523 = arith.addf %519, %522 : vector<16x128xf32>
    %524 = arith.mulf %523, %523 : vector<16x128xf32>
    %525 = arith.mulf %523, %524 : vector<16x128xf32>
    %cst_370 = arith.constant 4.471500e-02 : f32
    %526 = vector.broadcast %cst_370 : f32 to vector<16x128xf32>
    %527 = arith.mulf %526, %525 : vector<16x128xf32>
    %528 = arith.addf %523, %527 : vector<16x128xf32>
    %cst_371 = arith.constant 0.797884583 : f32
    %529 = vector.broadcast %cst_371 : f32 to vector<16x128xf32>
    %530 = arith.mulf %529, %528 : vector<16x128xf32>
    %531 = math.tanh %530 : vector<16x128xf32>
    %cst_372 = arith.constant 1.000000e+00 : f32
    %532 = vector.broadcast %cst_372 : f32 to vector<16x128xf32>
    %533 = arith.addf %532, %531 : vector<16x128xf32>
    %cst_373 = arith.constant 5.000000e-01 : f32
    %534 = vector.broadcast %cst_373 : f32 to vector<16x128xf32>
    %535 = arith.mulf %534, %533 : vector<16x128xf32>
    %536 = arith.mulf %523, %535 : vector<16x128xf32>
    %537 = arith.truncf %536 : vector<16x128xf32> to vector<16x128xbf16>
    %c1_374 = arith.constant 1 : index
    %c0_375 = arith.constant 0 : index
    %c0_376 = arith.constant 0 : index
    %538 = vector.load %arg17[%c1_374, %c0_375, %c0_376] : memref<2x128x32xbf16, #tpu.memory_space<vmem>>, vector<1x128x32xbf16>
    %539 = vector.shape_cast %538 : vector<1x128x32xbf16> to vector<128x32xbf16>
    %cst_377 = arith.constant dense<0.000000e+00> : vector<16x32xf32>
    %540 = tpu.matmul %537, %539, %cst_377 {dimension_numbers = #tpu.dot_dimension_numbers<[1], [0], [0], [1], [0, 0, 1, 1], [], []>} : vector<16x128xbf16>, vector<128x32xbf16>, vector<16x32xf32> -> vector<16x32xf32>
    %c1_378 = arith.constant 1 : index
    %c0_379 = arith.constant 0 : index
    %c0_380 = arith.constant 0 : index
    %541 = vector.load %arg18[%c1_378, %c0_379, %c0_380] : memref<2x1x32xf32, #tpu.memory_space<vmem>>, vector<1x1x32xf32>
    %542 = vector.shape_cast %541 : vector<1x1x32xf32> to vector<1x32xf32>
    %543 = vector.broadcast %542 : vector<1x32xf32> to vector<16x32xf32>
    %544 = arith.addf %540, %543 : vector<16x32xf32>
    %545 = arith.addf %515, %544 : vector<16x32xf32>
    %c1_381 = arith.constant 1 : index
    %c0_382 = arith.constant 0 : index
    %c0_383 = arith.constant 0 : index
    %546 = vector.load %arg19[%c1_381, %c0_382, %c0_383] : memref<2x1x32xf32, #tpu.memory_space<vmem>>, vector<1x1x32xf32>
    %547 = vector.shape_cast %546 : vector<1x1x32xf32> to vector<1x32xf32>
    %c1_384 = arith.constant 1 : index
    %c0_385 = arith.constant 0 : index
    %c0_386 = arith.constant 0 : index
    %548 = vector.load %arg20[%c1_384, %c0_385, %c0_386] : memref<2x1x32xf32, #tpu.memory_space<vmem>>, vector<1x1x32xf32>
    %549 = vector.shape_cast %548 : vector<1x1x32xf32> to vector<1x32xf32>
    %cst_387 = arith.constant dense<0.000000e+00> : vector<16xf32>
    %550 = vector.multi_reduction <add>, %545, %cst_387 [1] : vector<16x32xf32> to vector<16xf32>
    %551 = vector.shape_cast %550 : vector<16xf32> to vector<16x1xf32>
    %cst_388 = arith.constant 3.200000e+01 : f32
    %552 = vector.broadcast %cst_388 : f32 to vector<16x1xf32>
    %553 = arith.divf %551, %552 : vector<16x1xf32>
    %554 = vector.broadcast %553 : vector<16x1xf32> to vector<16x32xf32>
    %555 = arith.subf %545, %554 : vector<16x32xf32>
    %556 = arith.mulf %555, %555 : vector<16x32xf32>
    %cst_389 = arith.constant dense<0.000000e+00> : vector<16xf32>
    %557 = vector.multi_reduction <add>, %556, %cst_389 [1] : vector<16x32xf32> to vector<16xf32>
    %558 = vector.shape_cast %557 : vector<16xf32> to vector<16x1xf32>
    %cst_390 = arith.constant 3.200000e+01 : f32
    %559 = vector.broadcast %cst_390 : f32 to vector<16x1xf32>
    %560 = arith.divf %558, %559 : vector<16x1xf32>
    %561 = vector.broadcast %553 : vector<16x1xf32> to vector<16x32xf32>
    %562 = arith.subf %545, %561 : vector<16x32xf32>
    %cst_391 = arith.constant 9.99999974E-6 : f32
    %563 = vector.broadcast %cst_391 : f32 to vector<16x1xf32>
    %564 = arith.addf %560, %563 : vector<16x1xf32>
    %565 = math.rsqrt %564 : vector<16x1xf32>
    %566 = vector.broadcast %565 : vector<16x1xf32> to vector<16x32xf32>
    %567 = arith.mulf %562, %566 : vector<16x32xf32>
    %568 = vector.broadcast %547 : vector<1x32xf32> to vector<16x32xf32>
    %569 = arith.mulf %567, %568 : vector<16x32xf32>
    %570 = vector.broadcast %549 : vector<1x32xf32> to vector<16x32xf32>
    %571 = arith.addf %569, %570 : vector<16x32xf32>
    %572 = vector.extract_strided_slice %571 {offsets = [0, 0], sizes = [1, 32], strides = [1, 1]} : vector<16x32xf32> to vector<1x32xf32>
    %573 = vector.extract_strided_slice %571 {offsets = [8, 0], sizes = [1, 32], strides = [1, 1]} : vector<16x32xf32> to vector<1x32xf32>
    %574 = tpu.concatenate %572, %573 in 0 : vector<1x32xf32>, vector<1x32xf32> -> vector<2x32xf32>
    %575 = arith.truncf %574 : vector<2x32xf32> to vector<2x32xbf16>
    %c0_392 = arith.constant 0 : index
    %c0_393 = arith.constant 0 : index
    %576 = vector.load %arg21[%c0_392, %c0_393] : memref<32x128xbf16, #tpu.memory_space<vmem>>, vector<32x128xbf16>
    %cst_394 = arith.constant dense<0.000000e+00> : vector<2x128xf32>
    %577 = tpu.matmul %575, %576, %cst_394 {dimension_numbers = #tpu.dot_dimension_numbers<[1], [0], [0], [1], [0, 0, 1, 1], [], []>} : vector<2x32xbf16>, vector<32x128xbf16>, vector<2x128xf32> -> vector<2x128xf32>
    %c0_395 = arith.constant 0 : index
    %c0_396 = arith.constant 0 : index
    %578 = vector.load %arg22[%c0_395, %c0_396] : memref<1x128xf32, #tpu.memory_space<vmem>>, vector<1x128xf32>
    %579 = vector.broadcast %578 : vector<1x128xf32> to vector<2x128xf32>
    %580 = arith.addf %577, %579 : vector<2x128xf32>
    %581 = arith.mulf %580, %580 : vector<2x128xf32>
    %cst_397 = arith.constant dense<0.000000e+00> : vector<2xf32>
    %582 = vector.multi_reduction <add>, %581, %cst_397 [1] : vector<2x128xf32> to vector<2xf32>
    %583 = vector.shape_cast %582 : vector<2xf32> to vector<2x1xf32>
    %cst_398 = arith.constant 9.99999996E-13 : f32
    %584 = vector.broadcast %cst_398 : f32 to vector<2x1xf32>
    %585 = arith.addf %583, %584 : vector<2x1xf32>
    %586 = math.rsqrt %585 : vector<2x1xf32>
    %587 = vector.broadcast %586 : vector<2x1xf32> to vector<2x128xf32>
    %588 = arith.mulf %580, %587 : vector<2x128xf32>
    %c0_399 = arith.constant 0 : index
    %c0_400 = arith.constant 0 : index
    %589 = vector.load %arg23[%c0_399, %c0_400] : memref<2x128xf32, #tpu.memory_space<vmem>>, vector<2x128xf32>
    tpu.vector_store %arg23[%c0_399, %c0_400], %588 {strides = array<i32>} : memref<2x128xf32, #tpu.memory_space<vmem>>, vector<2x128xf32>,
    return
  }
  func.func @transform_0(%arg0: i32) -> (i32, i32) {
    %c0_i32 = arith.constant 0 : i32
    %c0_i32_0 = arith.constant 0 : i32
    %c0_i32_1 = arith.constant 0 : i32
    return %c0_i32, %c0_i32_0 : i32, i32
  }
  func.func @transform_1(%arg0: i32) -> (i32, i32) {
    %c0_i32 = arith.constant 0 : i32
    %c0_i32_0 = arith.constant 0 : i32
    %c0_i32_1 = arith.constant 0 : i32
    return %c0_i32, %c0_i32_0 : i32, i32
  }
  func.func @transform_2(%arg0: i32) -> (i32, i32) {
    %c0_i32 = arith.constant 0 : i32
    %c0_i32_0 = arith.constant 0 : i32
    %c0_i32_1 = arith.constant 0 : i32
    return %c0_i32, %c0_i32_0 : i32, i32
  }
  func.func @transform_3(%arg0: i32) -> (i32, i32) {
    %c0_i32 = arith.constant 0 : i32
    %c0_i32_0 = arith.constant 0 : i32
    %c0_i32_1 = arith.constant 0 : i32
    return %c0_i32, %c0_i32_0 : i32, i32
  }
  func.func @transform_4(%arg0: i32) -> (i32, i32, i32, i32) {
    %c0_i32 = arith.constant 0 : i32
    %c0_i32_0 = arith.constant 0 : i32
    %c0_i32_1 = arith.constant 0 : i32
    %c0_i32_2 = arith.constant 0 : i32
    %c0_i32_3 = arith.constant 0 : i32
    return %c0_i32, %c0_i32_0, %c0_i32_1, %c0_i32_2 : i32, i32, i32, i32
  }
  func.func @transform_5(%arg0: i32) -> (i32, i32, i32, i32) {
    %c0_i32 = arith.constant 0 : i32
    %c0_i32_0 = arith.constant 0 : i32
    %c0_i32_1 = arith.constant 0 : i32
    %c0_i32_2 = arith.constant 0 : i32
    %c0_i32_3 = arith.constant 0 : i32
    return %c0_i32, %c0_i32_0, %c0_i32_1, %c0_i32_2 : i32, i32, i32, i32
  }
  func.func @transform_6(%arg0: i32) -> (i32, i32, i32, i32) {
    %c0_i32 = arith.constant 0 : i32
    %c0_i32_0 = arith.constant 0 : i32
    %c0_i32_1 = arith.constant 0 : i32
    %c0_i32_2 = arith.constant 0 : i32
    %c0_i32_3 = arith.constant 0 : i32
    return %c0_i32, %c0_i32_0, %c0_i32_1, %c0_i32_2 : i32, i32, i32, i32
  }
  func.func @transform_7(%arg0: i32) -> (i32, i32, i32, i32) {
    %c0_i32 = arith.constant 0 : i32
    %c0_i32_0 = arith.constant 0 : i32
    %c0_i32_1 = arith.constant 0 : i32
    %c0_i32_2 = arith.constant 0 : i32
    %c0_i32_3 = arith.constant 0 : i32
    return %c0_i32, %c0_i32_0, %c0_i32_1, %c0_i32_2 : i32, i32, i32, i32
  }
  func.func @transform_8(%arg0: i32) -> (i32, i32, i32, i32) {
    %c0_i32 = arith.constant 0 : i32
    %c0_i32_0 = arith.constant 0 : i32
    %c0_i32_1 = arith.constant 0 : i32
    %c0_i32_2 = arith.constant 0 : i32
    %c0_i32_3 = arith.constant 0 : i32
    return %c0_i32, %c0_i32_0, %c0_i32_1, %c0_i32_2 : i32, i32, i32, i32
  }
  func.func @transform_9(%arg0: i32) -> (i32, i32, i32, i32) {
    %c0_i32 = arith.constant 0 : i32
    %c0_i32_0 = arith.constant 0 : i32
    %c0_i32_1 = arith.constant 0 : i32
    %c0_i32_2 = arith.constant 0 : i32
    %c0_i32_3 = arith.constant 0 : i32
    return %c0_i32, %c0_i32_0, %c0_i32_1, %c0_i32_2 : i32, i32, i32, i32
  }
  func.func @transform_10(%arg0: i32) -> (i32, i32, i32, i32) {
    %c0_i32 = arith.constant 0 : i32
    %c0_i32_0 = arith.constant 0 : i32
    %c0_i32_1 = arith.constant 0 : i32
    %c0_i32_2 = arith.constant 0 : i32
    %c0_i32_3 = arith.constant 0 : i32
    return %c0_i32, %c0_i32_0, %c0_i32_1, %c0_i32_2 : i32, i32, i32, i32
  }
  func.func @transform_11(%arg0: i32) -> (i32, i32, i32) {
    %c0_i32 = arith.constant 0 : i32
    %c0_i32_0 = arith.constant 0 : i32
    %c0_i32_1 = arith.constant 0 : i32
    %c0_i32_2 = arith.constant 0 : i32
    return %c0_i32, %c0_i32_0, %c0_i32_1 : i32, i32, i32
  }
  func.func @transform_12(%arg0: i32) -> (i32, i32, i32) {
    %c0_i32 = arith.constant 0 : i32
    %c0_i32_0 = arith.constant 0 : i32
    %c0_i32_1 = arith.constant 0 : i32
    %c0_i32_2 = arith.constant 0 : i32
    return %c0_i32, %c0_i32_0, %c0_i32_1 : i32, i32, i32
  }
  func.func @transform_13(%arg0: i32) -> (i32, i32, i32) {
    %c0_i32 = arith.constant 0 : i32
    %c0_i32_0 = arith.constant 0 : i32
    %c0_i32_1 = arith.constant 0 : i32
    %c0_i32_2 = arith.constant 0 : i32
    return %c0_i32, %c0_i32_0, %c0_i32_1 : i32, i32, i32
  }
  func.func @transform_14(%arg0: i32) -> (i32, i32, i32) {
    %c0_i32 = arith.constant 0 : i32
    %c0_i32_0 = arith.constant 0 : i32
    %c0_i32_1 = arith.constant 0 : i32
    %c0_i32_2 = arith.constant 0 : i32
    return %c0_i32, %c0_i32_0, %c0_i32_1 : i32, i32, i32
  }
  func.func @transform_15(%arg0: i32) -> (i32, i32, i32) {
    %c0_i32 = arith.constant 0 : i32
    %c0_i32_0 = arith.constant 0 : i32
    %c0_i32_1 = arith.constant 0 : i32
    %c0_i32_2 = arith.constant 0 : i32
    return %c0_i32, %c0_i32_0, %c0_i32_1 : i32, i32, i32
  }
  func.func @transform_16(%arg0: i32) -> (i32, i32, i32) {
    %c0_i32 = arith.constant 0 : i32
    %c0_i32_0 = arith.constant 0 : i32
    %c0_i32_1 = arith.constant 0 : i32
    %c0_i32_2 = arith.constant 0 : i32
    return %c0_i32, %c0_i32_0, %c0_i32_1 : i32, i32, i32
  }
  func.func @transform_17(%arg0: i32) -> (i32, i32, i32) {
    %c0_i32 = arith.constant 0 : i32
    %c0_i32_0 = arith.constant 0 : i32
    %c0_i32_1 = arith.constant 0 : i32
    %c0_i32_2 = arith.constant 0 : i32
    return %c0_i32, %c0_i32_0, %c0_i32_1 : i32, i32, i32
  }
  func.func @transform_18(%arg0: i32) -> (i32, i32, i32) {
    %c0_i32 = arith.constant 0 : i32
    %c0_i32_0 = arith.constant 0 : i32
    %c0_i32_1 = arith.constant 0 : i32
    %c0_i32_2 = arith.constant 0 : i32
    return %c0_i32, %c0_i32_0, %c0_i32_1 : i32, i32, i32
  }
  func.func @transform_19(%arg0: i32) -> (i32, i32, i32) {
    %c0_i32 = arith.constant 0 : i32
    %c0_i32_0 = arith.constant 0 : i32
    %c0_i32_1 = arith.constant 0 : i32
    %c0_i32_2 = arith.constant 0 : i32
    return %c0_i32, %c0_i32_0, %c0_i32_1 : i32, i32, i32
  }
  func.func @transform_20(%arg0: i32) -> (i32, i32) {
    %c0_i32 = arith.constant 0 : i32
    %c0_i32_0 = arith.constant 0 : i32
    %c0_i32_1 = arith.constant 0 : i32
    return %c0_i32, %c0_i32_0 : i32, i32
  }
  func.func @transform_21(%arg0: i32) -> (i32, i32) {
    %c0_i32 = arith.constant 0 : i32
    %c0_i32_0 = arith.constant 0 : i32
    %c0_i32_1 = arith.constant 0 : i32
    return %c0_i32, %c0_i32_0 : i32, i32
  }
  func.func @transform_22(%arg0: i32) -> (i32, i32) {
    %c0_i32 = arith.constant 0 : i32
    %c0_i32_0 = arith.constant 0 : i32
    %c0_i32_1 = arith.constant 0 : i32
    return %c0_i32, %c0_i32_0 : i32, i32
  }
}

</mosaic_0001>

<llo_original>
// kernel: tpu_custom_call.1
$region0: #{tpu_custom_call.1}
  #allocation0 [shape = 'u32[]', space=smem, size = 0x4, offset = 0x4, fixed_abs, tag = 'smem constant byte address 0x4 - core index']
  #allocation1 [shape = 'u32[144,128]{1,0:T(1,128)}', space=vmem, size = 0x12000, scoped, tag = 'internal scratch']
  %s0 = inlined_call_operand.vmem [shape: f32[16,32], index: 0, kind: input, shape index: {}]
  %s1 = inlined_call_operand.vmem [shape: f32[16,16], index: 1, kind: input, shape index: {}]
  %s2 = inlined_call_operand.vmem [shape: f32[1,32], index: 2, kind: input, shape index: {}]
  %s3 = inlined_call_operand.vmem [shape: f32[1,32], index: 3, kind: input, shape index: {}]
  %s4 = inlined_call_operand.vmem [shape: bf16[2,4,32,8], index: 4, kind: input, shape index: {}]
  %s5 = inlined_call_operand.vmem [shape: f32[2,4,1,8], index: 5, kind: input, shape index: {}]
  %s6 = inlined_call_operand.vmem [shape: bf16[2,4,32,8], index: 6, kind: input, shape index: {}]
  %s7 = inlined_call_operand.vmem [shape: f32[2,4,1,8], index: 7, kind: input, shape index: {}]
  %s8 = inlined_call_operand.vmem [shape: bf16[2,4,32,8], index: 8, kind: input, shape index: {}]
  %s9 = inlined_call_operand.vmem [shape: f32[2,4,1,8], index: 9, kind: input, shape index: {}]
  %s10 = inlined_call_operand.vmem [shape: bf16[2,4,8,32], index: 10, kind: input, shape index: {}]
  %s11 = inlined_call_operand.vmem [shape: f32[2,1,32], index: 11, kind: input, shape index: {}]
  %s12 = inlined_call_operand.vmem [shape: f32[2,1,32], index: 12, kind: input, shape index: {}]
  %s13 = inlined_call_operand.vmem [shape: f32[2,1,32], index: 13, kind: input, shape index: {}]
  %s14 = inlined_call_operand.vmem [shape: bf16[2,32,128], index: 14, kind: input, shape index: {}]
  %s15 = inlined_call_operand.vmem [shape: f32[2,1,128], index: 15, kind: input, shape index: {}]
  %s16 = inlined_call_operand.vmem [shape: bf16[2,128,32], index: 16, kind: input, shape index: {}]
  %s17 = inlined_call_operand.vmem [shape: f32[2,1,32], index: 17, kind: input, shape index: {}]
  %s18 = inlined_call_operand.vmem [shape: f32[2,1,32], index: 18, kind: input, shape index: {}]
  %s19 = inlined_call_operand.vmem [shape: f32[2,1,32], index: 19, kind: input, shape index: {}]
  %s20 = inlined_call_operand.vmem [shape: bf16[32,128], index: 20, kind: input, shape index: {}]
  %s21 = inlined_call_operand.vmem [shape: f32[1,128], index: 21, kind: input, shape index: {}]
  %s22 = inlined_call_operand.hbm [shape: f32[2,128], index: 22, kind: output, shape index: {}]
  %s23 = sld [smem:[#allocation0]]
  $region98: #{tpu_custom_call.1} parent=0
    _
  %s25 = ssub.s32 1, %s23
  %s26 = scalar_select 0, %s25, %s23
  $region1: #{tpu_custom_call.1} parent=0
    #allocation2 [shape = 'u8[1024]{0}', space=vmem, size = 0x400, scoped, tag = 'output window, operand 0, single buffered']
    #allocation3 [shape = 's32[1]{0}', space=sflag, size = 0x4, scoped, tag = 'scoped memory for tpu_custom_call.1']
    %27 = vsyncpa [#allocation3], 0
    // Predicated region
    $region2: #{tpu_custom_call.1} parent=1 // pred_check
      _
    $region3: #{tpu_custom_call.1} parent=1 // pred_check_branch
      %29 = sbr.rel (0) target = $region5
    $region4: #{tpu_custom_call.1} parent=1 // pred_region
      _
    $region5: #{tpu_custom_call.1} parent=1 // pred_fallthru
      _
    // Predicated region
    $region6: #{tpu_custom_call.1} parent=1 // pred_check
      _
    $region7: #{tpu_custom_call.1} parent=1 // pred_check_branch
      %31 = sbr.rel (0) target = $region9
    $region8: #{tpu_custom_call.1} parent=1 // pred_region
      _
    $region9: #{tpu_custom_call.1} parent=1 // pred_fallthru
      _
    // Predicated region
    $region10: #{tpu_custom_call.1} parent=1 // pred_check
      _
    $region11: #{tpu_custom_call.1} parent=1 // pred_check_branch
      %33 = sbr.rel (0) target = $region13
    $region12: #{tpu_custom_call.1} parent=1 // pred_region
      _
    $region13: #{tpu_custom_call.1} parent=1 // pred_fallthru
      _
    // Predicated region
    $region14: #{tpu_custom_call.1} parent=1 // pred_check
      _
    $region15: #{tpu_custom_call.1} parent=1 // pred_check_branch
      %35 = sbr.rel (0) target = $region17
    $region16: #{tpu_custom_call.1} parent=1 // pred_region
      _
    $region17: #{tpu_custom_call.1} parent=1 // pred_fallthru
      _
    // Predicated region
    $region18: #{tpu_custom_call.1} parent=1 // pred_check
      _
    $region19: #{tpu_custom_call.1} parent=1 // pred_check_branch
      %37 = sbr.rel (0) target = $region21
    $region20: #{tpu_custom_call.1} parent=1 // pred_region
      _
    $region21: #{tpu_custom_call.1} parent=1 // pred_fallthru
      _
    // Predicated region
    $region22: #{tpu_custom_call.1} parent=1 // pred_check
      _
    $region23: #{tpu_custom_call.1} parent=1 // pred_check_branch
      %39 = sbr.rel (0) target = $region25
    $region24: #{tpu_custom_call.1} parent=1 // pred_region
      _
    $region25: #{tpu_custom_call.1} parent=1 // pred_fallthru
      _
    // Predicated region
    $region26: #{tpu_custom_call.1} parent=1 // pred_check
      _
    $region27: #{tpu_custom_call.1} parent=1 // pred_check_branch
      %41 = sbr.rel (0) target = $region29
    $region28: #{tpu_custom_call.1} parent=1 // pred_region
      _
    $region29: #{tpu_custom_call.1} parent=1 // pred_fallthru
      _
    // Predicated region
    $region30: #{tpu_custom_call.1} parent=1 // pred_check
      _
    $region31: #{tpu_custom_call.1} parent=1 // pred_check_branch
      %43 = sbr.rel (0) target = $region33
    $region32: #{tpu_custom_call.1} parent=1 // pred_region
      _
    $region33: #{tpu_custom_call.1} parent=1 // pred_fallthru
      _
    // Predicated region
    $region34: #{tpu_custom_call.1} parent=1 // pred_check
      _
    $region35: #{tpu_custom_call.1} parent=1 // pred_check_branch
      %45 = sbr.rel (0) target = $region37
    $region36: #{tpu_custom_call.1} parent=1 // pred_region
      _
    $region37: #{tpu_custom_call.1} parent=1 // pred_fallthru
      _
    // Predicated region
    $region38: #{tpu_custom_call.1} parent=1 // pred_check
      _
    $region39: #{tpu_custom_call.1} parent=1 // pred_check_branch
      %47 = sbr.rel (0) target = $region41
    $region40: #{tpu_custom_call.1} parent=1 // pred_region
      _
    $region41: #{tpu_custom_call.1} parent=1 // pred_fallthru
      _
    // Predicated region
    $region42: #{tpu_custom_call.1} parent=1 // pred_check
      _
    $region43: #{tpu_custom_call.1} parent=1 // pred_check_branch
      %49 = sbr.rel (0) target = $region45
    $region44: #{tpu_custom_call.1} parent=1 // pred_region
      _
    $region45: #{tpu_custom_call.1} parent=1 // pred_fallthru
      _
    // Predicated region
    $region46: #{tpu_custom_call.1} parent=1 // pred_check
      _
    $region47: #{tpu_custom_call.1} parent=1 // pred_check_branch
      %51 = sbr.rel (0) target = $region49
    $region48: #{tpu_custom_call.1} parent=1 // pred_region
      _
    $region49: #{tpu_custom_call.1} parent=1 // pred_fallthru
      _
    // Predicated region
    $region50: #{tpu_custom_call.1} parent=1 // pred_check
      _
    $region51: #{tpu_custom_call.1} parent=1 // pred_check_branch
      %53 = sbr.rel (0) target = $region53
    $region52: #{tpu_custom_call.1} parent=1 // pred_region
      _
    $region53: #{tpu_custom_call.1} parent=1 // pred_fallthru
      _
    // Predicated region
    $region54: #{tpu_custom_call.1} parent=1 // pred_check
      _
    $region55: #{tpu_custom_call.1} parent=1 // pred_check_branch
      %55 = sbr.rel (0) target = $region57
    $region56: #{tpu_custom_call.1} parent=1 // pred_region
      _
    $region57: #{tpu_custom_call.1} parent=1 // pred_fallthru
      _
    // Predicated region
    $region58: #{tpu_custom_call.1} parent=1 // pred_check
      _
    $region59: #{tpu_custom_call.1} parent=1 // pred_check_branch
      %57 = sbr.rel (0) target = $region61
    $region60: #{tpu_custom_call.1} parent=1 // pred_region
      _
    $region61: #{tpu_custom_call.1} parent=1 // pred_fallthru
      _
    // Predicated region
    $region62: #{tpu_custom_call.1} parent=1 // pred_check
      _
    $region63: #{tpu_custom_call.1} parent=1 // pred_check_branch
      %59 = sbr.rel (0) target = $region65
    $region64: #{tpu_custom_call.1} parent=1 // pred_region
      _
    $region65: #{tpu_custom_call.1} parent=1 // pred_fallthru
      _
    // Predicated region
    $region66: #{tpu_custom_call.1} parent=1 // pred_check
      _
    $region67: #{tpu_custom_call.1} parent=1 // pred_check_branch
      %61 = sbr.rel (0) target = $region69
    $region68: #{tpu_custom_call.1} parent=1 // pred_region
      _
    $region69: #{tpu_custom_call.1} parent=1 // pred_fallthru
      _
    // Predicated region
    $region70: #{tpu_custom_call.1} parent=1 // pred_check
      _
    $region71: #{tpu_custom_call.1} parent=1 // pred_check_branch
      %63 = sbr.rel (0) target = $region73
    $region72: #{tpu_custom_call.1} parent=1 // pred_region
      _
    $region73: #{tpu_custom_call.1} parent=1 // pred_fallthru
      _
    // Predicated region
    $region74: #{tpu_custom_call.1} parent=1 // pred_check
      _
    $region75: #{tpu_custom_call.1} parent=1 // pred_check_branch
      %65 = sbr.rel (0) target = $region77
    $region76: #{tpu_custom_call.1} parent=1 // pred_region
      _
    $region77: #{tpu_custom_call.1} parent=1 // pred_fallthru
      _
    // Predicated region
    $region78: #{tpu_custom_call.1} parent=1 // pred_check
      _
    $region79: #{tpu_custom_call.1} parent=1 // pred_check_branch
      %67 = sbr.rel (0) target = $region81
    $region80: #{tpu_custom_call.1} parent=1 // pred_region
      _
    $region81: #{tpu_custom_call.1} parent=1 // pred_fallthru
      _
    // Predicated region
    $region82: #{tpu_custom_call.1} parent=1 // pred_check
      _
    $region83: #{tpu_custom_call.1} parent=1 // pred_check_branch
      %69 = sbr.rel (0) target = $region85
    $region84: #{tpu_custom_call.1} parent=1 // pred_region
      _
    $region85: #{tpu_custom_call.1} parent=1 // pred_fallthru
      _
    // Predicated region
    $region86: #{tpu_custom_call.1} parent=1 // pred_check
      _
    $region87: #{tpu_custom_call.1} parent=1 // pred_check_branch
      %71 = sbr.rel (0) target = $region89
    $region88: #{tpu_custom_call.1} parent=1 // pred_region
      _
    $region89: #{tpu_custom_call.1} parent=1 // pred_fallthru
      _
    %v73 = vld [vmem:[%s0] sm:$0xff]
    %v74 = vld [vmem:[%s0 + $0x8] sm:$0xff]
    %v75 = vld [vmem:[%s1] sm:$0xff]
    %v76 = vld [vmem:[%s1 + $0x8] sm:$0xff]
    %v77 = vld [vmem:[%s2] sm:$0x1]
    %v78 = vld [vmem:[%s3] sm:$0x1]
    %vm79 = vcmask 261120
    %v80 = vsel %vm79, %v73, 0.0
    %81 = vadd.xlane.f32.xlu0 %v80
    %v82 = vpop.xlane.xlu0 %81
    %v83 = vsel %vm79, %v74, 0.0
    %84 = vadd.xlane.f32.xlu0 %v83
    %v85 = vpop.xlane.xlu0 %84
    %v86 = vrcp.pop 32.0
    %v87 = vmul.f32 %v82, %v86
    %v88 = vmul.f32 %v85, %v86
    %v89 = vsub.f32 %v73, %v87
    %v90 = vsub.f32 %v74, %v88
    %v91 = vmul.f32 %v89, %v89
    %v92 = vmul.f32 %v90, %v90
    %v93 = vsel %vm79, %v91, 0.0
    %94 = vadd.xlane.f32.xlu0 %v93
    %v95 = vpop.xlane.xlu0 %94
    %v96 = vsel %vm79, %v92, 0.0
    %97 = vadd.xlane.f32.xlu0 %v96
    %v98 = vpop.xlane.xlu0 %97
    %v99 = vmul.f32 %v95, %v86
    %v100 = vmul.f32 %v98, %v86
    %v101 = vadd.f32 %v99, 1e-05
    %v102 = vadd.f32 %v100, 1e-05
    %v103 = vrsqrt.pop %v101
    %v104 = vrsqrt.pop %v102
    %v105 = vmul.f32 %v89, %v103
    %v106 = vmul.f32 %v90, %v104
    %v108 = vlaneseq
    %v109 = vshrl.u32 %v108, 7
    %v110 = vsub.s32 0, %v109
    %v111 = vrot.slane %v77, %v110
    %v113 = vmul.f32 %v105, %v111
    %v114 = vmul.f32 %v106, %v111
    %v116 = vlaneseq
    %v117 = vshrl.u32 %v116, 7
    %v118 = vsub.s32 0, %v117
    %v119 = vrot.slane %v78, %v118
    %v121 = vadd.f32 %v113, %v119
    %v122 = vadd.f32 %v114, %v119
    %v123 = vpack.c.bf16 %v122, %v121
    %v124 = vld [vmem:[%s4] sm:$0xf]
    %v125 = vld [vmem:[%s4 + $0x4] sm:$0xf]
    %v126 = vld [vmem:[%s4 + $0x8] sm:$0xf]
    %v127 = vld [vmem:[%s4 + $0xc] sm:$0xf]
    %v128 = vld [vmem:[%s5] sm:$0x1]
    %v130 = vlaneseq
    %v131 = vshrl.u32 %v130, 7
    %v132 = vsub.s32 0, %v131
    %v133 = vrot.slane %v128, %v132
    %v139 = vunpack.c.l.b16 %v124
    %v140 = vunpack.c.l.b16 %v125
    %v141 = vunpack.c.l.b16 %v126
    %v142 = vunpack.c.l.b16 %v127
    %v143 = vpack.c.b16 %v140, %v139
    %v144 = vpack.c.b16 %v142, %v141
    %v148 = vsel %vm79, %v123, 0
    %150 = vmatprep.subr.bf16.mxu0 0
    %151 = vmatpush1.bf16.msra.mxu0 0
    %152 = vmatprep.subr.bf16.mxu0 0
    %153 = vmatpush1.bf16.msra.mxu0 0
    %154 = vmatprep.subr.bf16.mxu0 0
    %155 = vmatpush1.bf16.msra.mxu0 0
    %156 = vmatprep.subr.bf16.mxu0 0
    %157 = vmatpush1.bf16.msra.mxu0 0
    %158 = vmatprep.subr.bf16.mxu0 0
    %159 = vmatpush1.bf16.msra.mxu0 0
    %160 = vmatprep.subr.bf16.mxu0 0
    %161 = vmatpush1.bf16.msra.mxu0 0
    %162 = vmatprep.subr.bf16.mxu0 0
    %163 = vmatpush1.bf16.msra.mxu0 %v144
    %164 = vmatprep.subr.bf16.mxu0 0
    %165 = vmatpush1.bf16.msra.mxu0 %v143
    %166 = vmatprep.subr.bf16.mxu0 0
    %167 = vmatpush2.bf16.msra.mxu0 0
    %168 = vmatprep.subr.bf16.mxu0 0
    %169 = vmatpush2.bf16.msra.mxu0 0
    %170 = vmatprep.subr.bf16.mxu0 0
    %171 = vmatpush2.bf16.msra.mxu0 0
    %172 = vmatprep.subr.bf16.mxu0 0
    %173 = vmatpush2.bf16.msra.mxu0 0
    %174 = vmatprep.subr.bf16.mxu0 0
    %175 = vmatpush2.bf16.msra.mxu0 0
    %176 = vmatprep.subr.bf16.mxu0 0
    %177 = vmatpush2.bf16.msra.mxu0 0
    %178 = vmatprep.subr.bf16.mxu0 0
    %179 = vmatpush2.bf16.msra.mxu0 0
    %180 = vmatprep.subr.bf16.mxu0 0
    %181 = vmatpush2.bf16.msra.mxu0 0
    %182 = vmatprep.mubr.bf16.mxu0 0
    %183 = vmatmul.mubr.bf16.gmra.mxu0 %v148
    %v184 = vpop.f32.mrf.mxu0
    %v185 = vadd.f32 %v133, %v184
    %v186 = vpop.f32.mrf.mxu0
    %v187 = vpop.f32.mrf.mxu0
    %v188 = vadd.f32 %v133, %v187
    %v189 = vpop.f32.mrf.mxu0
    %190 = vdwg.mxu0
    %v191 = vld [vmem:[%s6] sm:$0xf]
    %v192 = vld [vmem:[%s6 + $0x4] sm:$0xf]
    %v193 = vld [vmem:[%s6 + $0x8] sm:$0xf]
    %v194 = vld [vmem:[%s6 + $0xc] sm:$0xf]
    %v195 = vld [vmem:[%s7] sm:$0x1]
    %v197 = vlaneseq
    %v198 = vshrl.u32 %v197, 7
    %v199 = vsub.s32 0, %v198
    %v200 = vrot.slane %v195, %v199
    %v206 = vunpack.c.l.b16 %v191
    %v207 = vunpack.c.l.b16 %v192
    %v208 = vunpack.c.l.b16 %v193
    %v209 = vunpack.c.l.b16 %v194
    %v210 = vpack.c.b16 %v207, %v206
    %v211 = vpack.c.b16 %v209, %v208
    %214 = vmatprep.subr.bf16.mxu0 0
    %215 = vmatpush1.bf16.msra.mxu0 0
    %216 = vmatprep.subr.bf16.mxu0 0
    %217 = vmatpush1.bf16.msra.mxu0 0
    %218 = vmatprep.subr.bf16.mxu0 0
    %219 = vmatpush1.bf16.msra.mxu0 0
    %220 = vmatprep.subr.bf16.mxu0 0
    %221 = vmatpush1.bf16.msra.mxu0 0
    %222 = vmatprep.subr.bf16.mxu0 0
    %223 = vmatpush1.bf16.msra.mxu0 0
    %224 = vmatprep.subr.bf16.mxu0 0
    %225 = vmatpush1.bf16.msra.mxu0 0
    %226 = vmatprep.subr.bf16.mxu0 0
    %227 = vmatpush1.bf16.msra.mxu0 %v211
    %228 = vmatprep.subr.bf16.mxu0 0
    %229 = vmatpush1.bf16.msra.mxu0 %v210
    %230 = vmatprep.subr.bf16.mxu0 0
    %231 = vmatpush2.bf16.msra.mxu0 0
    %232 = vmatprep.subr.bf16.mxu0 0
    %233 = vmatpush2.bf16.msra.mxu0 0
    %234 = vmatprep.subr.bf16.mxu0 0
    %235 = vmatpush2.bf16.msra.mxu0 0
    %236 = vmatprep.subr.bf16.mxu0 0
    %237 = vmatpush2.bf16.msra.mxu0 0
    %238 = vmatprep.subr.bf16.mxu0 0
    %239 = vmatpush2.bf16.msra.mxu0 0
    %240 = vmatprep.subr.bf16.mxu0 0
    %241 = vmatpush2.bf16.msra.mxu0 0
    %242 = vmatprep.subr.bf16.mxu0 0
    %243 = vmatpush2.bf16.msra.mxu0 0
    %244 = vmatprep.subr.bf16.mxu0 0
    %245 = vmatpush2.bf16.msra.mxu0 0
    %246 = vmatprep.mubr.bf16.mxu0 0
    %247 = vmatmul.mubr.bf16.gmra.mxu0 %v148
    %v248 = vpop.f32.mrf.mxu0
    %v249 = vadd.f32 %v200, %v248
    %v250 = vpop.f32.mrf.mxu0
    %v251 = vpop.f32.mrf.mxu0
    %v252 = vadd.f32 %v200, %v251
    %v253 = vpop.f32.mrf.mxu0
    %254 = vdwg.mxu0
    %v255 = vld [vmem:[%s8] sm:$0xf]
    %v256 = vld [vmem:[%s8 + $0x4] sm:$0xf]
    %v257 = vld [vmem:[%s8 + $0x8] sm:$0xf]
    %v258 = vld [vmem:[%s8 + $0xc] sm:$0xf]
    %v259 = vld [vmem:[%s9] sm:$0x1]
    %v261 = vlaneseq
    %v262 = vshrl.u32 %v261, 7
    %v263 = vsub.s32 0, %v262
    %v264 = vrot.slane %v259, %v263
    %v270 = vunpack.c.l.b16 %v255
    %v271 = vunpack.c.l.b16 %v256
    %v272 = vunpack.c.l.b16 %v257
    %v273 = vunpack.c.l.b16 %v258
    %v274 = vpack.c.b16 %v271, %v270
    %v275 = vpack.c.b16 %v273, %v272
    %278 = vmatprep.subr.bf16.mxu0 0
    %279 = vmatpush1.bf16.msra.mxu0 0
    %280 = vmatprep.subr.bf16.mxu0 0
    %281 = vmatpush1.bf16.msra.mxu0 0
    %282 = vmatprep.subr.bf16.mxu0 0
    %283 = vmatpush1.bf16.msra.mxu0 0
    %284 = vmatprep.subr.bf16.mxu0 0
    %285 = vmatpush1.bf16.msra.mxu0 0
    %286 = vmatprep.subr.bf16.mxu0 0
    %287 = vmatpush1.bf16.msra.mxu0 0
    %288 = vmatprep.subr.bf16.mxu0 0
    %289 = vmatpush1.bf16.msra.mxu0 0
    %290 = vmatprep.subr.bf16.mxu0 0
    %291 = vmatpush1.bf16.msra.mxu0 %v275
    %292 = vmatprep.subr.bf16.mxu0 0
    %293 = vmatpush1.bf16.msra.mxu0 %v274
    %294 = vmatprep.subr.bf16.mxu0 0
    %295 = vmatpush2.bf16.msra.mxu0 0
    %296 = vmatprep.subr.bf16.mxu0 0
    %297 = vmatpush2.bf16.msra.mxu0 0
    %298 = vmatprep.subr.bf16.mxu0 0
    %299 = vmatpush2.bf16.msra.mxu0 0
    %300 = vmatprep.subr.bf16.mxu0 0
    %301 = vmatpush2.bf16.msra.mxu0 0
    %302 = vmatprep.subr.bf16.mxu0 0
    %303 = vmatpush2.bf16.msra.mxu0 0
    %304 = vmatprep.subr.bf16.mxu0 0
    %305 = vmatpush2.bf16.msra.mxu0 0
    %306 = vmatprep.subr.bf16.mxu0 0
    %307 = vmatpush2.bf16.msra.mxu0 0
    %308 = vmatprep.subr.bf16.mxu0 0
    %309 = vmatpush2.bf16.msra.mxu0 0
    %310 = vmatprep.mubr.bf16.mxu0 0
    %311 = vmatmul.mubr.bf16.gmra.mxu0 %v148
    %v312 = vpop.f32.mrf.mxu0
    %v313 = vadd.f32 %v264, %v312
    %v314 = vpop.f32.mrf.mxu0
    %v315 = vpop.f32.mrf.mxu0
    %v316 = vadd.f32 %v264, %v315
    %v317 = vpop.f32.mrf.mxu0
    %318 = vdwg.mxu0
    %v319 = vpack.c.bf16 %v188, %v185
    %320 = vxpose.xlu0.b32.start [1/16] %v249, 128
    %321 = vxpose.xlu0.b32.cont [2/16] %v252, 128
    %322 = vxpose.xlu0.b32.cont [3/16] 0.0, 128
    %323 = vxpose.xlu0.b32.cont [4/16] 0.0, 128
    %324 = vxpose.xlu0.b32.cont [5/16] 0.0, 128
    %325 = vxpose.xlu0.b32.cont [6/16] 0.0, 128
    %326 = vxpose.xlu0.b32.cont [7/16] 0.0, 128
    %327 = vxpose.xlu0.b32.cont [8/16] 0.0, 128
    %328 = vxpose.xlu0.b32.cont [9/16] 0.0, 128
    %329 = vxpose.xlu0.b32.cont [10/16] 0.0, 128
    %330 = vxpose.xlu0.b32.cont [11/16] 0.0, 128
    %331 = vxpose.xlu0.b32.cont [12/16] 0.0, 128
    %332 = vxpose.xlu0.b32.cont [13/16] 0.0, 128
    %333 = vxpose.xlu0.b32.cont [14/16] 0.0, 128
    %334 = vxpose.xlu0.b32.cont [15/16] 0.0, 128
    %335 = vxpose.xlu0.b32.end [16/16] 0.0, 128
    %v336 = vpop.trf.xlu0
    %v337 = vpop.trf.xlu0
    %v338 = vpop.trf.xlu0
    %v339 = vpop.trf.xlu0
    %v340 = vpop.trf.xlu0
    %v341 = vpop.trf.xlu0
    %v342 = vpop.trf.xlu0
    %v343 = vpop.trf.xlu0
    %v344 = vpop.trf.xlu0
    %v345 = vpop.trf.xlu0
    %v346 = vpop.trf.xlu0
    %v347 = vpop.trf.xlu0
    %v348 = vpop.trf.xlu0
    %v349 = vpop.trf.xlu0
    %v350 = vpop.trf.xlu0
    %v351 = vpop.trf.xlu0
    %v352 = vpack.c.bf16 %v336, %v336
    %vm353 = vcmask 64512
    %v355 = vsel %vm353, %v319, 0
    %vm357 = vcmask 1043456
    %v359 = vsel %vm357, %v352, 0
    %361 = vmatprep.subr.bf16.mxu0 0
    %362 = vmatpush1.bf16.msra.mxu0 0
    %363 = vmatprep.subr.bf16.mxu0 0
    %364 = vmatpush1.bf16.msra.mxu0 0
    %365 = vmatprep.subr.bf16.mxu0 0
    %366 = vmatpush1.bf16.msra.mxu0 0
    %367 = vmatprep.subr.bf16.mxu0 0
    %368 = vmatpush1.bf16.msra.mxu0 0
    %369 = vmatprep.subr.bf16.mxu0 0
    %370 = vmatpush1.bf16.msra.mxu0 0
    %371 = vmatprep.subr.bf16.mxu0 0
    %372 = vmatpush1.bf16.msra.mxu0 0
    %373 = vmatprep.subr.bf16.mxu0 0
    %374 = vmatpush1.bf16.msra.mxu0 0
    %375 = vmatprep.subr.bf16.mxu0 0
    %376 = vmatpush1.bf16.msra.mxu0 %v359
    %377 = vmatprep.subr.bf16.mxu0 0
    %378 = vmatpush2.bf16.msra.mxu0 0
    %379 = vmatprep.subr.bf16.mxu0 0
    %380 = vmatpush2.bf16.msra.mxu0 0
    %381 = vmatprep.subr.bf16.mxu0 0
    %382 = vmatpush2.bf16.msra.mxu0 0
    %383 = vmatprep.subr.bf16.mxu0 0
    %384 = vmatpush2.bf16.msra.mxu0 0
    %385 = vmatprep.subr.bf16.mxu0 0
    %386 = vmatpush2.bf16.msra.mxu0 0
    %387 = vmatprep.subr.bf16.mxu0 0
    %388 = vmatpush2.bf16.msra.mxu0 0
    %389 = vmatprep.subr.bf16.mxu0 0
    %390 = vmatpush2.bf16.msra.mxu0 0
    %391 = vmatprep.subr.bf16.mxu0 0
    %392 = vmatpush2.bf16.msra.mxu0 0
    %393 = vmatprep.mubr.bf16.mxu0 0
    %394 = vmatmul.mubr.bf16.gmra.mxu0 %v355
    %v395 = vpop.f32.mrf.mxu0
    %v396 = vadd.f32 0.0, %v395
    %v397 = vpop.f32.mrf.mxu0
    %v398 = vpop.f32.mrf.mxu0
    %v399 = vadd.f32 0.0, %v398
    %v400 = vpop.f32.mrf.mxu0
    %401 = vdwg.mxu0
    %v402 = vmul.f32 %v396, 0.35355338
    %v403 = vmul.f32 %v399, 0.35355338
    %v404 = vadd.f32 %v402, %v75
    %v405 = vadd.f32 %v403, %v76
    %vm406 = vcmask 130048
    %v407 = vsel %vm406, %v404, -inf
    %408 = vmax.xlane.f32.xlu0 %v407
    %v409 = vpop.xlane.xlu0 %408
    %v410 = vsel %vm406, %v405, -inf
    %411 = vmax.xlane.f32.xlu0 %v410
    %v412 = vpop.xlane.xlu0 %411
    %v413 = vsub.f32 %v404, %v409
    %v414 = vsub.f32 %v405, %v412
    %v415 = vmul.f32 %v413, 1.442695
    %v416 = vpow.pop %v415
    %v417 = vmul.f32 %v414, 1.442695
    %v418 = vpow.pop %v417
    %v419 = vsel %vm406, %v416, 0.0
    %420 = vadd.xlane.f32.xlu0 %v419
    %v421 = vpop.xlane.xlu0 %420
    %v422 = vsel %vm406, %v418, 0.0
    %423 = vadd.xlane.f32.xlu0 %v422
    %v424 = vpop.xlane.xlu0 %423
    %v425 = vrcp.pop %v421
    %v426 = vrcp.pop %v424
    %v427 = vmul.f32 %v416, %v425
    %v428 = vmul.f32 %v418, %v426
    %v429 = vpack.c.bf16 %v428, %v427
    %v430 = vpack.c.bf16 %v316, %v313
    %v432 = vsel %vm406, %v429, 0
    %434 = vmatprep.subr.bf16.mxu0 0
    %435 = vmatpush1.bf16.msra.mxu0 0
    %436 = vmatprep.subr.bf16.mxu0 0
    %437 = vmatpush1.bf16.msra.mxu0 0
    %438 = vmatprep.subr.bf16.mxu0 0
    %439 = vmatpush1.bf16.msra.mxu0 0
    %440 = vmatprep.subr.bf16.mxu0 0
    %441 = vmatpush1.bf16.msra.mxu0 0
    %442 = vmatprep.subr.bf16.mxu0 0
    %443 = vmatpush1.bf16.msra.mxu0 0
    %444 = vmatprep.subr.bf16.mxu0 0
    %445 = vmatpush1.bf16.msra.mxu0 0
    %446 = vmatprep.subr.bf16.mxu0 0
    %447 = vmatpush1.bf16.msra.mxu0 0
    %448 = vmatprep.subr.bf16.mxu0 0
    %449 = vmatpush1.bf16.msra.mxu0 %v430
    %450 = vmatprep.subr.bf16.mxu0 0
    %451 = vmatpush2.bf16.msra.mxu0 0
    %452 = vmatprep.subr.bf16.mxu0 0
    %453 = vmatpush2.bf16.msra.mxu0 0
    %454 = vmatprep.subr.bf16.mxu0 0
    %455 = vmatpush2.bf16.msra.mxu0 0
    %456 = vmatprep.subr.bf16.mxu0 0
    %457 = vmatpush2.bf16.msra.mxu0 0
    %458 = vmatprep.subr.bf16.mxu0 0
    %459 = vmatpush2.bf16.msra.mxu0 0
    %460 = vmatprep.subr.bf16.mxu0 0
    %461 = vmatpush2.bf16.msra.mxu0 0
    %462 = vmatprep.subr.bf16.mxu0 0
    %463 = vmatpush2.bf16.msra.mxu0 0
    %464 = vmatprep.subr.bf16.mxu0 0
    %465 = vmatpush2.bf16.msra.mxu0 0
    %466 = vmatprep.mubr.bf16.mxu0 0
    %467 = vmatmul.mubr.bf16.gmra.mxu0 %v432
    %v468 = vpop.f32.mrf.mxu0
    %v469 = vadd.f32 0.0, %v468
    %v470 = vpop.f32.mrf.mxu0
    %v471 = vpop.f32.mrf.mxu0
    %v472 = vadd.f32 0.0, %v471
    %v473 = vpop.f32.mrf.mxu0
    %474 = vdwg.mxu0
    %v475 = vpack.c.bf16 %v472, %v469
    %v476 = vld [vmem:[%s10] sm:$0xf]
    %s477 = scalar_lea.vmem %s4, 16
    %v478 = vld [vmem:[%s477] sm:$0xf]
    %v479 = vld [vmem:[%s477 + $0x4] sm:$0xf]
    %v480 = vld [vmem:[%s477 + $0x8] sm:$0xf]
    %v481 = vld [vmem:[%s477 + $0xc] sm:$0xf]
    %s482 = scalar_lea.vmem %s5, 1
    %v483 = vld [vmem:[%s482] sm:$0x1]
    %v485 = vlaneseq
    %v486 = vshrl.u32 %v485, 7
    %v487 = vsub.s32 0, %v486
    %v488 = vrot.slane %v483, %v487
    %v494 = vunpack.c.l.b16 %v478
    %v495 = vunpack.c.l.b16 %v479
    %v496 = vunpack.c.l.b16 %v480
    %v497 = vunpack.c.l.b16 %v481
    %v498 = vpack.c.b16 %v495, %v494
    %v499 = vpack.c.b16 %v497, %v496
    %502 = vmatprep.subr.bf16.mxu0 0
    %503 = vmatpush1.bf16.msra.mxu0 0
    %504 = vmatprep.subr.bf16.mxu0 0
    %505 = vmatpush1.bf16.msra.mxu0 0
    %506 = vmatprep.subr.bf16.mxu0 0
    %507 = vmatpush1.bf16.msra.mxu0 0
    %508 = vmatprep.subr.bf16.mxu0 0
    %509 = vmatpush1.bf16.msra.mxu0 0
    %510 = vmatprep.subr.bf16.mxu0 0
    %511 = vmatpush1.bf16.msra.mxu0 0
    %512 = vmatprep.subr.bf16.mxu0 0
    %513 = vmatpush1.bf16.msra.mxu0 0
    %514 = vmatprep.subr.bf16.mxu0 0
    %515 = vmatpush1.bf16.msra.mxu0 %v499
    %516 = vmatprep.subr.bf16.mxu0 0
    %517 = vmatpush1.bf16.msra.mxu0 %v498
    %518 = vmatprep.subr.bf16.mxu0 0
    %519 = vmatpush2.bf16.msra.mxu0 0
    %520 = vmatprep.subr.bf16.mxu0 0
    %521 = vmatpush2.bf16.msra.mxu0 0
    %522 = vmatprep.subr.bf16.mxu0 0
    %523 = vmatpush2.bf16.msra.mxu0 0
    %524 = vmatprep.subr.bf16.mxu0 0
    %525 = vmatpush2.bf16.msra.mxu0 0
    %526 = vmatprep.subr.bf16.mxu0 0
    %527 = vmatpush2.bf16.msra.mxu0 0
    %528 = vmatprep.subr.bf16.mxu0 0
    %529 = vmatpush2.bf16.msra.mxu0 0
    %530 = vmatprep.subr.bf16.mxu0 0
    %531 = vmatpush2.bf16.msra.mxu0 0
    %532 = vmatprep.subr.bf16.mxu0 0
    %533 = vmatpush2.bf16.msra.mxu0 0
    %534 = vmatprep.mubr.bf16.mxu0 0
    %535 = vmatmul.mubr.bf16.gmra.mxu0 %v148
    %v536 = vpop.f32.mrf.mxu0
    %v537 = vadd.f32 %v488, %v536
    %v538 = vpop.f32.mrf.mxu0
    %v539 = vpop.f32.mrf.mxu0
    %v540 = vadd.f32 %v488, %v539
    %v541 = vpop.f32.mrf.mxu0
    %542 = vdwg.mxu0
    %s543 = scalar_lea.vmem %s6, 16
    %v544 = vld [vmem:[%s543] sm:$0xf]
    %v545 = vld [vmem:[%s543 + $0x4] sm:$0xf]
    %v546 = vld [vmem:[%s543 + $0x8] sm:$0xf]
    %v547 = vld [vmem:[%s543 + $0xc] sm:$0xf]
    %s548 = scalar_lea.vmem %s7, 1
    %v549 = vld [vmem:[%s548] sm:$0x1]
    %v551 = vlaneseq
    %v552 = vshrl.u32 %v551, 7
    %v553 = vsub.s32 0, %v552
    %v554 = vrot.slane %v549, %v553
    %v560 = vunpack.c.l.b16 %v544
    %v561 = vunpack.c.l.b16 %v545
    %v562 = vunpack.c.l.b16 %v546
    %v563 = vunpack.c.l.b16 %v547
    %v564 = vpack.c.b16 %v561, %v560
    %v565 = vpack.c.b16 %v563, %v562
    %568 = vmatprep.subr.bf16.mxu0 0
    %569 = vmatpush1.bf16.msra.mxu0 0
    %570 = vmatprep.subr.bf16.mxu0 0
    %571 = vmatpush1.bf16.msra.mxu0 0
    %572 = vmatprep.subr.bf16.mxu0 0
    %573 = vmatpush1.bf16.msra.mxu0 0
    %574 = vmatprep.subr.bf16.mxu0 0
    %575 = vmatpush1.bf16.msra.mxu0 0
    %576 = vmatprep.subr.bf16.mxu0 0
    %577 = vmatpush1.bf16.msra.mxu0 0
    %578 = vmatprep.subr.bf16.mxu0 0
    %579 = vmatpush1.bf16.msra.mxu0 0
    %580 = vmatprep.subr.bf16.mxu0 0
    %581 = vmatpush1.bf16.msra.mxu0 %v565
    %582 = vmatprep.subr.bf16.mxu0 0
    %583 = vmatpush1.bf16.msra.mxu0 %v564
    %584 = vmatprep.subr.bf16.mxu0 0
    %585 = vmatpush2.bf16.msra.mxu0 0
    %586 = vmatprep.subr.bf16.mxu0 0
    %587 = vmatpush2.bf16.msra.mxu0 0
    %588 = vmatprep.subr.bf16.mxu0 0
    %589 = vmatpush2.bf16.msra.mxu0 0
    %590 = vmatprep.subr.bf16.mxu0 0
    %591 = vmatpush2.bf16.msra.mxu0 0
    %592 = vmatprep.subr.bf16.mxu0 0
    %593 = vmatpush2.bf16.msra.mxu0 0
    %594 = vmatprep.subr.bf16.mxu0 0
    %595 = vmatpush2.bf16.msra.mxu0 0
    %596 = vmatprep.subr.bf16.mxu0 0
    %597 = vmatpush2.bf16.msra.mxu0 0
    %598 = vmatprep.subr.bf16.mxu0 0
    %599 = vmatpush2.bf16.msra.mxu0 0
    %600 = vmatprep.mubr.bf16.mxu0 0
    %601 = vmatmul.mubr.bf16.gmra.mxu0 %v148
    %v602 = vpop.f32.mrf.mxu0
    %v603 = vadd.f32 %v554, %v602
    %v604 = vpop.f32.mrf.mxu0
    %v605 = vpop.f32.mrf.mxu0
    %v606 = vadd.f32 %v554, %v605
    %v607 = vpop.f32.mrf.mxu0
    %608 = vdwg.mxu0
    %s609 = scalar_lea.vmem %s8, 16
    %v610 = vld [vmem:[%s609] sm:$0xf]
    %v611 = vld [vmem:[%s609 + $0x4] sm:$0xf]
    %v612 = vld [vmem:[%s609 + $0x8] sm:$0xf]
    %v613 = vld [vmem:[%s609 + $0xc] sm:$0xf]
    %s614 = scalar_lea.vmem %s9, 1
    %v615 = vld [vmem:[%s614] sm:$0x1]
    %v617 = vlaneseq
    %v618 = vshrl.u32 %v617, 7
    %v619 = vsub.s32 0, %v618
    %v620 = vrot.slane %v615, %v619
    %v626 = vunpack.c.l.b16 %v610
    %v627 = vunpack.c.l.b16 %v611
    %v628 = vunpack.c.l.b16 %v612
    %v629 = vunpack.c.l.b16 %v613
    %v630 = vpack.c.b16 %v627, %v626
    %v631 = vpack.c.b16 %v629, %v628
    %634 = vmatprep.subr.bf16.mxu0 0
    %635 = vmatpush1.bf16.msra.mxu0 0
    %636 = vmatprep.subr.bf16.mxu0 0
    %637 = vmatpush1.bf16.msra.mxu0 0
    %638 = vmatprep.subr.bf16.mxu0 0
    %639 = vmatpush1.bf16.msra.mxu0 0
    %640 = vmatprep.subr.bf16.mxu0 0
    %641 = vmatpush1.bf16.msra.mxu0 0
    %642 = vmatprep.subr.bf16.mxu0 0
    %643 = vmatpush1.bf16.msra.mxu0 0
    %644 = vmatprep.subr.bf16.mxu0 0
    %645 = vmatpush1.bf16.msra.mxu0 0
    %646 = vmatprep.subr.bf16.mxu0 0
    %647 = vmatpush1.bf16.msra.mxu0 %v631
    %648 = vmatprep.subr.bf16.mxu0 0
    %649 = vmatpush1.bf16.msra.mxu0 %v630
    %650 = vmatprep.subr.bf16.mxu0 0
    %651 = vmatpush2.bf16.msra.mxu0 0
    %652 = vmatprep.subr.bf16.mxu0 0
    %653 = vmatpush2.bf16.msra.mxu0 0
    %654 = vmatprep.subr.bf16.mxu0 0
    %655 = vmatpush2.bf16.msra.mxu0 0
    %656 = vmatprep.subr.bf16.mxu0 0
    %657 = vmatpush2.bf16.msra.mxu0 0
    %658 = vmatprep.subr.bf16.mxu0 0
    %659 = vmatpush2.bf16.msra.mxu0 0
    %660 = vmatprep.subr.bf16.mxu0 0
    %661 = vmatpush2.bf16.msra.mxu0 0
    %662 = vmatprep.subr.bf16.mxu0 0
    %663 = vmatpush2.bf16.msra.mxu0 0
    %664 = vmatprep.subr.bf16.mxu0 0
    %665 = vmatpush2.bf16.msra.mxu0 0
    %666 = vmatprep.mubr.bf16.mxu0 0
    %667 = vmatmul.mubr.bf16.gmra.mxu0 %v148
    %v668 = vpop.f32.mrf.mxu0
    %v669 = vadd.f32 %v620, %v668
    %v670 = vpop.f32.mrf.mxu0
    %v671 = vpop.f32.mrf.mxu0
    %v672 = vadd.f32 %v620, %v671
    %v673 = vpop.f32.mrf.mxu0
    %674 = vdwg.mxu0
    %v675 = vpack.c.bf16 %v540, %v537
    %676 = vxpose.xlu0.b32.start [1/16] %v603, 128
    %677 = vxpose.xlu0.b32.cont [2/16] %v606, 128
    %678 = vxpose.xlu0.b32.cont [3/16] 0.0, 128
    %679 = vxpose.xlu0.b32.cont [4/16] 0.0, 128
    %680 = vxpose.xlu0.b32.cont [5/16] 0.0, 128
    %681 = vxpose.xlu0.b32.cont [6/16] 0.0, 128
    %682 = vxpose.xlu0.b32.cont [7/16] 0.0, 128
    %683 = vxpose.xlu0.b32.cont [8/16] 0.0, 128
    %684 = vxpose.xlu0.b32.cont [9/16] 0.0, 128
    %685 = vxpose.xlu0.b32.cont [10/16] 0.0, 128
    %686 = vxpose.xlu0.b32.cont [11/16] 0.0, 128
    %687 = vxpose.xlu0.b32.cont [12/16] 0.0, 128
    %688 = vxpose.xlu0.b32.cont [13/16] 0.0, 128
    %689 = vxpose.xlu0.b32.cont [14/16] 0.0, 128
    %690 = vxpose.xlu0.b32.cont [15/16] 0.0, 128
    %691 = vxpose.xlu0.b32.end [16/16] 0.0, 128
    %v692 = vpop.trf.xlu0
    %v693 = vpop.trf.xlu0
    %v694 = vpop.trf.xlu0
    %v695 = vpop.trf.xlu0
    %v696 = vpop.trf.xlu0
    %v697 = vpop.trf.xlu0
    %v698 = vpop.trf.xlu0
    %v699 = vpop.trf.xlu0
    %v700 = vpop.trf.xlu0
    %v701 = vpop.trf.xlu0
    %v702 = vpop.trf.xlu0
    %v703 = vpop.trf.xlu0
    %v704 = vpop.trf.xlu0
    %v705 = vpop.trf.xlu0
    %v706 = vpop.trf.xlu0
    %v707 = vpop.trf.xlu0
    %v708 = vpack.c.bf16 %v692, %v692
    %v710 = vsel %vm353, %v675, 0
    %v713 = vsel %vm357, %v708, 0
    %715 = vmatprep.subr.bf16.mxu0 0
    %716 = vmatpush1.bf16.msra.mxu0 0
    %717 = vmatprep.subr.bf16.mxu0 0
    %718 = vmatpush1.bf16.msra.mxu0 0
    %719 = vmatprep.subr.bf16.mxu0 0
    %720 = vmatpush1.bf16.msra.mxu0 0
    %721 = vmatprep.subr.bf16.mxu0 0
    %722 = vmatpush1.bf16.msra.mxu0 0
    %723 = vmatprep.subr.bf16.mxu0 0
    %724 = vmatpush1.bf16.msra.mxu0 0
    %725 = vmatprep.subr.bf16.mxu0 0
    %726 = vmatpush1.bf16.msra.mxu0 0
    %727 = vmatprep.subr.bf16.mxu0 0
    %728 = vmatpush1.bf16.msra.mxu0 0
    %729 = vmatprep.subr.bf16.mxu0 0
    %730 = vmatpush1.bf16.msra.mxu0 %v713
    %731 = vmatprep.subr.bf16.mxu0 0
    %732 = vmatpush2.bf16.msra.mxu0 0
    %733 = vmatprep.subr.bf16.mxu0 0
    %734 = vmatpush2.bf16.msra.mxu0 0
    %735 = vmatprep.subr.bf16.mxu0 0
    %736 = vmatpush2.bf16.msra.mxu0 0
    %737 = vmatprep.subr.bf16.mxu0 0
    %738 = vmatpush2.bf16.msra.mxu0 0
    %739 = vmatprep.subr.bf16.mxu0 0
    %740 = vmatpush2.bf16.msra.mxu0 0
    %741 = vmatprep.subr.bf16.mxu0 0
    %742 = vmatpush2.bf16.msra.mxu0 0
    %743 = vmatprep.subr.bf16.mxu0 0
    %744 = vmatpush2.bf16.msra.mxu0 0
    %745 = vmatprep.subr.bf16.mxu0 0
    %746 = vmatpush2.bf16.msra.mxu0 0
    %747 = vmatprep.mubr.bf16.mxu0 0
    %748 = vmatmul.mubr.bf16.gmra.mxu0 %v710
    %v749 = vpop.f32.mrf.mxu0
    %v750 = vadd.f32 0.0, %v749
    %v751 = vpop.f32.mrf.mxu0
    %v752 = vpop.f32.mrf.mxu0
    %v753 = vadd.f32 0.0, %v752
    %v754 = vpop.f32.mrf.mxu0
    %755 = vdwg.mxu0
    %v756 = vmul.f32 %v750, 0.35355338
    %v757 = vmul.f32 %v753, 0.35355338
    %v758 = vadd.f32 %v756, %v75
    %v759 = vadd.f32 %v757, %v76
    %v760 = vsel %vm406, %v758, -inf
    %761 = vmax.xlane.f32.xlu0 %v760
    %v762 = vpop.xlane.xlu0 %761
    %v763 = vsel %vm406, %v759, -inf
    %764 = vmax.xlane.f32.xlu0 %v763
    %v765 = vpop.xlane.xlu0 %764
    %v766 = vsub.f32 %v758, %v762
    %v767 = vsub.f32 %v759, %v765
    %v768 = vmul.f32 %v766, 1.442695
    %v769 = vpow.pop %v768
    %v770 = vmul.f32 %v767, 1.442695
    %v771 = vpow.pop %v770
    %v772 = vsel %vm406, %v769, 0.0
    %773 = vadd.xlane.f32.xlu0 %v772
    %v774 = vpop.xlane.xlu0 %773
    %v775 = vsel %vm406, %v771, 0.0
    %776 = vadd.xlane.f32.xlu0 %v775
    %v777 = vpop.xlane.xlu0 %776
    %v778 = vrcp.pop %v774
    %v779 = vrcp.pop %v777
    %v780 = vmul.f32 %v769, %v778
    %v781 = vmul.f32 %v771, %v779
    %v782 = vpack.c.bf16 %v781, %v780
    %v783 = vpack.c.bf16 %v672, %v669
    %v785 = vsel %vm406, %v782, 0
    %787 = vmatprep.subr.bf16.mxu0 0
    %788 = vmatpush1.bf16.msra.mxu0 0
    %789 = vmatprep.subr.bf16.mxu0 0
    %790 = vmatpush1.bf16.msra.mxu0 0
    %791 = vmatprep.subr.bf16.mxu0 0
    %792 = vmatpush1.bf16.msra.mxu0 0
    %793 = vmatprep.subr.bf16.mxu0 0
    %794 = vmatpush1.bf16.msra.mxu0 0
    %795 = vmatprep.subr.bf16.mxu0 0
    %796 = vmatpush1.bf16.msra.mxu0 0
    %797 = vmatprep.subr.bf16.mxu0 0
    %798 = vmatpush1.bf16.msra.mxu0 0
    %799 = vmatprep.subr.bf16.mxu0 0
    %800 = vmatpush1.bf16.msra.mxu0 0
    %801 = vmatprep.subr.bf16.mxu0 0
    %802 = vmatpush1.bf16.msra.mxu0 %v783
    %803 = vmatprep.subr.bf16.mxu0 0
    %804 = vmatpush2.bf16.msra.mxu0 0
    %805 = vmatprep.subr.bf16.mxu0 0
    %806 = vmatpush2.bf16.msra.mxu0 0
    %807 = vmatprep.subr.bf16.mxu0 0
    %808 = vmatpush2.bf16.msra.mxu0 0
    %809 = vmatprep.subr.bf16.mxu0 0
    %810 = vmatpush2.bf16.msra.mxu0 0
    %811 = vmatprep.subr.bf16.mxu0 0
    %812 = vmatpush2.bf16.msra.mxu0 0
    %813 = vmatprep.subr.bf16.mxu0 0
    %814 = vmatpush2.bf16.msra.mxu0 0
    %815 = vmatprep.subr.bf16.mxu0 0
    %816 = vmatpush2.bf16.msra.mxu0 0
    %817 = vmatprep.subr.bf16.mxu0 0
    %818 = vmatpush2.bf16.msra.mxu0 0
    %819 = vmatprep.mubr.bf16.mxu0 0
    %820 = vmatmul.mubr.bf16.gmra.mxu0 %v785
    %v821 = vpop.f32.mrf.mxu0
    %v822 = vadd.f32 0.0, %v821
    %v823 = vpop.f32.mrf.mxu0
    %v824 = vpop.f32.mrf.mxu0
    %v825 = vadd.f32 0.0, %v824
    %v826 = vpop.f32.mrf.mxu0
    %827 = vdwg.mxu0
    %v828 = vpack.c.bf16 %v825, %v822
    %s829 = scalar_lea.vmem %s10, 4
    %v830 = vld [vmem:[%s829] sm:$0xf]
    %v832 = vsel %vm353, %v828, 0
    %v835 = vsel %vm357, %v830, 0
    %837 = vmatprep.subr.bf16.mxu0 0
    %838 = vmatpush1.bf16.msra.mxu0 0
    %839 = vmatprep.subr.bf16.mxu0 0
    %840 = vmatpush1.bf16.msra.mxu0 0
    %841 = vmatprep.subr.bf16.mxu0 0
    %842 = vmatpush1.bf16.msra.mxu0 0
    %843 = vmatprep.subr.bf16.mxu0 0
    %844 = vmatpush1.bf16.msra.mxu0 0
    %845 = vmatprep.subr.bf16.mxu0 0
    %846 = vmatpush1.bf16.msra.mxu0 0
    %847 = vmatprep.subr.bf16.mxu0 0
    %848 = vmatpush1.bf16.msra.mxu0 0
    %849 = vmatprep.subr.bf16.mxu0 0
    %850 = vmatpush1.bf16.msra.mxu0 0
    %851 = vmatprep.subr.bf16.mxu0 0
    %852 = vmatpush1.bf16.msra.mxu0 %v835
    %853 = vmatprep.subr.bf16.mxu0 0
    %854 = vmatpush2.bf16.msra.mxu0 0
    %855 = vmatprep.subr.bf16.mxu0 0
    %856 = vmatpush2.bf16.msra.mxu0 0
    %857 = vmatprep.subr.bf16.mxu0 0
    %858 = vmatpush2.bf16.msra.mxu0 0
    %859 = vmatprep.subr.bf16.mxu0 0
    %860 = vmatpush2.bf16.msra.mxu0 0
    %861 = vmatprep.subr.bf16.mxu0 0
    %862 = vmatpush2.bf16.msra.mxu0 0
    %863 = vmatprep.subr.bf16.mxu0 0
    %864 = vmatpush2.bf16.msra.mxu0 0
    %865 = vmatprep.subr.bf16.mxu0 0
    %866 = vmatpush2.bf16.msra.mxu0 0
    %867 = vmatprep.subr.bf16.mxu0 0
    %868 = vmatpush2.bf16.msra.mxu0 0
    %869 = vmatprep.mubr.bf16.mxu0 0
    %870 = vmatmul.mubr.bf16.gmra.mxu0 %v832
    %v871 = vpop.f32.mrf.mxu0
    %v872 = vadd.f32 0.0, %v871
    %v873 = vpop.f32.mrf.mxu0
    %v874 = vpop.f32.mrf.mxu0
    %v875 = vadd.f32 0.0, %v874
    %v876 = vpop.f32.mrf.mxu0
    %877 = vdwg.mxu0
    %v879 = vsel %vm353, %v475, 0
    %v882 = vsel %vm357, %v476, 0
    %884 = vmatprep.subr.bf16.mxu0 0
    %885 = vmatpush1.bf16.msra.mxu0 0
    %886 = vmatprep.subr.bf16.mxu0 0
    %887 = vmatpush1.bf16.msra.mxu0 0
    %888 = vmatprep.subr.bf16.mxu0 0
    %889 = vmatpush1.bf16.msra.mxu0 0
    %890 = vmatprep.subr.bf16.mxu0 0
    %891 = vmatpush1.bf16.msra.mxu0 0
    %892 = vmatprep.subr.bf16.mxu0 0
    %893 = vmatpush1.bf16.msra.mxu0 0
    %894 = vmatprep.subr.bf16.mxu0 0
    %895 = vmatpush1.bf16.msra.mxu0 0
    %896 = vmatprep.subr.bf16.mxu0 0
    %897 = vmatpush1.bf16.msra.mxu0 0
    %898 = vmatprep.subr.bf16.mxu0 0
    %899 = vmatpush1.bf16.msra.mxu0 %v882
    %900 = vmatprep.subr.bf16.mxu0 0
    %901 = vmatpush2.bf16.msra.mxu0 0
    %902 = vmatprep.subr.bf16.mxu0 0
    %903 = vmatpush2.bf16.msra.mxu0 0
    %904 = vmatprep.subr.bf16.mxu0 0
    %905 = vmatpush2.bf16.msra.mxu0 0
    %906 = vmatprep.subr.bf16.mxu0 0
    %907 = vmatpush2.bf16.msra.mxu0 0
    %908 = vmatprep.subr.bf16.mxu0 0
    %909 = vmatpush2.bf16.msra.mxu0 0
    %910 = vmatprep.subr.bf16.mxu0 0
    %911 = vmatpush2.bf16.msra.mxu0 0
    %912 = vmatprep.subr.bf16.mxu0 0
    %913 = vmatpush2.bf16.msra.mxu0 0
    %914 = vmatprep.subr.bf16.mxu0 0
    %915 = vmatpush2.bf16.msra.mxu0 0
    %916 = vmatprep.mubr.bf16.mxu0 0
    %917 = vmatmul.mubr.bf16.gmra.mxu0 %v879
    %v918 = vpop.f32.mrf.mxu0
    %v919 = vadd.f32 %v872, %v918
    %v920 = vpop.f32.mrf.mxu0
    %v921 = vpop.f32.mrf.mxu0
    %v922 = vadd.f32 %v875, %v921
    %v923 = vpop.f32.mrf.mxu0
    %924 = vdwg.mxu0
    %s925 = scalar_lea.vmem %s4, 32
    %v926 = vld [vmem:[%s925] sm:$0xf]
    %v927 = vld [vmem:[%s925 + $0x4] sm:$0xf]
    %v928 = vld [vmem:[%s925 + $0x8] sm:$0xf]
    %v929 = vld [vmem:[%s925 + $0xc] sm:$0xf]
    %s930 = scalar_lea.vmem %s5, 2
    %v931 = vld [vmem:[%s930] sm:$0x1]
    %v933 = vlaneseq
    %v934 = vshrl.u32 %v933, 7
    %v935 = vsub.s32 0, %v934
    %v936 = vrot.slane %v931, %v935
    %v942 = vunpack.c.l.b16 %v926
    %v943 = vunpack.c.l.b16 %v927
    %v944 = vunpack.c.l.b16 %v928
    %v945 = vunpack.c.l.b16 %v929
    %v946 = vpack.c.b16 %v943, %v942
    %v947 = vpack.c.b16 %v945, %v944
    %950 = vmatprep.subr.bf16.mxu0 0
    %951 = vmatpush1.bf16.msra.mxu0 0
    %952 = vmatprep.subr.bf16.mxu0 0
    %953 = vmatpush1.bf16.msra.mxu0 0
    %954 = vmatprep.subr.bf16.mxu0 0
    %955 = vmatpush1.bf16.msra.mxu0 0
    %956 = vmatprep.subr.bf16.mxu0 0
    %957 = vmatpush1.bf16.msra.mxu0 0
    %958 = vmatprep.subr.bf16.mxu0 0
    %959 = vmatpush1.bf16.msra.mxu0 0
    %960 = vmatprep.subr.bf16.mxu0 0
    %961 = vmatpush1.bf16.msra.mxu0 0
    %962 = vmatprep.subr.bf16.mxu0 0
    %963 = vmatpush1.bf16.msra.mxu0 %v947
    %964 = vmatprep.subr.bf16.mxu0 0
    %965 = vmatpush1.bf16.msra.mxu0 %v946
    %966 = vmatprep.subr.bf16.mxu0 0
    %967 = vmatpush2.bf16.msra.mxu0 0
    %968 = vmatprep.subr.bf16.mxu0 0
    %969 = vmatpush2.bf16.msra.mxu0 0
    %970 = vmatprep.subr.bf16.mxu0 0
    %971 = vmatpush2.bf16.msra.mxu0 0
    %972 = vmatprep.subr.bf16.mxu0 0
    %973 = vmatpush2.bf16.msra.mxu0 0
    %974 = vmatprep.subr.bf16.mxu0 0
    %975 = vmatpush2.bf16.msra.mxu0 0
    %976 = vmatprep.subr.bf16.mxu0 0
    %977 = vmatpush2.bf16.msra.mxu0 0
    %978 = vmatprep.subr.bf16.mxu0 0
    %979 = vmatpush2.bf16.msra.mxu0 0
    %980 = vmatprep.subr.bf16.mxu0 0
    %981 = vmatpush2.bf16.msra.mxu0 0
    %982 = vmatprep.mubr.bf16.mxu0 0
    %983 = vmatmul.mubr.bf16.gmra.mxu0 %v148
    %v984 = vpop.f32.mrf.mxu0
    %v985 = vadd.f32 %v936, %v984
    %v986 = vpop.f32.mrf.mxu0
    %v987 = vpop.f32.mrf.mxu0
    %v988 = vadd.f32 %v936, %v987
    %v989 = vpop.f32.mrf.mxu0
    %990 = vdwg.mxu0
    %s991 = scalar_lea.vmem %s6, 32
    %v992 = vld [vmem:[%s991] sm:$0xf]
    %v993 = vld [vmem:[%s991 + $0x4] sm:$0xf]
    %v994 = vld [vmem:[%s991 + $0x8] sm:$0xf]
    %v995 = vld [vmem:[%s991 + $0xc] sm:$0xf]
    %s996 = scalar_lea.vmem %s7, 2
    %v997 = vld [vmem:[%s996] sm:$0x1]
    %v999 = vlaneseq
    %v1000 = vshrl.u32 %v999, 7
    %v1001 = vsub.s32 0, %v1000
    %v1002 = vrot.slane %v997, %v1001
    %v1008 = vunpack.c.l.b16 %v992
    %v1009 = vunpack.c.l.b16 %v993
    %v1010 = vunpack.c.l.b16 %v994
    %v1011 = vunpack.c.l.b16 %v995
    %v1012 = vpack.c.b16 %v1009, %v1008
    %v1013 = vpack.c.b16 %v1011, %v1010
    %1016 = vmatprep.subr.bf16.mxu0 0
    %1017 = vmatpush1.bf16.msra.mxu0 0
    %1018 = vmatprep.subr.bf16.mxu0 0
    %1019 = vmatpush1.bf16.msra.mxu0 0
    %1020 = vmatprep.subr.bf16.mxu0 0
    %1021 = vmatpush1.bf16.msra.mxu0 0
    %1022 = vmatprep.subr.bf16.mxu0 0
    %1023 = vmatpush1.bf16.msra.mxu0 0
    %1024 = vmatprep.subr.bf16.mxu0 0
    %1025 = vmatpush1.bf16.msra.mxu0 0
    %1026 = vmatprep.subr.bf16.mxu0 0
    %1027 = vmatpush1.bf16.msra.mxu0 0
    %1028 = vmatprep.subr.bf16.mxu0 0
    %1029 = vmatpush1.bf16.msra.mxu0 %v1013
    %1030 = vmatprep.subr.bf16.mxu0 0
    %1031 = vmatpush1.bf16.msra.mxu0 %v1012
    %1032 = vmatprep.subr.bf16.mxu0 0
    %1033 = vmatpush2.bf16.msra.mxu0 0
    %1034 = vmatprep.subr.bf16.mxu0 0
    %1035 = vmatpush2.bf16.msra.mxu0 0
    %1036 = vmatprep.subr.bf16.mxu0 0
    %1037 = vmatpush2.bf16.msra.mxu0 0
    %1038 = vmatprep.subr.bf16.mxu0 0
    %1039 = vmatpush2.bf16.msra.mxu0 0
    %1040 = vmatprep.subr.bf16.mxu0 0
    %1041 = vmatpush2.bf16.msra.mxu0 0
    %1042 = vmatprep.subr.bf16.mxu0 0
    %1043 = vmatpush2.bf16.msra.mxu0 0
    %1044 = vmatprep.subr.bf16.mxu0 0
    %1045 = vmatpush2.bf16.msra.mxu0 0
    %1046 = vmatprep.subr.bf16.mxu0 0
    %1047 = vmatpush2.bf16.msra.mxu0 0
    %1048 = vmatprep.mubr.bf16.mxu0 0
    %1049 = vmatmul.mubr.bf16.gmra.mxu0 %v148
    %v1050 = vpop.f32.mrf.mxu0
    %v1051 = vadd.f32 %v1002, %v1050
    %v1052 = vpop.f32.mrf.mxu0
    %v1053 = vpop.f32.mrf.mxu0
    %v1054 = vadd.f32 %v1002, %v1053
    %v1055 = vpop.f32.mrf.mxu0
    %1056 = vdwg.mxu0
    %s1057 = scalar_lea.vmem %s8, 32
    %v1058 = vld [vmem:[%s1057] sm:$0xf]
    %v1059 = vld [vmem:[%s1057 + $0x4] sm:$0xf]
    %v1060 = vld [vmem:[%s1057 + $0x8] sm:$0xf]
    %v1061 = vld [vmem:[%s1057 + $0xc] sm:$0xf]
    %s1062 = scalar_lea.vmem %s9, 2
    %v1063 = vld [vmem:[%s1062] sm:$0x1]
    %v1065 = vlaneseq
    %v1066 = vshrl.u32 %v1065, 7
    %v1067 = vsub.s32 0, %v1066
    %v1068 = vrot.slane %v1063, %v1067
    %v1074 = vunpack.c.l.b16 %v1058
    %v1075 = vunpack.c.l.b16 %v1059
    %v1076 = vunpack.c.l.b16 %v1060
    %v1077 = vunpack.c.l.b16 %v1061
    %v1078 = vpack.c.b16 %v1075, %v1074
    %v1079 = vpack.c.b16 %v1077, %v1076
    %1082 = vmatprep.subr.bf16.mxu0 0
    %1083 = vmatpush1.bf16.msra.mxu0 0
    %1084 = vmatprep.subr.bf16.mxu0 0
    %1085 = vmatpush1.bf16.msra.mxu0 0
    %1086 = vmatprep.subr.bf16.mxu0 0
    %1087 = vmatpush1.bf16.msra.mxu0 0
    %1088 = vmatprep.subr.bf16.mxu0 0
    %1089 = vmatpush1.bf16.msra.mxu0 0
    %1090 = vmatprep.subr.bf16.mxu0 0
    %1091 = vmatpush1.bf16.msra.mxu0 0
    %1092 = vmatprep.subr.bf16.mxu0 0
    %1093 = vmatpush1.bf16.msra.mxu0 0
    %1094 = vmatprep.subr.bf16.mxu0 0
    %1095 = vmatpush1.bf16.msra.mxu0 %v1079
    %1096 = vmatprep.subr.bf16.mxu0 0
    %1097 = vmatpush1.bf16.msra.mxu0 %v1078
    %1098 = vmatprep.subr.bf16.mxu0 0
    %1099 = vmatpush2.bf16.msra.mxu0 0
    %1100 = vmatprep.subr.bf16.mxu0 0
    %1101 = vmatpush2.bf16.msra.mxu0 0
    %1102 = vmatprep.subr.bf16.mxu0 0
    %1103 = vmatpush2.bf16.msra.mxu0 0
    %1104 = vmatprep.subr.bf16.mxu0 0
    %1105 = vmatpush2.bf16.msra.mxu0 0
    %1106 = vmatprep.subr.bf16.mxu0 0
    %1107 = vmatpush2.bf16.msra.mxu0 0
    %1108 = vmatprep.subr.bf16.mxu0 0
    %1109 = vmatpush2.bf16.msra.mxu0 0
    %1110 = vmatprep.subr.bf16.mxu0 0
    %1111 = vmatpush2.bf16.msra.mxu0 0
    %1112 = vmatprep.subr.bf16.mxu0 0
    %1113 = vmatpush2.bf16.msra.mxu0 0
    %1114 = vmatprep.mubr.bf16.mxu0 0
    %1115 = vmatmul.mubr.bf16.gmra.mxu0 %v148
    %v1116 = vpop.f32.mrf.mxu0
    %v1117 = vadd.f32 %v1068, %v1116
    %v1118 = vpop.f32.mrf.mxu0
    %v1119 = vpop.f32.mrf.mxu0
    %v1120 = vadd.f32 %v1068, %v1119
    %v1121 = vpop.f32.mrf.mxu0
    %1122 = vdwg.mxu0
    %v1123 = vpack.c.bf16 %v988, %v985
    %1124 = vxpose.xlu0.b32.start [1/16] %v1051, 128
    %1125 = vxpose.xlu0.b32.cont [2/16] %v1054, 128
    %1126 = vxpose.xlu0.b32.cont [3/16] 0.0, 128
    %1127 = vxpose.xlu0.b32.cont [4/16] 0.0, 128
    %1128 = vxpose.xlu0.b32.cont [5/16] 0.0, 128
    %1129 = vxpose.xlu0.b32.cont [6/16] 0.0, 128
    %1130 = vxpose.xlu0.b32.cont [7/16] 0.0, 128
    %1131 = vxpose.xlu0.b32.cont [8/16] 0.0, 128
    %1132 = vxpose.xlu0.b32.cont [9/16] 0.0, 128
    %1133 = vxpose.xlu0.b32.cont [10/16] 0.0, 128
    %1134 = vxpose.xlu0.b32.cont [11/16] 0.0, 128
    %1135 = vxpose.xlu0.b32.cont [12/16] 0.0, 128
    %1136 = vxpose.xlu0.b32.cont [13/16] 0.0, 128
    %1137 = vxpose.xlu0.b32.cont [14/16] 0.0, 128
    %1138 = vxpose.xlu0.b32.cont [15/16] 0.0, 128
    %1139 = vxpose.xlu0.b32.end [16/16] 0.0, 128
    %v1140 = vpop.trf.xlu0
    %v1141 = vpop.trf.xlu0
    %v1142 = vpop.trf.xlu0
    %v1143 = vpop.trf.xlu0
    %v1144 = vpop.trf.xlu0
    %v1145 = vpop.trf.xlu0
    %v1146 = vpop.trf.xlu0
    %v1147 = vpop.trf.xlu0
    %v1148 = vpop.trf.xlu0
    %v1149 = vpop.trf.xlu0
    %v1150 = vpop.trf.xlu0
    %v1151 = vpop.trf.xlu0
    %v1152 = vpop.trf.xlu0
    %v1153 = vpop.trf.xlu0
    %v1154 = vpop.trf.xlu0
    %v1155 = vpop.trf.xlu0
    %v1156 = vpack.c.bf16 %v1140, %v1140
    %v1158 = vsel %vm353, %v1123, 0
    %v1161 = vsel %vm357, %v1156, 0
    %1163 = vmatprep.subr.bf16.mxu0 0
    %1164 = vmatpush1.bf16.msra.mxu0 0
    %1165 = vmatprep.subr.bf16.mxu0 0
    %1166 = vmatpush1.bf16.msra.mxu0 0
    %1167 = vmatprep.subr.bf16.mxu0 0
    %1168 = vmatpush1.bf16.msra.mxu0 0
    %1169 = vmatprep.subr.bf16.mxu0 0
    %1170 = vmatpush1.bf16.msra.mxu0 0
    %1171 = vmatprep.subr.bf16.mxu0 0
    %1172 = vmatpush1.bf16.msra.mxu0 0
    %1173 = vmatprep.subr.bf16.mxu0 0
    %1174 = vmatpush1.bf16.msra.mxu0 0
    %1175 = vmatprep.subr.bf16.mxu0 0
    %1176 = vmatpush1.bf16.msra.mxu0 0
    %1177 = vmatprep.subr.bf16.mxu0 0
    %1178 = vmatpush1.bf16.msra.mxu0 %v1161
    %1179 = vmatprep.subr.bf16.mxu0 0
    %1180 = vmatpush2.bf16.msra.mxu0 0
    %1181 = vmatprep.subr.bf16.mxu0 0
    %1182 = vmatpush2.bf16.msra.mxu0 0
    %1183 = vmatprep.subr.bf16.mxu0 0
    %1184 = vmatpush2.bf16.msra.mxu0 0
    %1185 = vmatprep.subr.bf16.mxu0 0
    %1186 = vmatpush2.bf16.msra.mxu0 0
    %1187 = vmatprep.subr.bf16.mxu0 0
    %1188 = vmatpush2.bf16.msra.mxu0 0
    %1189 = vmatprep.subr.bf16.mxu0 0
    %1190 = vmatpush2.bf16.msra.mxu0 0
    %1191 = vmatprep.subr.bf16.mxu0 0
    %1192 = vmatpush2.bf16.msra.mxu0 0
    %1193 = vmatprep.subr.bf16.mxu0 0
    %1194 = vmatpush2.bf16.msra.mxu0 0
    %1195 = vmatprep.mubr.bf16.mxu0 0
    %1196 = vmatmul.mubr.bf16.gmra.mxu0 %v1158
    %v1197 = vpop.f32.mrf.mxu0
    %v1198 = vadd.f32 0.0, %v1197
    %v1199 = vpop.f32.mrf.mxu0
    %v1200 = vpop.f32.mrf.mxu0
    %v1201 = vadd.f32 0.0, %v1200
    %v1202 = vpop.f32.mrf.mxu0
    %1203 = vdwg.mxu0
    %v1204 = vmul.f32 %v1198, 0.35355338
    %v1205 = vmul.f32 %v1201, 0.35355338
    %v1206 = vadd.f32 %v1204, %v75
    %v1207 = vadd.f32 %v1205, %v76
    %v1208 = vsel %vm406, %v1206, -inf
    %1209 = vmax.xlane.f32.xlu0 %v1208
    %v1210 = vpop.xlane.xlu0 %1209
    %v1211 = vsel %vm406, %v1207, -inf
    %1212 = vmax.xlane.f32.xlu0 %v1211
    %v1213 = vpop.xlane.xlu0 %1212
    %v1214 = vsub.f32 %v1206, %v1210
    %v1215 = vsub.f32 %v1207, %v1213
    %v1216 = vmul.f32 %v1214, 1.442695
    %v1217 = vpow.pop %v1216
    %v1218 = vmul.f32 %v1215, 1.442695
    %v1219 = vpow.pop %v1218
    %v1220 = vsel %vm406, %v1217, 0.0
    %1221 = vadd.xlane.f32.xlu0 %v1220
    %v1222 = vpop.xlane.xlu0 %1221
    %v1223 = vsel %vm406, %v1219, 0.0
    %1224 = vadd.xlane.f32.xlu0 %v1223
    %v1225 = vpop.xlane.xlu0 %1224
    %v1226 = vrcp.pop %v1222
    %v1227 = vrcp.pop %v1225
    %v1228 = vmul.f32 %v1217, %v1226
    %v1229 = vmul.f32 %v1219, %v1227
    %v1230 = vpack.c.bf16 %v1229, %v1228
    %v1231 = vpack.c.bf16 %v1120, %v1117
    %v1233 = vsel %vm406, %v1230, 0
    %1235 = vmatprep.subr.bf16.mxu0 0
    %1236 = vmatpush1.bf16.msra.mxu0 0
    %1237 = vmatprep.subr.bf16.mxu0 0
    %1238 = vmatpush1.bf16.msra.mxu0 0
    %1239 = vmatprep.subr.bf16.mxu0 0
    %1240 = vmatpush1.bf16.msra.mxu0 0
    %1241 = vmatprep.subr.bf16.mxu0 0
    %1242 = vmatpush1.bf16.msra.mxu0 0
    %1243 = vmatprep.subr.bf16.mxu0 0
    %1244 = vmatpush1.bf16.msra.mxu0 0
    %1245 = vmatprep.subr.bf16.mxu0 0
    %1246 = vmatpush1.bf16.msra.mxu0 0
    %1247 = vmatprep.subr.bf16.mxu0 0
    %1248 = vmatpush1.bf16.msra.mxu0 0
    %1249 = vmatprep.subr.bf16.mxu0 0
    %1250 = vmatpush1.bf16.msra.mxu0 %v1231
    %1251 = vmatprep.subr.bf16.mxu0 0
    %1252 = vmatpush2.bf16.msra.mxu0 0
    %1253 = vmatprep.subr.bf16.mxu0 0
    %1254 = vmatpush2.bf16.msra.mxu0 0
    %1255 = vmatprep.subr.bf16.mxu0 0
    %1256 = vmatpush2.bf16.msra.mxu0 0
    %1257 = vmatprep.subr.bf16.mxu0 0
    %1258 = vmatpush2.bf16.msra.mxu0 0
    %1259 = vmatprep.subr.bf16.mxu0 0
    %1260 = vmatpush2.bf16.msra.mxu0 0
    %1261 = vmatprep.subr.bf16.mxu0 0
    %1262 = vmatpush2.bf16.msra.mxu0 0
    %1263 = vmatprep.subr.bf16.mxu0 0
    %1264 = vmatpush2.bf16.msra.mxu0 0
    %1265 = vmatprep.subr.bf16.mxu0 0
    %1266 = vmatpush2.bf16.msra.mxu0 0
    %1267 = vmatprep.mubr.bf16.mxu0 0
    %1268 = vmatmul.mubr.bf16.gmra.mxu0 %v1233
    %v1269 = vpop.f32.mrf.mxu0
    %v1270 = vadd.f32 0.0, %v1269
    %v1271 = vpop.f32.mrf.mxu0
    %v1272 = vpop.f32.mrf.mxu0
    %v1273 = vadd.f32 0.0, %v1272
    %v1274 = vpop.f32.mrf.mxu0
    %1275 = vdwg.mxu0
    %v1276 = vpack.c.bf16 %v1273, %v1270
    %s1277 = scalar_lea.vmem %s10, 8
    %v1278 = vld [vmem:[%s1277] sm:$0xf]
    %v1280 = vsel %vm353, %v1276, 0
    %v1283 = vsel %vm357, %v1278, 0
    %1285 = vmatprep.subr.bf16.mxu0 0
    %1286 = vmatpush1.bf16.msra.mxu0 0
    %1287 = vmatprep.subr.bf16.mxu0 0
    %1288 = vmatpush1.bf16.msra.mxu0 0
    %1289 = vmatprep.subr.bf16.mxu0 0
    %1290 = vmatpush1.bf16.msra.mxu0 0
    %1291 = vmatprep.subr.bf16.mxu0 0
    %1292 = vmatpush1.bf16.msra.mxu0 0
    %1293 = vmatprep.subr.bf16.mxu0 0
    %1294 = vmatpush1.bf16.msra.mxu0 0
    %1295 = vmatprep.subr.bf16.mxu0 0
    %1296 = vmatpush1.bf16.msra.mxu0 0
    %1297 = vmatprep.subr.bf16.mxu0 0
    %1298 = vmatpush1.bf16.msra.mxu0 0
    %1299 = vmatprep.subr.bf16.mxu0 0
    %1300 = vmatpush1.bf16.msra.mxu0 %v1283
    %1301 = vmatprep.subr.bf16.mxu0 0
    %1302 = vmatpush2.bf16.msra.mxu0 0
    %1303 = vmatprep.subr.bf16.mxu0 0
    %1304 = vmatpush2.bf16.msra.mxu0 0
    %1305 = vmatprep.subr.bf16.mxu0 0
    %1306 = vmatpush2.bf16.msra.mxu0 0
    %1307 = vmatprep.subr.bf16.mxu0 0
    %1308 = vmatpush2.bf16.msra.mxu0 0
    %1309 = vmatprep.subr.bf16.mxu0 0
    %1310 = vmatpush2.bf16.msra.mxu0 0
    %1311 = vmatprep.subr.bf16.mxu0 0
    %1312 = vmatpush2.bf16.msra.mxu0 0
    %1313 = vmatprep.subr.bf16.mxu0 0
    %1314 = vmatpush2.bf16.msra.mxu0 0
    %1315 = vmatprep.subr.bf16.mxu0 0
    %1316 = vmatpush2.bf16.msra.mxu0 0
    %1317 = vmatprep.mubr.bf16.mxu0 0
    %1318 = vmatmul.mubr.bf16.gmra.mxu0 %v1280
    %v1319 = vpop.f32.mrf.mxu0
    %v1320 = vadd.f32 0.0, %v1319
    %v1321 = vpop.f32.mrf.mxu0
    %v1322 = vpop.f32.mrf.mxu0
    %v1323 = vadd.f32 0.0, %v1322
    %v1324 = vpop.f32.mrf.mxu0
    %1325 = vdwg.mxu0
    %v1326 = vadd.f32 %v919, %v1320
    %v1327 = vadd.f32 %v922, %v1323
    %s1328 = scalar_lea.vmem %s4, 48
    %v1329 = vld [vmem:[%s1328] sm:$0xf]
    %v1330 = vld [vmem:[%s1328 + $0x4] sm:$0xf]
    %v1331 = vld [vmem:[%s1328 + $0x8] sm:$0xf]
    %v1332 = vld [vmem:[%s1328 + $0xc] sm:$0xf]
    %s1333 = scalar_lea.vmem %s5, 3
    %v1334 = vld [vmem:[%s1333] sm:$0x1]
    %v1336 = vlaneseq
    %v1337 = vshrl.u32 %v1336, 7
    %v1338 = vsub.s32 0, %v1337
    %v1339 = vrot.slane %v1334, %v1338
    %v1345 = vunpack.c.l.b16 %v1329
    %v1346 = vunpack.c.l.b16 %v1330
    %v1347 = vunpack.c.l.b16 %v1331
    %v1348 = vunpack.c.l.b16 %v1332
    %v1349 = vpack.c.b16 %v1346, %v1345
    %v1350 = vpack.c.b16 %v1348, %v1347
    %1353 = vmatprep.subr.bf16.mxu0 0
    %1354 = vmatpush1.bf16.msra.mxu0 0
    %1355 = vmatprep.subr.bf16.mxu0 0
    %1356 = vmatpush1.bf16.msra.mxu0 0
    %1357 = vmatprep.subr.bf16.mxu0 0
    %1358 = vmatpush1.bf16.msra.mxu0 0
    %1359 = vmatprep.subr.bf16.mxu0 0
    %1360 = vmatpush1.bf16.msra.mxu0 0
    %1361 = vmatprep.subr.bf16.mxu0 0
    %1362 = vmatpush1.bf16.msra.mxu0 0
    %1363 = vmatprep.subr.bf16.mxu0 0
    %1364 = vmatpush1.bf16.msra.mxu0 0
    %1365 = vmatprep.subr.bf16.mxu0 0
    %1366 = vmatpush1.bf16.msra.mxu0 %v1350
    %1367 = vmatprep.subr.bf16.mxu0 0
    %1368 = vmatpush1.bf16.msra.mxu0 %v1349
    %1369 = vmatprep.subr.bf16.mxu0 0
    %1370 = vmatpush2.bf16.msra.mxu0 0
    %1371 = vmatprep.subr.bf16.mxu0 0
    %1372 = vmatpush2.bf16.msra.mxu0 0
    %1373 = vmatprep.subr.bf16.mxu0 0
    %1374 = vmatpush2.bf16.msra.mxu0 0
    %1375 = vmatprep.subr.bf16.mxu0 0
    %1376 = vmatpush2.bf16.msra.mxu0 0
    %1377 = vmatprep.subr.bf16.mxu0 0
    %1378 = vmatpush2.bf16.msra.mxu0 0
    %1379 = vmatprep.subr.bf16.mxu0 0
    %1380 = vmatpush2.bf16.msra.mxu0 0
    %1381 = vmatprep.subr.bf16.mxu0 0
    %1382 = vmatpush2.bf16.msra.mxu0 0
    %1383 = vmatprep.subr.bf16.mxu0 0
    %1384 = vmatpush2.bf16.msra.mxu0 0
    %1385 = vmatprep.mubr.bf16.mxu0 0
    %1386 = vmatmul.mubr.bf16.gmra.mxu0 %v148
    %v1387 = vpop.f32.mrf.mxu0
    %v1388 = vadd.f32 %v1339, %v1387
    %v1389 = vpop.f32.mrf.mxu0
    %v1390 = vpop.f32.mrf.mxu0
    %v1391 = vadd.f32 %v1339, %v1390
    %v1392 = vpop.f32.mrf.mxu0
    %1393 = vdwg.mxu0
    %s1394 = scalar_lea.vmem %s6, 48
    %v1395 = vld [vmem:[%s1394] sm:$0xf]
    %v1396 = vld [vmem:[%s1394 + $0x4] sm:$0xf]
    %v1397 = vld [vmem:[%s1394 + $0x8] sm:$0xf]
    %v1398 = vld [vmem:[%s1394 + $0xc] sm:$0xf]
    %s1399 = scalar_lea.vmem %s7, 3
    %v1400 = vld [vmem:[%s1399] sm:$0x1]
    %v1402 = vlaneseq
    %v1403 = vshrl.u32 %v1402, 7
    %v1404 = vsub.s32 0, %v1403
    %v1405 = vrot.slane %v1400, %v1404
    %v1411 = vunpack.c.l.b16 %v1395
    %v1412 = vunpack.c.l.b16 %v1396
    %v1413 = vunpack.c.l.b16 %v1397
    %v1414 = vunpack.c.l.b16 %v1398
    %v1415 = vpack.c.b16 %v1412, %v1411
    %v1416 = vpack.c.b16 %v1414, %v1413
    %1419 = vmatprep.subr.bf16.mxu0 0
    %1420 = vmatpush1.bf16.msra.mxu0 0
    %1421 = vmatprep.subr.bf16.mxu0 0
    %1422 = vmatpush1.bf16.msra.mxu0 0
    %1423 = vmatprep.subr.bf16.mxu0 0
    %1424 = vmatpush1.bf16.msra.mxu0 0
    %1425 = vmatprep.subr.bf16.mxu0 0
    %1426 = vmatpush1.bf16.msra.mxu0 0
    %1427 = vmatprep.subr.bf16.mxu0 0
    %1428 = vmatpush1.bf16.msra.mxu0 0
    %1429 = vmatprep.subr.bf16.mxu0 0
    %1430 = vmatpush1.bf16.msra.mxu0 0
    %1431 = vmatprep.subr.bf16.mxu0 0
    %1432 = vmatpush1.bf16.msra.mxu0 %v1416
    %1433 = vmatprep.subr.bf16.mxu0 0
    %1434 = vmatpush1.bf16.msra.mxu0 %v1415
    %1435 = vmatprep.subr.bf16.mxu0 0
    %1436 = vmatpush2.bf16.msra.mxu0 0
    %1437 = vmatprep.subr.bf16.mxu0 0
    %1438 = vmatpush2.bf16.msra.mxu0 0
    %1439 = vmatprep.subr.bf16.mxu0 0
    %1440 = vmatpush2.bf16.msra.mxu0 0
    %1441 = vmatprep.subr.bf16.mxu0 0
    %1442 = vmatpush2.bf16.msra.mxu0 0
    %1443 = vmatprep.subr.bf16.mxu0 0
    %1444 = vmatpush2.bf16.msra.mxu0 0
    %1445 = vmatprep.subr.bf16.mxu0 0
    %1446 = vmatpush2.bf16.msra.mxu0 0
    %1447 = vmatprep.subr.bf16.mxu0 0
    %1448 = vmatpush2.bf16.msra.mxu0 0
    %1449 = vmatprep.subr.bf16.mxu0 0
    %1450 = vmatpush2.bf16.msra.mxu0 0
    %1451 = vmatprep.mubr.bf16.mxu0 0
    %1452 = vmatmul.mubr.bf16.gmra.mxu0 %v148
    %v1453 = vpop.f32.mrf.mxu0
    %v1454 = vadd.f32 %v1405, %v1453
    %v1455 = vpop.f32.mrf.mxu0
    %v1456 = vpop.f32.mrf.mxu0
    %v1457 = vadd.f32 %v1405, %v1456
    %v1458 = vpop.f32.mrf.mxu0
    %1459 = vdwg.mxu0
    %s1460 = scalar_lea.vmem %s8, 48
    %v1461 = vld [vmem:[%s1460] sm:$0xf]
    %v1462 = vld [vmem:[%s1460 + $0x4] sm:$0xf]
    %v1463 = vld [vmem:[%s1460 + $0x8] sm:$0xf]
    %v1464 = vld [vmem:[%s1460 + $0xc] sm:$0xf]
    %s1465 = scalar_lea.vmem %s9, 3
    %v1466 = vld [vmem:[%s1465] sm:$0x1]
    %v1468 = vlaneseq
    %v1469 = vshrl.u32 %v1468, 7
    %v1470 = vsub.s32 0, %v1469
    %v1471 = vrot.slane %v1466, %v1470
    %v1477 = vunpack.c.l.b16 %v1461
    %v1478 = vunpack.c.l.b16 %v1462
    %v1479 = vunpack.c.l.b16 %v1463
    %v1480 = vunpack.c.l.b16 %v1464
    %v1481 = vpack.c.b16 %v1478, %v1477
    %v1482 = vpack.c.b16 %v1480, %v1479
    %1485 = vmatprep.subr.bf16.mxu0 0
    %1486 = vmatpush1.bf16.msra.mxu0 0
    %1487 = vmatprep.subr.bf16.mxu0 0
    %1488 = vmatpush1.bf16.msra.mxu0 0
    %1489 = vmatprep.subr.bf16.mxu0 0
    %1490 = vmatpush1.bf16.msra.mxu0 0
    %1491 = vmatprep.subr.bf16.mxu0 0
    %1492 = vmatpush1.bf16.msra.mxu0 0
    %1493 = vmatprep.subr.bf16.mxu0 0
    %1494 = vmatpush1.bf16.msra.mxu0 0
    %1495 = vmatprep.subr.bf16.mxu0 0
    %1496 = vmatpush1.bf16.msra.mxu0 0
    %1497 = vmatprep.subr.bf16.mxu0 0
    %1498 = vmatpush1.bf16.msra.mxu0 %v1482
    %1499 = vmatprep.subr.bf16.mxu0 0
    %1500 = vmatpush1.bf16.msra.mxu0 %v1481
    %1501 = vmatprep.subr.bf16.mxu0 0
    %1502 = vmatpush2.bf16.msra.mxu0 0
    %1503 = vmatprep.subr.bf16.mxu0 0
    %1504 = vmatpush2.bf16.msra.mxu0 0
    %1505 = vmatprep.subr.bf16.mxu0 0
    %1506 = vmatpush2.bf16.msra.mxu0 0
    %1507 = vmatprep.subr.bf16.mxu0 0
    %1508 = vmatpush2.bf16.msra.mxu0 0
    %1509 = vmatprep.subr.bf16.mxu0 0
    %1510 = vmatpush2.bf16.msra.mxu0 0
    %1511 = vmatprep.subr.bf16.mxu0 0
    %1512 = vmatpush2.bf16.msra.mxu0 0
    %1513 = vmatprep.subr.bf16.mxu0 0
    %1514 = vmatpush2.bf16.msra.mxu0 0
    %1515 = vmatprep.subr.bf16.mxu0 0
    %1516 = vmatpush2.bf16.msra.mxu0 0
    %1517 = vmatprep.mubr.bf16.mxu0 0
    %1518 = vmatmul.mubr.bf16.gmra.mxu0 %v148
    %v1519 = vpop.f32.mrf.mxu0
    %v1520 = vadd.f32 %v1471, %v1519
    %v1521 = vpop.f32.mrf.mxu0
    %v1522 = vpop.f32.mrf.mxu0
    %v1523 = vadd.f32 %v1471, %v1522
    %v1524 = vpop.f32.mrf.mxu0
    %1525 = vdwg.mxu0
    %v1526 = vpack.c.bf16 %v1391, %v1388
    %1527 = vxpose.xlu0.b32.start [1/16] %v1454, 128
    %1528 = vxpose.xlu0.b32.cont [2/16] %v1457, 128
    %1529 = vxpose.xlu0.b32.cont [3/16] 0.0, 128
    %1530 = vxpose.xlu0.b32.cont [4/16] 0.0, 128
    %1531 = vxpose.xlu0.b32.cont [5/16] 0.0, 128
    %1532 = vxpose.xlu0.b32.cont [6/16] 0.0, 128
    %1533 = vxpose.xlu0.b32.cont [7/16] 0.0, 128
    %1534 = vxpose.xlu0.b32.cont [8/16] 0.0, 128
    %1535 = vxpose.xlu0.b32.cont [9/16] 0.0, 128
    %1536 = vxpose.xlu0.b32.cont [10/16] 0.0, 128
    %1537 = vxpose.xlu0.b32.cont [11/16] 0.0, 128
    %1538 = vxpose.xlu0.b32.cont [12/16] 0.0, 128
    %1539 = vxpose.xlu0.b32.cont [13/16] 0.0, 128
    %1540 = vxpose.xlu0.b32.cont [14/16] 0.0, 128
    %1541 = vxpose.xlu0.b32.cont [15/16] 0.0, 128
    %1542 = vxpose.xlu0.b32.end [16/16] 0.0, 128
    %v1543 = vpop.trf.xlu0
    %v1544 = vpop.trf.xlu0
    %v1545 = vpop.trf.xlu0
    %v1546 = vpop.trf.xlu0
    %v1547 = vpop.trf.xlu0
    %v1548 = vpop.trf.xlu0
    %v1549 = vpop.trf.xlu0
    %v1550 = vpop.trf.xlu0
    %v1551 = vpop.trf.xlu0
    %v1552 = vpop.trf.xlu0
    %v1553 = vpop.trf.xlu0
    %v1554 = vpop.trf.xlu0
    %v1555 = vpop.trf.xlu0
    %v1556 = vpop.trf.xlu0
    %v1557 = vpop.trf.xlu0
    %v1558 = vpop.trf.xlu0
    %v1559 = vpack.c.bf16 %v1543, %v1543
    %v1561 = vsel %vm353, %v1526, 0
    %v1564 = vsel %vm357, %v1559, 0
    %1566 = vmatprep.subr.bf16.mxu0 0
    %1567 = vmatpush1.bf16.msra.mxu0 0
    %1568 = vmatprep.subr.bf16.mxu0 0
    %1569 = vmatpush1.bf16.msra.mxu0 0
    %1570 = vmatprep.subr.bf16.mxu0 0
    %1571 = vmatpush1.bf16.msra.mxu0 0
    %1572 = vmatprep.subr.bf16.mxu0 0
    %1573 = vmatpush1.bf16.msra.mxu0 0
    %1574 = vmatprep.subr.bf16.mxu0 0
    %1575 = vmatpush1.bf16.msra.mxu0 0
    %1576 = vmatprep.subr.bf16.mxu0 0
    %1577 = vmatpush1.bf16.msra.mxu0 0
    %1578 = vmatprep.subr.bf16.mxu0 0
    %1579 = vmatpush1.bf16.msra.mxu0 0
    %1580 = vmatprep.subr.bf16.mxu0 0
    %1581 = vmatpush1.bf16.msra.mxu0 %v1564
    %1582 = vmatprep.subr.bf16.mxu0 0
    %1583 = vmatpush2.bf16.msra.mxu0 0
    %1584 = vmatprep.subr.bf16.mxu0 0
    %1585 = vmatpush2.bf16.msra.mxu0 0
    %1586 = vmatprep.subr.bf16.mxu0 0
    %1587 = vmatpush2.bf16.msra.mxu0 0
    %1588 = vmatprep.subr.bf16.mxu0 0
    %1589 = vmatpush2.bf16.msra.mxu0 0
    %1590 = vmatprep.subr.bf16.mxu0 0
    %1591 = vmatpush2.bf16.msra.mxu0 0
    %1592 = vmatprep.subr.bf16.mxu0 0
    %1593 = vmatpush2.bf16.msra.mxu0 0
    %1594 = vmatprep.subr.bf16.mxu0 0
    %1595 = vmatpush2.bf16.msra.mxu0 0
    %1596 = vmatprep.subr.bf16.mxu0 0
    %1597 = vmatpush2.bf16.msra.mxu0 0
    %1598 = vmatprep.mubr.bf16.mxu0 0
    %1599 = vmatmul.mubr.bf16.gmra.mxu0 %v1561
    %v1600 = vpop.f32.mrf.mxu0
    %v1601 = vadd.f32 0.0, %v1600
    %v1602 = vpop.f32.mrf.mxu0
    %v1603 = vpop.f32.mrf.mxu0
    %v1604 = vadd.f32 0.0, %v1603
    %v1605 = vpop.f32.mrf.mxu0
    %1606 = vdwg.mxu0
    %v1607 = vmul.f32 %v1601, 0.35355338
    %v1608 = vmul.f32 %v1604, 0.35355338
    %v1609 = vadd.f32 %v1607, %v75
    %v1610 = vadd.f32 %v1608, %v76
    %v1611 = vsel %vm406, %v1609, -inf
    %1612 = vmax.xlane.f32.xlu0 %v1611
    %v1613 = vpop.xlane.xlu0 %1612
    %v1614 = vsel %vm406, %v1610, -inf
    %1615 = vmax.xlane.f32.xlu0 %v1614
    %v1616 = vpop.xlane.xlu0 %1615
    %v1617 = vsub.f32 %v1609, %v1613
    %v1618 = vsub.f32 %v1610, %v1616
    %v1619 = vmul.f32 %v1617, 1.442695
    %v1620 = vpow.pop %v1619
    %v1621 = vmul.f32 %v1618, 1.442695
    %v1622 = vpow.pop %v1621
    %v1623 = vsel %vm406, %v1620, 0.0
    %1624 = vadd.xlane.f32.xlu0 %v1623
    %v1625 = vpop.xlane.xlu0 %1624
    %v1626 = vsel %vm406, %v1622, 0.0
    %1627 = vadd.xlane.f32.xlu0 %v1626
    %v1628 = vpop.xlane.xlu0 %1627
    %v1629 = vrcp.pop %v1625
    %v1630 = vrcp.pop %v1628
    %v1631 = vmul.f32 %v1620, %v1629
    %v1632 = vmul.f32 %v1622, %v1630
    %v1633 = vpack.c.bf16 %v1632, %v1631
    %v1634 = vpack.c.bf16 %v1523, %v1520
    %v1636 = vsel %vm406, %v1633, 0
    %1638 = vmatprep.subr.bf16.mxu0 0
    %1639 = vmatpush1.bf16.msra.mxu0 0
    %1640 = vmatprep.subr.bf16.mxu0 0
    %1641 = vmatpush1.bf16.msra.mxu0 0
    %1642 = vmatprep.subr.bf16.mxu0 0
    %1643 = vmatpush1.bf16.msra.mxu0 0
    %1644 = vmatprep.subr.bf16.mxu0 0
    %1645 = vmatpush1.bf16.msra.mxu0 0
    %1646 = vmatprep.subr.bf16.mxu0 0
    %1647 = vmatpush1.bf16.msra.mxu0 0
    %1648 = vmatprep.subr.bf16.mxu0 0
    %1649 = vmatpush1.bf16.msra.mxu0 0
    %1650 = vmatprep.subr.bf16.mxu0 0
    %1651 = vmatpush1.bf16.msra.mxu0 0
    %1652 = vmatprep.subr.bf16.mxu0 0
    %1653 = vmatpush1.bf16.msra.mxu0 %v1634
    %1654 = vmatprep.subr.bf16.mxu0 0
    %1655 = vmatpush2.bf16.msra.mxu0 0
    %1656 = vmatprep.subr.bf16.mxu0 0
    %1657 = vmatpush2.bf16.msra.mxu0 0
    %1658 = vmatprep.subr.bf16.mxu0 0
    %1659 = vmatpush2.bf16.msra.mxu0 0
    %1660 = vmatprep.subr.bf16.mxu0 0
    %1661 = vmatpush2.bf16.msra.mxu0 0
    %1662 = vmatprep.subr.bf16.mxu0 0
    %1663 = vmatpush2.bf16.msra.mxu0 0
    %1664 = vmatprep.subr.bf16.mxu0 0
    %1665 = vmatpush2.bf16.msra.mxu0 0
    %1666 = vmatprep.subr.bf16.mxu0 0
    %1667 = vmatpush2.bf16.msra.mxu0 0
    %1668 = vmatprep.subr.bf16.mxu0 0
    %1669 = vmatpush2.bf16.msra.mxu0 0
    %1670 = vmatprep.mubr.bf16.mxu0 0
    %1671 = vmatmul.mubr.bf16.gmra.mxu0 %v1636
    %v1672 = vpop.f32.mrf.mxu0
    %v1673 = vadd.f32 0.0, %v1672
    %v1674 = vpop.f32.mrf.mxu0
    %v1675 = vpop.f32.mrf.mxu0
    %v1676 = vadd.f32 0.0, %v1675
    %v1677 = vpop.f32.mrf.mxu0
    %1678 = vdwg.mxu0
    %v1679 = vpack.c.bf16 %v1676, %v1673
    %s1680 = scalar_lea.vmem %s10, 12
    %v1681 = vld [vmem:[%s1680] sm:$0xf]
    %v1683 = vsel %vm353, %v1679, 0
    %v1686 = vsel %vm357, %v1681, 0
    %1688 = vmatprep.subr.bf16.mxu0 0
    %1689 = vmatpush1.bf16.msra.mxu0 0
    %1690 = vmatprep.subr.bf16.mxu0 0
    %1691 = vmatpush1.bf16.msra.mxu0 0
    %1692 = vmatprep.subr.bf16.mxu0 0
    %1693 = vmatpush1.bf16.msra.mxu0 0
    %1694 = vmatprep.subr.bf16.mxu0 0
    %1695 = vmatpush1.bf16.msra.mxu0 0
    %1696 = vmatprep.subr.bf16.mxu0 0
    %1697 = vmatpush1.bf16.msra.mxu0 0
    %1698 = vmatprep.subr.bf16.mxu0 0
    %1699 = vmatpush1.bf16.msra.mxu0 0
    %1700 = vmatprep.subr.bf16.mxu0 0
    %1701 = vmatpush1.bf16.msra.mxu0 0
    %1702 = vmatprep.subr.bf16.mxu0 0
    %1703 = vmatpush1.bf16.msra.mxu0 %v1686
    %1704 = vmatprep.subr.bf16.mxu0 0
    %1705 = vmatpush2.bf16.msra.mxu0 0
    %1706 = vmatprep.subr.bf16.mxu0 0
    %1707 = vmatpush2.bf16.msra.mxu0 0
    %1708 = vmatprep.subr.bf16.mxu0 0
    %1709 = vmatpush2.bf16.msra.mxu0 0
    %1710 = vmatprep.subr.bf16.mxu0 0
    %1711 = vmatpush2.bf16.msra.mxu0 0
    %1712 = vmatprep.subr.bf16.mxu0 0
    %1713 = vmatpush2.bf16.msra.mxu0 0
    %1714 = vmatprep.subr.bf16.mxu0 0
    %1715 = vmatpush2.bf16.msra.mxu0 0
    %1716 = vmatprep.subr.bf16.mxu0 0
    %1717 = vmatpush2.bf16.msra.mxu0 0
    %1718 = vmatprep.subr.bf16.mxu0 0
    %1719 = vmatpush2.bf16.msra.mxu0 0
    %1720 = vmatprep.mubr.bf16.mxu0 0
    %1721 = vmatmul.mubr.bf16.gmra.mxu0 %v1683
    %v1722 = vpop.f32.mrf.mxu0
    %v1723 = vadd.f32 0.0, %v1722
    %v1724 = vpop.f32.mrf.mxu0
    %v1725 = vpop.f32.mrf.mxu0
    %v1726 = vadd.f32 0.0, %v1725
    %v1727 = vpop.f32.mrf.mxu0
    %1728 = vdwg.mxu0
    %v1729 = vadd.f32 %v1326, %v1723
    %v1730 = vadd.f32 %v1327, %v1726
    %v1731 = vadd.f32 %v121, %v1729
    %v1732 = vadd.f32 %v122, %v1730
    %v1733 = vld [vmem:[%s11] sm:$0x1]
    %v1735 = vlaneseq
    %v1736 = vshrl.u32 %v1735, 7
    %v1737 = vsub.s32 0, %v1736
    %v1738 = vrot.slane %v1733, %v1737
    %v1740 = vadd.f32 %v1731, %v1738
    %v1741 = vadd.f32 %v1732, %v1738
    %v1742 = vld [vmem:[%s12] sm:$0x1]
    %v1743 = vld [vmem:[%s13] sm:$0x1]
    %v1744 = vsel %vm79, %v1740, 0.0
    %1745 = vadd.xlane.f32.xlu0 %v1744
    %v1746 = vpop.xlane.xlu0 %1745
    %v1747 = vsel %vm79, %v1741, 0.0
    %1748 = vadd.xlane.f32.xlu0 %v1747
    %v1749 = vpop.xlane.xlu0 %1748
    %v1750 = vmul.f32 %v1746, %v86
    %v1751 = vmul.f32 %v1749, %v86
    %v1752 = vsub.f32 %v1740, %v1750
    %v1753 = vsub.f32 %v1741, %v1751
    %v1754 = vmul.f32 %v1752, %v1752
    %v1755 = vmul.f32 %v1753, %v1753
    %v1756 = vsel %vm79, %v1754, 0.0
    %1757 = vadd.xlane.f32.xlu0 %v1756
    %v1758 = vpop.xlane.xlu0 %1757
    %v1759 = vsel %vm79, %v1755, 0.0
    %1760 = vadd.xlane.f32.xlu0 %v1759
    %v1761 = vpop.xlane.xlu0 %1760
    %v1762 = vmul.f32 %v1758, %v86
    %v1763 = vmul.f32 %v1761, %v86
    %v1764 = vadd.f32 %v1762, 1e-05
    %v1765 = vadd.f32 %v1763, 1e-05
    %v1766 = vrsqrt.pop %v1764
    %v1767 = vrsqrt.pop %v1765
    %v1768 = vmul.f32 %v1752, %v1766
    %v1769 = vmul.f32 %v1753, %v1767
    %v1771 = vlaneseq
    %v1772 = vshrl.u32 %v1771, 7
    %v1773 = vsub.s32 0, %v1772
    %v1774 = vrot.slane %v1742, %v1773
    %v1776 = vmul.f32 %v1768, %v1774
    %v1777 = vmul.f32 %v1769, %v1774
    %v1779 = vlaneseq
    %v1780 = vshrl.u32 %v1779, 7
    %v1781 = vsub.s32 0, %v1780
    %v1782 = vrot.slane %v1743, %v1781
    %v1784 = vadd.f32 %v1776, %v1782
    %v1785 = vadd.f32 %v1777, %v1782
    %v1786 = vpack.c.bf16 %v1785, %v1784
    %v1787 = vld [vmem:[%s14] sm:$0xf]
    %v1788 = vld [vmem:[%s14 + $0x4] sm:$0xf]
    %v1789 = vld [vmem:[%s14 + $0x8] sm:$0xf]
    %v1790 = vld [vmem:[%s14 + $0xc] sm:$0xf]
    %v1791 = vld [vmem:[%s15] sm:$0x1]
    %v1793 = vlaneseq
    %v1794 = vshrl.u32 %v1793, 7
    %v1795 = vsub.s32 0, %v1794
    %v1796 = vrot.slane %v1791, %v1795
    %v1802 = vunpack.c.l.b16 %v1787
    %v1803 = vunpack.c.l.b16 %v1788
    %v1804 = vunpack.c.l.b16 %v1789
    %v1805 = vunpack.c.l.b16 %v1790
    %v1806 = vpack.c.b16 %v1803, %v1802
    %v1807 = vpack.c.b16 %v1805, %v1804
    %v1811 = vsel %vm79, %v1786, 0
    %1813 = vmatprep.subr.bf16.mxu0 0
    %1814 = vmatpush1.bf16.msra.mxu0 0
    %1815 = vmatprep.subr.bf16.mxu0 0
    %1816 = vmatpush1.bf16.msra.mxu0 0
    %1817 = vmatprep.subr.bf16.mxu0 0
    %1818 = vmatpush1.bf16.msra.mxu0 0
    %1819 = vmatprep.subr.bf16.mxu0 0
    %1820 = vmatpush1.bf16.msra.mxu0 0
    %1821 = vmatprep.subr.bf16.mxu0 0
    %1822 = vmatpush1.bf16.msra.mxu0 0
    %1823 = vmatprep.subr.bf16.mxu0 0
    %1824 = vmatpush1.bf16.msra.mxu0 0
    %1825 = vmatprep.subr.bf16.mxu0 0
    %1826 = vmatpush1.bf16.msra.mxu0 %v1807
    %1827 = vmatprep.subr.bf16.mxu0 0
    %1828 = vmatpush1.bf16.msra.mxu0 %v1806
    %1829 = vmatprep.subr.bf16.mxu0 0
    %1830 = vmatpush2.bf16.msra.mxu0 0
    %1831 = vmatprep.subr.bf16.mxu0 0
    %1832 = vmatpush2.bf16.msra.mxu0 0
    %1833 = vmatprep.subr.bf16.mxu0 0
    %1834 = vmatpush2.bf16.msra.mxu0 0
    %1835 = vmatprep.subr.bf16.mxu0 0
    %1836 = vmatpush2.bf16.msra.mxu0 0
    %1837 = vmatprep.subr.bf16.mxu0 0
    %1838 = vmatpush2.bf16.msra.mxu0 0
    %1839 = vmatprep.subr.bf16.mxu0 0
    %1840 = vmatpush2.bf16.msra.mxu0 0
    %1841 = vmatprep.subr.bf16.mxu0 0
    %1842 = vmatpush2.bf16.msra.mxu0 0
    %1843 = vmatprep.subr.bf16.mxu0 0
    %1844 = vmatpush2.bf16.msra.mxu0 0
    %1845 = vmatprep.mubr.bf16.mxu0 0
    %1846 = vmatmul.mubr.bf16.gmra.mxu0 %v1811
    %v1847 = vpop.f32.mrf.mxu0
    %v1848 = vadd.f32 %v1796, %v1847
    %v1849 = vpop.f32.mrf.mxu0
    %v1850 = vpop.f32.mrf.mxu0
    %v1851 = vadd.f32 %v1796, %v1850
    %v1852 = vpop.f32.mrf.mxu0
    %1853 = vdwg.mxu0
    %v1854 = vmul.f32 %v1848, %v1848
    %v1855 = vmul.f32 %v1851, %v1851
    %v1856 = vmul.f32 %v1848, %v1854
    %v1857 = vmul.f32 %v1851, %v1855
    %v1858 = vmul.f32 %v1856, 0.044715
    %v1859 = vmul.f32 %v1857, 0.044715
    %v1860 = vadd.f32 %v1848, %v1858
    %v1861 = vadd.f32 %v1851, %v1859
    %v1862 = vmul.f32 %v1860, 0.7978846
    %v1863 = vmul.f32 %v1861, 0.7978846
    %v1864 = vtanh.pop %v1862
    %v1865 = vtanh.pop %v1863
    %v1866 = vadd.f32 %v1864, 1.0
    %v1867 = vadd.f32 %v1865, 1.0
    %v1868 = vmul.f32 %v1866, 0.5
    %v1869 = vmul.f32 %v1867, 0.5
    %v1870 = vmul.f32 %v1848, %v1868
    %v1871 = vmul.f32 %v1851, %v1869
    %v1872 = vpack.c.bf16 %v1871, %v1870
    %v1873 = vld [vmem:[%s16] sm:$0xf]
    %v1874 = vld [vmem:[%s16 + $0x4] sm:$0xf]
    %v1875 = vld [vmem:[%s16 + $0x8] sm:$0xf]
    %v1876 = vld [vmem:[%s16 + $0xc] sm:$0xf]
    %v1877 = vld [vmem:[%s16 + $0x10] sm:$0xf]
    %v1878 = vld [vmem:[%s16 + $0x14] sm:$0xf]
    %v1879 = vld [vmem:[%s16 + $0x18] sm:$0xf]
    %v1880 = vld [vmem:[%s16 + $0x1c] sm:$0xf]
    %v1881 = vld [vmem:[%s16 + $0x20] sm:$0xf]
    %v1882 = vld [vmem:[%s16 + $0x24] sm:$0xf]
    %v1883 = vld [vmem:[%s16 + $0x28] sm:$0xf]
    %v1884 = vld [vmem:[%s16 + $0x2c] sm:$0xf]
    %v1885 = vld [vmem:[%s16 + $0x30] sm:$0xf]
    %v1886 = vld [vmem:[%s16 + $0x34] sm:$0xf]
    %v1887 = vld [vmem:[%s16 + $0x38] sm:$0xf]
    %v1888 = vld [vmem:[%s16 + $0x3c] sm:$0xf]
    %v1889 = vld [vmem:[%s17] sm:$0x1]
    %v1891 = vlaneseq
    %v1892 = vshrl.u32 %v1891, 7
    %v1893 = vsub.s32 0, %v1892
    %v1894 = vrot.slane %v1889, %v1893
    %v1912 = vunpack.c.l.b16 %v1873
    %v1913 = vunpack.c.l.b16 %v1874
    %v1914 = vunpack.c.l.b16 %v1875
    %v1915 = vunpack.c.l.b16 %v1876
    %v1916 = vunpack.c.l.b16 %v1877
    %v1917 = vunpack.c.l.b16 %v1878
    %v1918 = vunpack.c.l.b16 %v1879
    %v1919 = vunpack.c.l.b16 %v1880
    %v1920 = vunpack.c.l.b16 %v1881
    %v1921 = vunpack.c.l.b16 %v1882
    %v1922 = vunpack.c.l.b16 %v1883
    %v1923 = vunpack.c.l.b16 %v1884
    %v1924 = vunpack.c.l.b16 %v1885
    %v1925 = vunpack.c.l.b16 %v1886
    %v1926 = vunpack.c.l.b16 %v1887
    %v1927 = vunpack.c.l.b16 %v1888
    %v1928 = vpack.c.b16 %v1913, %v1912
    %v1929 = vpack.c.b16 %v1915, %v1914
    %v1930 = vpack.c.b16 %v1917, %v1916
    %v1931 = vpack.c.b16 %v1919, %v1918
    %v1932 = vpack.c.b16 %v1921, %v1920
    %v1933 = vpack.c.b16 %v1923, %v1922
    %v1934 = vpack.c.b16 %v1925, %v1924
    %v1935 = vpack.c.b16 %v1927, %v1926
    %1944 = vmatprep.subr.bf16.mxu0 0
    %1945 = vmatpush1.bf16.msra.mxu0 %v1935
    %1946 = vmatprep.subr.bf16.mxu0 0
    %1947 = vmatpush1.bf16.msra.mxu0 %v1934
    %1948 = vmatprep.subr.bf16.mxu0 0
    %1949 = vmatpush1.bf16.msra.mxu0 %v1933
    %1950 = vmatprep.subr.bf16.mxu0 0
    %1951 = vmatpush1.bf16.msra.mxu0 %v1932
    %1952 = vmatprep.subr.bf16.mxu0 0
    %1953 = vmatpush1.bf16.msra.mxu0 %v1931
    %1954 = vmatprep.subr.bf16.mxu0 0
    %1955 = vmatpush1.bf16.msra.mxu0 %v1930
    %1956 = vmatprep.subr.bf16.mxu0 0
    %1957 = vmatpush1.bf16.msra.mxu0 %v1929
    %1958 = vmatprep.subr.bf16.mxu0 0
    %1959 = vmatpush1.bf16.msra.mxu0 %v1928
    %1960 = vmatprep.subr.bf16.mxu0 0
    %1961 = vmatpush2.bf16.msra.mxu0 0
    %1962 = vmatprep.subr.bf16.mxu0 0
    %1963 = vmatpush2.bf16.msra.mxu0 0
    %1964 = vmatprep.subr.bf16.mxu0 0
    %1965 = vmatpush2.bf16.msra.mxu0 0
    %1966 = vmatprep.subr.bf16.mxu0 0
    %1967 = vmatpush2.bf16.msra.mxu0 0
    %1968 = vmatprep.subr.bf16.mxu0 0
    %1969 = vmatpush2.bf16.msra.mxu0 0
    %1970 = vmatprep.subr.bf16.mxu0 0
    %1971 = vmatpush2.bf16.msra.mxu0 0
    %1972 = vmatprep.subr.bf16.mxu0 0
    %1973 = vmatpush2.bf16.msra.mxu0 0
    %1974 = vmatprep.subr.bf16.mxu0 0
    %1975 = vmatpush2.bf16.msra.mxu0 0
    %1976 = vmatprep.mubr.bf16.mxu0 0
    %1977 = vmatmul.mubr.bf16.gmra.mxu0 %v1872
    %v1978 = vpop.f32.mrf.mxu0
    %v1979 = vadd.f32 %v1894, %v1978
    %v1980 = vpop.f32.mrf.mxu0
    %v1981 = vpop.f32.mrf.mxu0
    %v1982 = vadd.f32 %v1894, %v1981
    %v1983 = vpop.f32.mrf.mxu0
    %1984 = vdwg.mxu0
    %v1985 = vadd.f32 %v1784, %v1979
    %v1986 = vadd.f32 %v1785, %v1982
    %v1987 = vld [vmem:[%s18] sm:$0x1]
    %v1988 = vld [vmem:[%s19] sm:$0x1]
    %v1989 = vsel %vm79, %v1985, 0.0
    %1990 = vadd.xlane.f32.xlu0 %v1989
    %v1991 = vpop.xlane.xlu0 %1990
    %v1992 = vsel %vm79, %v1986, 0.0
    %1993 = vadd.xlane.f32.xlu0 %v1992
    %v1994 = vpop.xlane.xlu0 %1993
    %v1995 = vmul.f32 %v1991, %v86
    %v1996 = vmul.f32 %v1994, %v86
    %v1997 = vsub.f32 %v1985, %v1995
    %v1998 = vsub.f32 %v1986, %v1996
    %v1999 = vmul.f32 %v1997, %v1997
    %v2000 = vmul.f32 %v1998, %v1998
    %v2001 = vsel %vm79, %v1999, 0.0
    %2002 = vadd.xlane.f32.xlu0 %v2001
    %v2003 = vpop.xlane.xlu0 %2002
    %v2004 = vsel %vm79, %v2000, 0.0
    %2005 = vadd.xlane.f32.xlu0 %v2004
    %v2006 = vpop.xlane.xlu0 %2005
    %v2007 = vmul.f32 %v2003, %v86
    %v2008 = vmul.f32 %v2006, %v86
    %v2009 = vadd.f32 %v2007, 1e-05
    %v2010 = vadd.f32 %v2008, 1e-05
    %v2011 = vrsqrt.pop %v2009
    %v2012 = vrsqrt.pop %v2010
    %v2013 = vmul.f32 %v1997, %v2011
    %v2014 = vmul.f32 %v1998, %v2012
    %v2016 = vlaneseq
    %v2017 = vshrl.u32 %v2016, 7
    %v2018 = vsub.s32 0, %v2017
    %v2019 = vrot.slane %v1987, %v2018
    %v2021 = vmul.f32 %v2013, %v2019
    %v2022 = vmul.f32 %v2014, %v2019
    %v2024 = vlaneseq
    %v2025 = vshrl.u32 %v2024, 7
    %v2026 = vsub.s32 0, %v2025
    %v2027 = vrot.slane %v1988, %v2026
    %v2029 = vadd.f32 %v2021, %v2027
    %v2030 = vadd.f32 %v2022, %v2027
    %v2031 = vpack.c.bf16 %v2030, %v2029
    %s2032 = scalar_lea.vmem %s4, 64
    %v2033 = vld [vmem:[%s2032] sm:$0xf]
    %v2034 = vld [vmem:[%s2032 + $0x4] sm:$0xf]
    %v2035 = vld [vmem:[%s2032 + $0x8] sm:$0xf]
    %v2036 = vld [vmem:[%s2032 + $0xc] sm:$0xf]
    %s2037 = scalar_lea.vmem %s5, 4
    %v2038 = vld [vmem:[%s2037] sm:$0x1]
    %v2040 = vlaneseq
    %v2041 = vshrl.u32 %v2040, 7
    %v2042 = vsub.s32 0, %v2041
    %v2043 = vrot.slane %v2038, %v2042
    %v2049 = vunpack.c.l.b16 %v2033
    %v2050 = vunpack.c.l.b16 %v2034
    %v2051 = vunpack.c.l.b16 %v2035
    %v2052 = vunpack.c.l.b16 %v2036
    %v2053 = vpack.c.b16 %v2050, %v2049
    %v2054 = vpack.c.b16 %v2052, %v2051
    %v2058 = vsel %vm79, %v2031, 0
    %2060 = vmatprep.subr.bf16.mxu0 0
    %2061 = vmatpush1.bf16.msra.mxu0 0
    %2062 = vmatprep.subr.bf16.mxu0 0
    %2063 = vmatpush1.bf16.msra.mxu0 0
    %2064 = vmatprep.subr.bf16.mxu0 0
    %2065 = vmatpush1.bf16.msra.mxu0 0
    %2066 = vmatprep.subr.bf16.mxu0 0
    %2067 = vmatpush1.bf16.msra.mxu0 0
    %2068 = vmatprep.subr.bf16.mxu0 0
    %2069 = vmatpush1.bf16.msra.mxu0 0
    %2070 = vmatprep.subr.bf16.mxu0 0
    %2071 = vmatpush1.bf16.msra.mxu0 0
    %2072 = vmatprep.subr.bf16.mxu0 0
    %2073 = vmatpush1.bf16.msra.mxu0 %v2054
    %2074 = vmatprep.subr.bf16.mxu0 0
    %2075 = vmatpush1.bf16.msra.mxu0 %v2053
    %2076 = vmatprep.subr.bf16.mxu0 0
    %2077 = vmatpush2.bf16.msra.mxu0 0
    %2078 = vmatprep.subr.bf16.mxu0 0
    %2079 = vmatpush2.bf16.msra.mxu0 0
    %2080 = vmatprep.subr.bf16.mxu0 0
    %2081 = vmatpush2.bf16.msra.mxu0 0
    %2082 = vmatprep.subr.bf16.mxu0 0
    %2083 = vmatpush2.bf16.msra.mxu0 0
    %2084 = vmatprep.subr.bf16.mxu0 0
    %2085 = vmatpush2.bf16.msra.mxu0 0
    %2086 = vmatprep.subr.bf16.mxu0 0
    %2087 = vmatpush2.bf16.msra.mxu0 0
    %2088 = vmatprep.subr.bf16.mxu0 0
    %2089 = vmatpush2.bf16.msra.mxu0 0
    %2090 = vmatprep.subr.bf16.mxu0 0
    %2091 = vmatpush2.bf16.msra.mxu0 0
    %2092 = vmatprep.mubr.bf16.mxu0 0
    %2093 = vmatmul.mubr.bf16.gmra.mxu0 %v2058
    %v2094 = vpop.f32.mrf.mxu0
    %v2095 = vadd.f32 %v2043, %v2094
    %v2096 = vpop.f32.mrf.mxu0
    %v2097 = vpop.f32.mrf.mxu0
    %v2098 = vadd.f32 %v2043, %v2097
    %v2099 = vpop.f32.mrf.mxu0
    %2100 = vdwg.mxu0
    %s2101 = scalar_lea.vmem %s6, 64
    %v2102 = vld [vmem:[%s2101] sm:$0xf]
    %v2103 = vld [vmem:[%s2101 + $0x4] sm:$0xf]
    %v2104 = vld [vmem:[%s2101 + $0x8] sm:$0xf]
    %v2105 = vld [vmem:[%s2101 + $0xc] sm:$0xf]
    %s2106 = scalar_lea.vmem %s7, 4
    %v2107 = vld [vmem:[%s2106] sm:$0x1]
    %v2109 = vlaneseq
    %v2110 = vshrl.u32 %v2109, 7
    %v2111 = vsub.s32 0, %v2110
    %v2112 = vrot.slane %v2107, %v2111
    %v2118 = vunpack.c.l.b16 %v2102
    %v2119 = vunpack.c.l.b16 %v2103
    %v2120 = vunpack.c.l.b16 %v2104
    %v2121 = vunpack.c.l.b16 %v2105
    %v2122 = vpack.c.b16 %v2119, %v2118
    %v2123 = vpack.c.b16 %v2121, %v2120
    %2126 = vmatprep.subr.bf16.mxu0 0
    %2127 = vmatpush1.bf16.msra.mxu0 0
    %2128 = vmatprep.subr.bf16.mxu0 0
    %2129 = vmatpush1.bf16.msra.mxu0 0
    %2130 = vmatprep.subr.bf16.mxu0 0
    %2131 = vmatpush1.bf16.msra.mxu0 0
    %2132 = vmatprep.subr.bf16.mxu0 0
    %2133 = vmatpush1.bf16.msra.mxu0 0
    %2134 = vmatprep.subr.bf16.mxu0 0
    %2135 = vmatpush1.bf16.msra.mxu0 0
    %2136 = vmatprep.subr.bf16.mxu0 0
    %2137 = vmatpush1.bf16.msra.mxu0 0
    %2138 = vmatprep.subr.bf16.mxu0 0
    %2139 = vmatpush1.bf16.msra.mxu0 %v2123
    %2140 = vmatprep.subr.bf16.mxu0 0
    %2141 = vmatpush1.bf16.msra.mxu0 %v2122
    %2142 = vmatprep.subr.bf16.mxu0 0
    %2143 = vmatpush2.bf16.msra.mxu0 0
    %2144 = vmatprep.subr.bf16.mxu0 0
    %2145 = vmatpush2.bf16.msra.mxu0 0
    %2146 = vmatprep.subr.bf16.mxu0 0
    %2147 = vmatpush2.bf16.msra.mxu0 0
    %2148 = vmatprep.subr.bf16.mxu0 0
    %2149 = vmatpush2.bf16.msra.mxu0 0
    %2150 = vmatprep.subr.bf16.mxu0 0
    %2151 = vmatpush2.bf16.msra.mxu0 0
    %2152 = vmatprep.subr.bf16.mxu0 0
    %2153 = vmatpush2.bf16.msra.mxu0 0
    %2154 = vmatprep.subr.bf16.mxu0 0
    %2155 = vmatpush2.bf16.msra.mxu0 0
    %2156 = vmatprep.subr.bf16.mxu0 0
    %2157 = vmatpush2.bf16.msra.mxu0 0
    %2158 = vmatprep.mubr.bf16.mxu0 0
    %2159 = vmatmul.mubr.bf16.gmra.mxu0 %v2058
    %v2160 = vpop.f32.mrf.mxu0
    %v2161 = vadd.f32 %v2112, %v2160
    %v2162 = vpop.f32.mrf.mxu0
    %v2163 = vpop.f32.mrf.mxu0
    %v2164 = vadd.f32 %v2112, %v2163
    %v2165 = vpop.f32.mrf.mxu0
    %2166 = vdwg.mxu0
    %s2167 = scalar_lea.vmem %s8, 64
    %v2168 = vld [vmem:[%s2167] sm:$0xf]
    %v2169 = vld [vmem:[%s2167 + $0x4] sm:$0xf]
    %v2170 = vld [vmem:[%s2167 + $0x8] sm:$0xf]
    %v2171 = vld [vmem:[%s2167 + $0xc] sm:$0xf]
    %s2172 = scalar_lea.vmem %s9, 4
    %v2173 = vld [vmem:[%s2172] sm:$0x1]
    %v2175 = vlaneseq
    %v2176 = vshrl.u32 %v2175, 7
    %v2177 = vsub.s32 0, %v2176
    %v2178 = vrot.slane %v2173, %v2177
    %v2184 = vunpack.c.l.b16 %v2168
    %v2185 = vunpack.c.l.b16 %v2169
    %v2186 = vunpack.c.l.b16 %v2170
    %v2187 = vunpack.c.l.b16 %v2171
    %v2188 = vpack.c.b16 %v2185, %v2184
    %v2189 = vpack.c.b16 %v2187, %v2186
    %2192 = vmatprep.subr.bf16.mxu0 0
    %2193 = vmatpush1.bf16.msra.mxu0 0
    %2194 = vmatprep.subr.bf16.mxu0 0
    %2195 = vmatpush1.bf16.msra.mxu0 0
    %2196 = vmatprep.subr.bf16.mxu0 0
    %2197 = vmatpush1.bf16.msra.mxu0 0
    %2198 = vmatprep.subr.bf16.mxu0 0
    %2199 = vmatpush1.bf16.msra.mxu0 0
    %2200 = vmatprep.subr.bf16.mxu0 0
    %2201 = vmatpush1.bf16.msra.mxu0 0
    %2202 = vmatprep.subr.bf16.mxu0 0
    %2203 = vmatpush1.bf16.msra.mxu0 0
    %2204 = vmatprep.subr.bf16.mxu0 0
    %2205 = vmatpush1.bf16.msra.mxu0 %v2189
    %2206 = vmatprep.subr.bf16.mxu0 0
    %2207 = vmatpush1.bf16.msra.mxu0 %v2188
    %2208 = vmatprep.subr.bf16.mxu0 0
    %2209 = vmatpush2.bf16.msra.mxu0 0
    %2210 = vmatprep.subr.bf16.mxu0 0
    %2211 = vmatpush2.bf16.msra.mxu0 0
    %2212 = vmatprep.subr.bf16.mxu0 0
    %2213 = vmatpush2.bf16.msra.mxu0 0
    %2214 = vmatprep.subr.bf16.mxu0 0
    %2215 = vmatpush2.bf16.msra.mxu0 0
    %2216 = vmatprep.subr.bf16.mxu0 0
    %2217 = vmatpush2.bf16.msra.mxu0 0
    %2218 = vmatprep.subr.bf16.mxu0 0
    %2219 = vmatpush2.bf16.msra.mxu0 0
    %2220 = vmatprep.subr.bf16.mxu0 0
    %2221 = vmatpush2.bf16.msra.mxu0 0
    %2222 = vmatprep.subr.bf16.mxu0 0
    %2223 = vmatpush2.bf16.msra.mxu0 0
    %2224 = vmatprep.mubr.bf16.mxu0 0
    %2225 = vmatmul.mubr.bf16.gmra.mxu0 %v2058
    %v2226 = vpop.f32.mrf.mxu0
    %v2227 = vadd.f32 %v2178, %v2226
    %v2228 = vpop.f32.mrf.mxu0
    %v2229 = vpop.f32.mrf.mxu0
    %v2230 = vadd.f32 %v2178, %v2229
    %v2231 = vpop.f32.mrf.mxu0
    %2232 = vdwg.mxu0
    %v2233 = vpack.c.bf16 %v2098, %v2095
    %2234 = vxpose.xlu0.b32.start [1/16] %v2161, 128
    %2235 = vxpose.xlu0.b32.cont [2/16] %v2164, 128
    %2236 = vxpose.xlu0.b32.cont [3/16] 0.0, 128
    %2237 = vxpose.xlu0.b32.cont [4/16] 0.0, 128
    %2238 = vxpose.xlu0.b32.cont [5/16] 0.0, 128
    %2239 = vxpose.xlu0.b32.cont [6/16] 0.0, 128
    %2240 = vxpose.xlu0.b32.cont [7/16] 0.0, 128
    %2241 = vxpose.xlu0.b32.cont [8/16] 0.0, 128
    %2242 = vxpose.xlu0.b32.cont [9/16] 0.0, 128
    %2243 = vxpose.xlu0.b32.cont [10/16] 0.0, 128
    %2244 = vxpose.xlu0.b32.cont [11/16] 0.0, 128
    %2245 = vxpose.xlu0.b32.cont [12/16] 0.0, 128
    %2246 = vxpose.xlu0.b32.cont [13/16] 0.0, 128
    %2247 = vxpose.xlu0.b32.cont [14/16] 0.0, 128
    %2248 = vxpose.xlu0.b32.cont [15/16] 0.0, 128
    %2249 = vxpose.xlu0.b32.end [16/16] 0.0, 128
    %v2250 = vpop.trf.xlu0
    %v2251 = vpop.trf.xlu0
    %v2252 = vpop.trf.xlu0
    %v2253 = vpop.trf.xlu0
    %v2254 = vpop.trf.xlu0
    %v2255 = vpop.trf.xlu0
    %v2256 = vpop.trf.xlu0
    %v2257 = vpop.trf.xlu0
    %v2258 = vpop.trf.xlu0
    %v2259 = vpop.trf.xlu0
    %v2260 = vpop.trf.xlu0
    %v2261 = vpop.trf.xlu0
    %v2262 = vpop.trf.xlu0
    %v2263 = vpop.trf.xlu0
    %v2264 = vpop.trf.xlu0
    %v2265 = vpop.trf.xlu0
    %v2266 = vpack.c.bf16 %v2250, %v2250
    %v2268 = vsel %vm353, %v2233, 0
    %v2271 = vsel %vm357, %v2266, 0
    %2273 = vmatprep.subr.bf16.mxu0 0
    %2274 = vmatpush1.bf16.msra.mxu0 0
    %2275 = vmatprep.subr.bf16.mxu0 0
    %2276 = vmatpush1.bf16.msra.mxu0 0
    %2277 = vmatprep.subr.bf16.mxu0 0
    %2278 = vmatpush1.bf16.msra.mxu0 0
    %2279 = vmatprep.subr.bf16.mxu0 0
    %2280 = vmatpush1.bf16.msra.mxu0 0
    %2281 = vmatprep.subr.bf16.mxu0 0
    %2282 = vmatpush1.bf16.msra.mxu0 0
    %2283 = vmatprep.subr.bf16.mxu0 0
    %2284 = vmatpush1.bf16.msra.mxu0 0
    %2285 = vmatprep.subr.bf16.mxu0 0
    %2286 = vmatpush1.bf16.msra.mxu0 0
    %2287 = vmatprep.subr.bf16.mxu0 0
    %2288 = vmatpush1.bf16.msra.mxu0 %v2271
    %2289 = vmatprep.subr.bf16.mxu0 0
    %2290 = vmatpush2.bf16.msra.mxu0 0
    %2291 = vmatprep.subr.bf16.mxu0 0
    %2292 = vmatpush2.bf16.msra.mxu0 0
    %2293 = vmatprep.subr.bf16.mxu0 0
    %2294 = vmatpush2.bf16.msra.mxu0 0
    %2295 = vmatprep.subr.bf16.mxu0 0
    %2296 = vmatpush2.bf16.msra.mxu0 0
    %2297 = vmatprep.subr.bf16.mxu0 0
    %2298 = vmatpush2.bf16.msra.mxu0 0
    %2299 = vmatprep.subr.bf16.mxu0 0
    %2300 = vmatpush2.bf16.msra.mxu0 0
    %2301 = vmatprep.subr.bf16.mxu0 0
    %2302 = vmatpush2.bf16.msra.mxu0 0
    %2303 = vmatprep.subr.bf16.mxu0 0
    %2304 = vmatpush2.bf16.msra.mxu0 0
    %2305 = vmatprep.mubr.bf16.mxu0 0
    %2306 = vmatmul.mubr.bf16.gmra.mxu0 %v2268
    %v2307 = vpop.f32.mrf.mxu0
    %v2308 = vadd.f32 0.0, %v2307
    %v2309 = vpop.f32.mrf.mxu0
    %v2310 = vpop.f32.mrf.mxu0
    %v2311 = vadd.f32 0.0, %v2310
    %v2312 = vpop.f32.mrf.mxu0
    %2313 = vdwg.mxu0
    %v2314 = vmul.f32 %v2308, 0.35355338
    %v2315 = vmul.f32 %v2311, 0.35355338
    %v2316 = vadd.f32 %v2314, %v75
    %v2317 = vadd.f32 %v2315, %v76
    %v2318 = vsel %vm406, %v2316, -inf
    %2319 = vmax.xlane.f32.xlu0 %v2318
    %v2320 = vpop.xlane.xlu0 %2319
    %v2321 = vsel %vm406, %v2317, -inf
    %2322 = vmax.xlane.f32.xlu0 %v2321
    %v2323 = vpop.xlane.xlu0 %2322
    %v2324 = vsub.f32 %v2316, %v2320
    %v2325 = vsub.f32 %v2317, %v2323
    %v2326 = vmul.f32 %v2324, 1.442695
    %v2327 = vpow.pop %v2326
    %v2328 = vmul.f32 %v2325, 1.442695
    %v2329 = vpow.pop %v2328
    %v2330 = vsel %vm406, %v2327, 0.0
    %2331 = vadd.xlane.f32.xlu0 %v2330
    %v2332 = vpop.xlane.xlu0 %2331
    %v2333 = vsel %vm406, %v2329, 0.0
    %2334 = vadd.xlane.f32.xlu0 %v2333
    %v2335 = vpop.xlane.xlu0 %2334
    %v2336 = vrcp.pop %v2332
    %v2337 = vrcp.pop %v2335
    %v2338 = vmul.f32 %v2327, %v2336
    %v2339 = vmul.f32 %v2329, %v2337
    %v2340 = vpack.c.bf16 %v2339, %v2338
    %v2341 = vpack.c.bf16 %v2230, %v2227
    %v2343 = vsel %vm406, %v2340, 0
    %2345 = vmatprep.subr.bf16.mxu0 0
    %2346 = vmatpush1.bf16.msra.mxu0 0
    %2347 = vmatprep.subr.bf16.mxu0 0
    %2348 = vmatpush1.bf16.msra.mxu0 0
    %2349 = vmatprep.subr.bf16.mxu0 0
    %2350 = vmatpush1.bf16.msra.mxu0 0
    %2351 = vmatprep.subr.bf16.mxu0 0
    %2352 = vmatpush1.bf16.msra.mxu0 0
    %2353 = vmatprep.subr.bf16.mxu0 0
    %2354 = vmatpush1.bf16.msra.mxu0 0
    %2355 = vmatprep.subr.bf16.mxu0 0
    %2356 = vmatpush1.bf16.msra.mxu0 0
    %2357 = vmatprep.subr.bf16.mxu0 0
    %2358 = vmatpush1.bf16.msra.mxu0 0
    %2359 = vmatprep.subr.bf16.mxu0 0
    %2360 = vmatpush1.bf16.msra.mxu0 %v2341
    %2361 = vmatprep.subr.bf16.mxu0 0
    %2362 = vmatpush2.bf16.msra.mxu0 0
    %2363 = vmatprep.subr.bf16.mxu0 0
    %2364 = vmatpush2.bf16.msra.mxu0 0
    %2365 = vmatprep.subr.bf16.mxu0 0
    %2366 = vmatpush2.bf16.msra.mxu0 0
    %2367 = vmatprep.subr.bf16.mxu0 0
    %2368 = vmatpush2.bf16.msra.mxu0 0
    %2369 = vmatprep.subr.bf16.mxu0 0
    %2370 = vmatpush2.bf16.msra.mxu0 0
    %2371 = vmatprep.subr.bf16.mxu0 0
    %2372 = vmatpush2.bf16.msra.mxu0 0
    %2373 = vmatprep.subr.bf16.mxu0 0
    %2374 = vmatpush2.bf16.msra.mxu0 0
    %2375 = vmatprep.subr.bf16.mxu0 0
    %2376 = vmatpush2.bf16.msra.mxu0 0
    %2377 = vmatprep.mubr.bf16.mxu0 0
    %2378 = vmatmul.mubr.bf16.gmra.mxu0 %v2343
    %v2379 = vpop.f32.mrf.mxu0
    %v2380 = vadd.f32 0.0, %v2379
    %v2381 = vpop.f32.mrf.mxu0
    %v2382 = vpop.f32.mrf.mxu0
    %v2383 = vadd.f32 0.0, %v2382
    %v2384 = vpop.f32.mrf.mxu0
    %2385 = vdwg.mxu0
    %v2386 = vpack.c.bf16 %v2383, %v2380
    %s2387 = scalar_lea.vmem %s10, 16
    %v2388 = vld [vmem:[%s2387] sm:$0xf]
    %s2389 = scalar_lea.vmem %s4, 80
    %v2390 = vld [vmem:[%s2389] sm:$0xf]
    %v2391 = vld [vmem:[%s2389 + $0x4] sm:$0xf]
    %v2392 = vld [vmem:[%s2389 + $0x8] sm:$0xf]
    %v2393 = vld [vmem:[%s2389 + $0xc] sm:$0xf]
    %s2394 = scalar_lea.vmem %s5, 5
    %v2395 = vld [vmem:[%s2394] sm:$0x1]
    %v2397 = vlaneseq
    %v2398 = vshrl.u32 %v2397, 7
    %v2399 = vsub.s32 0, %v2398
    %v2400 = vrot.slane %v2395, %v2399
    %v2406 = vunpack.c.l.b16 %v2390
    %v2407 = vunpack.c.l.b16 %v2391
    %v2408 = vunpack.c.l.b16 %v2392
    %v2409 = vunpack.c.l.b16 %v2393
    %v2410 = vpack.c.b16 %v2407, %v2406
    %v2411 = vpack.c.b16 %v2409, %v2408
    %2414 = vmatprep.subr.bf16.mxu0 0
    %2415 = vmatpush1.bf16.msra.mxu0 0
    %2416 = vmatprep.subr.bf16.mxu0 0
    %2417 = vmatpush1.bf16.msra.mxu0 0
    %2418 = vmatprep.subr.bf16.mxu0 0
    %2419 = vmatpush1.bf16.msra.mxu0 0
    %2420 = vmatprep.subr.bf16.mxu0 0
    %2421 = vmatpush1.bf16.msra.mxu0 0
    %2422 = vmatprep.subr.bf16.mxu0 0
    %2423 = vmatpush1.bf16.msra.mxu0 0
    %2424 = vmatprep.subr.bf16.mxu0 0
    %2425 = vmatpush1.bf16.msra.mxu0 0
    %2426 = vmatprep.subr.bf16.mxu0 0
    %2427 = vmatpush1.bf16.msra.mxu0 %v2411
    %2428 = vmatprep.subr.bf16.mxu0 0
    %2429 = vmatpush1.bf16.msra.mxu0 %v2410
    %2430 = vmatprep.subr.bf16.mxu0 0
    %2431 = vmatpush2.bf16.msra.mxu0 0
    %2432 = vmatprep.subr.bf16.mxu0 0
    %2433 = vmatpush2.bf16.msra.mxu0 0
    %2434 = vmatprep.subr.bf16.mxu0 0
    %2435 = vmatpush2.bf16.msra.mxu0 0
    %2436 = vmatprep.subr.bf16.mxu0 0
    %2437 = vmatpush2.bf16.msra.mxu0 0
    %2438 = vmatprep.subr.bf16.mxu0 0
    %2439 = vmatpush2.bf16.msra.mxu0 0
    %2440 = vmatprep.subr.bf16.mxu0 0
    %2441 = vmatpush2.bf16.msra.mxu0 0
    %2442 = vmatprep.subr.bf16.mxu0 0
    %2443 = vmatpush2.bf16.msra.mxu0 0
    %2444 = vmatprep.subr.bf16.mxu0 0
    %2445 = vmatpush2.bf16.msra.mxu0 0
    %2446 = vmatprep.mubr.bf16.mxu0 0
    %2447 = vmatmul.mubr.bf16.gmra.mxu0 %v2058
    %v2448 = vpop.f32.mrf.mxu0
    %v2449 = vadd.f32 %v2400, %v2448
    %v2450 = vpop.f32.mrf.mxu0
    %v2451 = vpop.f32.mrf.mxu0
    %v2452 = vadd.f32 %v2400, %v2451
    %v2453 = vpop.f32.mrf.mxu0
    %2454 = vdwg.mxu0
    %s2455 = scalar_lea.vmem %s6, 80
    %v2456 = vld [vmem:[%s2455] sm:$0xf]
    %v2457 = vld [vmem:[%s2455 + $0x4] sm:$0xf]
    %v2458 = vld [vmem:[%s2455 + $0x8] sm:$0xf]
    %v2459 = vld [vmem:[%s2455 + $0xc] sm:$0xf]
    %s2460 = scalar_lea.vmem %s7, 5
    %v2461 = vld [vmem:[%s2460] sm:$0x1]
    %v2463 = vlaneseq
    %v2464 = vshrl.u32 %v2463, 7
    %v2465 = vsub.s32 0, %v2464
    %v2466 = vrot.slane %v2461, %v2465
    %v2472 = vunpack.c.l.b16 %v2456
    %v2473 = vunpack.c.l.b16 %v2457
    %v2474 = vunpack.c.l.b16 %v2458
    %v2475 = vunpack.c.l.b16 %v2459
    %v2476 = vpack.c.b16 %v2473, %v2472
    %v2477 = vpack.c.b16 %v2475, %v2474
    %2480 = vmatprep.subr.bf16.mxu0 0
    %2481 = vmatpush1.bf16.msra.mxu0 0
    %2482 = vmatprep.subr.bf16.mxu0 0
    %2483 = vmatpush1.bf16.msra.mxu0 0
    %2484 = vmatprep.subr.bf16.mxu0 0
    %2485 = vmatpush1.bf16.msra.mxu0 0
    %2486 = vmatprep.subr.bf16.mxu0 0
    %2487 = vmatpush1.bf16.msra.mxu0 0
    %2488 = vmatprep.subr.bf16.mxu0 0
    %2489 = vmatpush1.bf16.msra.mxu0 0
    %2490 = vmatprep.subr.bf16.mxu0 0
    %2491 = vmatpush1.bf16.msra.mxu0 0
    %2492 = vmatprep.subr.bf16.mxu0 0
    %2493 = vmatpush1.bf16.msra.mxu0 %v2477
    %2494 = vmatprep.subr.bf16.mxu0 0
    %2495 = vmatpush1.bf16.msra.mxu0 %v2476
    %2496 = vmatprep.subr.bf16.mxu0 0
    %2497 = vmatpush2.bf16.msra.mxu0 0
    %2498 = vmatprep.subr.bf16.mxu0 0
    %2499 = vmatpush2.bf16.msra.mxu0 0
    %2500 = vmatprep.subr.bf16.mxu0 0
    %2501 = vmatpush2.bf16.msra.mxu0 0
    %2502 = vmatprep.subr.bf16.mxu0 0
    %2503 = vmatpush2.bf16.msra.mxu0 0
    %2504 = vmatprep.subr.bf16.mxu0 0
    %2505 = vmatpush2.bf16.msra.mxu0 0
    %2506 = vmatprep.subr.bf16.mxu0 0
    %2507 = vmatpush2.bf16.msra.mxu0 0
    %2508 = vmatprep.subr.bf16.mxu0 0
    %2509 = vmatpush2.bf16.msra.mxu0 0
    %2510 = vmatprep.subr.bf16.mxu0 0
    %2511 = vmatpush2.bf16.msra.mxu0 0
    %2512 = vmatprep.mubr.bf16.mxu0 0
    %2513 = vmatmul.mubr.bf16.gmra.mxu0 %v2058
    %v2514 = vpop.f32.mrf.mxu0
    %v2515 = vadd.f32 %v2466, %v2514
    %v2516 = vpop.f32.mrf.mxu0
    %v2517 = vpop.f32.mrf.mxu0
    %v2518 = vadd.f32 %v2466, %v2517
    %v2519 = vpop.f32.mrf.mxu0
    %2520 = vdwg.mxu0
    %s2521 = scalar_lea.vmem %s8, 80
    %v2522 = vld [vmem:[%s2521] sm:$0xf]
    %v2523 = vld [vmem:[%s2521 + $0x4] sm:$0xf]
    %v2524 = vld [vmem:[%s2521 + $0x8] sm:$0xf]
    %v2525 = vld [vmem:[%s2521 + $0xc] sm:$0xf]
    %s2526 = scalar_lea.vmem %s9, 5
    %v2527 = vld [vmem:[%s2526] sm:$0x1]
    %v2529 = vlaneseq
    %v2530 = vshrl.u32 %v2529, 7
    %v2531 = vsub.s32 0, %v2530
    %v2532 = vrot.slane %v2527, %v2531
    %v2538 = vunpack.c.l.b16 %v2522
    %v2539 = vunpack.c.l.b16 %v2523
    %v2540 = vunpack.c.l.b16 %v2524
    %v2541 = vunpack.c.l.b16 %v2525
    %v2542 = vpack.c.b16 %v2539, %v2538
    %v2543 = vpack.c.b16 %v2541, %v2540
    %2546 = vmatprep.subr.bf16.mxu0 0
    %2547 = vmatpush1.bf16.msra.mxu0 0
    %2548 = vmatprep.subr.bf16.mxu0 0
    %2549 = vmatpush1.bf16.msra.mxu0 0
    %2550 = vmatprep.subr.bf16.mxu0 0
    %2551 = vmatpush1.bf16.msra.mxu0 0
    %2552 = vmatprep.subr.bf16.mxu0 0
    %2553 = vmatpush1.bf16.msra.mxu0 0
    %2554 = vmatprep.subr.bf16.mxu0 0
    %2555 = vmatpush1.bf16.msra.mxu0 0
    %2556 = vmatprep.subr.bf16.mxu0 0
    %2557 = vmatpush1.bf16.msra.mxu0 0
    %2558 = vmatprep.subr.bf16.mxu0 0
    %2559 = vmatpush1.bf16.msra.mxu0 %v2543
    %2560 = vmatprep.subr.bf16.mxu0 0
    %2561 = vmatpush1.bf16.msra.mxu0 %v2542
    %2562 = vmatprep.subr.bf16.mxu0 0
    %2563 = vmatpush2.bf16.msra.mxu0 0
    %2564 = vmatprep.subr.bf16.mxu0 0
    %2565 = vmatpush2.bf16.msra.mxu0 0
    %2566 = vmatprep.subr.bf16.mxu0 0
    %2567 = vmatpush2.bf16.msra.mxu0 0
    %2568 = vmatprep.subr.bf16.mxu0 0
    %2569 = vmatpush2.bf16.msra.mxu0 0
    %2570 = vmatprep.subr.bf16.mxu0 0
    %2571 = vmatpush2.bf16.msra.mxu0 0
    %2572 = vmatprep.subr.bf16.mxu0 0
    %2573 = vmatpush2.bf16.msra.mxu0 0
    %2574 = vmatprep.subr.bf16.mxu0 0
    %2575 = vmatpush2.bf16.msra.mxu0 0
    %2576 = vmatprep.subr.bf16.mxu0 0
    %2577 = vmatpush2.bf16.msra.mxu0 0
    %2578 = vmatprep.mubr.bf16.mxu0 0
    %2579 = vmatmul.mubr.bf16.gmra.mxu0 %v2058
    %v2580 = vpop.f32.mrf.mxu0
    %v2581 = vadd.f32 %v2532, %v2580
    %v2582 = vpop.f32.mrf.mxu0
    %v2583 = vpop.f32.mrf.mxu0
    %v2584 = vadd.f32 %v2532, %v2583
    %v2585 = vpop.f32.mrf.mxu0
    %2586 = vdwg.mxu0
    %v2587 = vpack.c.bf16 %v2452, %v2449
    %2588 = vxpose.xlu0.b32.start [1/16] %v2515, 128
    %2589 = vxpose.xlu0.b32.cont [2/16] %v2518, 128
    %2590 = vxpose.xlu0.b32.cont [3/16] 0.0, 128
    %2591 = vxpose.xlu0.b32.cont [4/16] 0.0, 128
    %2592 = vxpose.xlu0.b32.cont [5/16] 0.0, 128
    %2593 = vxpose.xlu0.b32.cont [6/16] 0.0, 128
    %2594 = vxpose.xlu0.b32.cont [7/16] 0.0, 128
    %2595 = vxpose.xlu0.b32.cont [8/16] 0.0, 128
    %2596 = vxpose.xlu0.b32.cont [9/16] 0.0, 128
    %2597 = vxpose.xlu0.b32.cont [10/16] 0.0, 128
    %2598 = vxpose.xlu0.b32.cont [11/16] 0.0, 128
    %2599 = vxpose.xlu0.b32.cont [12/16] 0.0, 128
    %2600 = vxpose.xlu0.b32.cont [13/16] 0.0, 128
    %2601 = vxpose.xlu0.b32.cont [14/16] 0.0, 128
    %2602 = vxpose.xlu0.b32.cont [15/16] 0.0, 128
    %2603 = vxpose.xlu0.b32.end [16/16] 0.0, 128
    %v2604 = vpop.trf.xlu0
    %v2605 = vpop.trf.xlu0
    %v2606 = vpop.trf.xlu0
    %v2607 = vpop.trf.xlu0
    %v2608 = vpop.trf.xlu0
    %v2609 = vpop.trf.xlu0
    %v2610 = vpop.trf.xlu0
    %v2611 = vpop.trf.xlu0
    %v2612 = vpop.trf.xlu0
    %v2613 = vpop.trf.xlu0
    %v2614 = vpop.trf.xlu0
    %v2615 = vpop.trf.xlu0
    %v2616 = vpop.trf.xlu0
    %v2617 = vpop.trf.xlu0
    %v2618 = vpop.trf.xlu0
    %v2619 = vpop.trf.xlu0
    %v2620 = vpack.c.bf16 %v2604, %v2604
    %v2622 = vsel %vm353, %v2587, 0
    %v2625 = vsel %vm357, %v2620, 0
    %2627 = vmatprep.subr.bf16.mxu0 0
    %2628 = vmatpush1.bf16.msra.mxu0 0
    %2629 = vmatprep.subr.bf16.mxu0 0
    %2630 = vmatpush1.bf16.msra.mxu0 0
    %2631 = vmatprep.subr.bf16.mxu0 0
    %2632 = vmatpush1.bf16.msra.mxu0 0
    %2633 = vmatprep.subr.bf16.mxu0 0
    %2634 = vmatpush1.bf16.msra.mxu0 0
    %2635 = vmatprep.subr.bf16.mxu0 0
    %2636 = vmatpush1.bf16.msra.mxu0 0
    %2637 = vmatprep.subr.bf16.mxu0 0
    %2638 = vmatpush1.bf16.msra.mxu0 0
    %2639 = vmatprep.subr.bf16.mxu0 0
    %2640 = vmatpush1.bf16.msra.mxu0 0
    %2641 = vmatprep.subr.bf16.mxu0 0
    %2642 = vmatpush1.bf16.msra.mxu0 %v2625
    %2643 = vmatprep.subr.bf16.mxu0 0
    %2644 = vmatpush2.bf16.msra.mxu0 0
    %2645 = vmatprep.subr.bf16.mxu0 0
    %2646 = vmatpush2.bf16.msra.mxu0 0
    %2647 = vmatprep.subr.bf16.mxu0 0
    %2648 = vmatpush2.bf16.msra.mxu0 0
    %2649 = vmatprep.subr.bf16.mxu0 0
    %2650 = vmatpush2.bf16.msra.mxu0 0
    %2651 = vmatprep.subr.bf16.mxu0 0
    %2652 = vmatpush2.bf16.msra.mxu0 0
    %2653 = vmatprep.subr.bf16.mxu0 0
    %2654 = vmatpush2.bf16.msra.mxu0 0
    %2655 = vmatprep.subr.bf16.mxu0 0
    %2656 = vmatpush2.bf16.msra.mxu0 0
    %2657 = vmatprep.subr.bf16.mxu0 0
    %2658 = vmatpush2.bf16.msra.mxu0 0
    %2659 = vmatprep.mubr.bf16.mxu0 0
    %2660 = vmatmul.mubr.bf16.gmra.mxu0 %v2622
    %v2661 = vpop.f32.mrf.mxu0
    %v2662 = vadd.f32 0.0, %v2661
    %v2663 = vpop.f32.mrf.mxu0
    %v2664 = vpop.f32.mrf.mxu0
    %v2665 = vadd.f32 0.0, %v2664
    %v2666 = vpop.f32.mrf.mxu0
    %2667 = vdwg.mxu0
    %v2668 = vmul.f32 %v2662, 0.35355338
    %v2669 = vmul.f32 %v2665, 0.35355338
    %v2670 = vadd.f32 %v2668, %v75
    %v2671 = vadd.f32 %v2669, %v76
    %v2672 = vsel %vm406, %v2670, -inf
    %2673 = vmax.xlane.f32.xlu0 %v2672
    %v2674 = vpop.xlane.xlu0 %2673
    %v2675 = vsel %vm406, %v2671, -inf
    %2676 = vmax.xlane.f32.xlu0 %v2675
    %v2677 = vpop.xlane.xlu0 %2676
    %v2678 = vsub.f32 %v2670, %v2674
    %v2679 = vsub.f32 %v2671, %v2677
    %v2680 = vmul.f32 %v2678, 1.442695
    %v2681 = vpow.pop %v2680
    %v2682 = vmul.f32 %v2679, 1.442695
    %v2683 = vpow.pop %v2682
    %v2684 = vsel %vm406, %v2681, 0.0
    %2685 = vadd.xlane.f32.xlu0 %v2684
    %v2686 = vpop.xlane.xlu0 %2685
    %v2687 = vsel %vm406, %v2683, 0.0
    %2688 = vadd.xlane.f32.xlu0 %v2687
    %v2689 = vpop.xlane.xlu0 %2688
    %v2690 = vrcp.pop %v2686
    %v2691 = vrcp.pop %v2689
    %v2692 = vmul.f32 %v2681, %v2690
    %v2693 = vmul.f32 %v2683, %v2691
    %v2694 = vpack.c.bf16 %v2693, %v2692
    %v2695 = vpack.c.bf16 %v2584, %v2581
    %v2697 = vsel %vm406, %v2694, 0
    %2699 = vmatprep.subr.bf16.mxu0 0
    %2700 = vmatpush1.bf16.msra.mxu0 0
    %2701 = vmatprep.subr.bf16.mxu0 0
    %2702 = vmatpush1.bf16.msra.mxu0 0
    %2703 = vmatprep.subr.bf16.mxu0 0
    %2704 = vmatpush1.bf16.msra.mxu0 0
    %2705 = vmatprep.subr.bf16.mxu0 0
    %2706 = vmatpush1.bf16.msra.mxu0 0
    %2707 = vmatprep.subr.bf16.mxu0 0
    %2708 = vmatpush1.bf16.msra.mxu0 0
    %2709 = vmatprep.subr.bf16.mxu0 0
    %2710 = vmatpush1.bf16.msra.mxu0 0
    %2711 = vmatprep.subr.bf16.mxu0 0
    %2712 = vmatpush1.bf16.msra.mxu0 0
    %2713 = vmatprep.subr.bf16.mxu0 0
    %2714 = vmatpush1.bf16.msra.mxu0 %v2695
    %2715 = vmatprep.subr.bf16.mxu0 0
    %2716 = vmatpush2.bf16.msra.mxu0 0
    %2717 = vmatprep.subr.bf16.mxu0 0
    %2718 = vmatpush2.bf16.msra.mxu0 0
    %2719 = vmatprep.subr.bf16.mxu0 0
    %2720 = vmatpush2.bf16.msra.mxu0 0
    %2721 = vmatprep.subr.bf16.mxu0 0
    %2722 = vmatpush2.bf16.msra.mxu0 0
    %2723 = vmatprep.subr.bf16.mxu0 0
    %2724 = vmatpush2.bf16.msra.mxu0 0
    %2725 = vmatprep.subr.bf16.mxu0 0
    %2726 = vmatpush2.bf16.msra.mxu0 0
    %2727 = vmatprep.subr.bf16.mxu0 0
    %2728 = vmatpush2.bf16.msra.mxu0 0
    %2729 = vmatprep.subr.bf16.mxu0 0
    %2730 = vmatpush2.bf16.msra.mxu0 0
    %2731 = vmatprep.mubr.bf16.mxu0 0
    %2732 = vmatmul.mubr.bf16.gmra.mxu0 %v2697
    %v2733 = vpop.f32.mrf.mxu0
    %v2734 = vadd.f32 0.0, %v2733
    %v2735 = vpop.f32.mrf.mxu0
    %v2736 = vpop.f32.mrf.mxu0
    %v2737 = vadd.f32 0.0, %v2736
    %v2738 = vpop.f32.mrf.mxu0
    %2739 = vdwg.mxu0
    %v2740 = vpack.c.bf16 %v2737, %v2734
    %s2741 = scalar_lea.vmem %s10, 20
    %v2742 = vld [vmem:[%s2741] sm:$0xf]
    %v2744 = vsel %vm353, %v2740, 0
    %v2747 = vsel %vm357, %v2742, 0
    %2749 = vmatprep.subr.bf16.mxu0 0
    %2750 = vmatpush1.bf16.msra.mxu0 0
    %2751 = vmatprep.subr.bf16.mxu0 0
    %2752 = vmatpush1.bf16.msra.mxu0 0
    %2753 = vmatprep.subr.bf16.mxu0 0
    %2754 = vmatpush1.bf16.msra.mxu0 0
    %2755 = vmatprep.subr.bf16.mxu0 0
    %2756 = vmatpush1.bf16.msra.mxu0 0
    %2757 = vmatprep.subr.bf16.mxu0 0
    %2758 = vmatpush1.bf16.msra.mxu0 0
    %2759 = vmatprep.subr.bf16.mxu0 0
    %2760 = vmatpush1.bf16.msra.mxu0 0
    %2761 = vmatprep.subr.bf16.mxu0 0
    %2762 = vmatpush1.bf16.msra.mxu0 0
    %2763 = vmatprep.subr.bf16.mxu0 0
    %2764 = vmatpush1.bf16.msra.mxu0 %v2747
    %2765 = vmatprep.subr.bf16.mxu0 0
    %2766 = vmatpush2.bf16.msra.mxu0 0
    %2767 = vmatprep.subr.bf16.mxu0 0
    %2768 = vmatpush2.bf16.msra.mxu0 0
    %2769 = vmatprep.subr.bf16.mxu0 0
    %2770 = vmatpush2.bf16.msra.mxu0 0
    %2771 = vmatprep.subr.bf16.mxu0 0
    %2772 = vmatpush2.bf16.msra.mxu0 0
    %2773 = vmatprep.subr.bf16.mxu0 0
    %2774 = vmatpush2.bf16.msra.mxu0 0
    %2775 = vmatprep.subr.bf16.mxu0 0
    %2776 = vmatpush2.bf16.msra.mxu0 0
    %2777 = vmatprep.subr.bf16.mxu0 0
    %2778 = vmatpush2.bf16.msra.mxu0 0
    %2779 = vmatprep.subr.bf16.mxu0 0
    %2780 = vmatpush2.bf16.msra.mxu0 0
    %2781 = vmatprep.mubr.bf16.mxu0 0
    %2782 = vmatmul.mubr.bf16.gmra.mxu0 %v2744
    %v2783 = vpop.f32.mrf.mxu0
    %v2784 = vadd.f32 0.0, %v2783
    %v2785 = vpop.f32.mrf.mxu0
    %v2786 = vpop.f32.mrf.mxu0
    %v2787 = vadd.f32 0.0, %v2786
    %v2788 = vpop.f32.mrf.mxu0
    %2789 = vdwg.mxu0
    %v2791 = vsel %vm353, %v2386, 0
    %v2794 = vsel %vm357, %v2388, 0
    %2796 = vmatprep.subr.bf16.mxu0 0
    %2797 = vmatpush1.bf16.msra.mxu0 0
    %2798 = vmatprep.subr.bf16.mxu0 0
    %2799 = vmatpush1.bf16.msra.mxu0 0
    %2800 = vmatprep.subr.bf16.mxu0 0
    %2801 = vmatpush1.bf16.msra.mxu0 0
    %2802 = vmatprep.subr.bf16.mxu0 0
    %2803 = vmatpush1.bf16.msra.mxu0 0
    %2804 = vmatprep.subr.bf16.mxu0 0
    %2805 = vmatpush1.bf16.msra.mxu0 0
    %2806 = vmatprep.subr.bf16.mxu0 0
    %2807 = vmatpush1.bf16.msra.mxu0 0
    %2808 = vmatprep.subr.bf16.mxu0 0
    %2809 = vmatpush1.bf16.msra.mxu0 0
    %2810 = vmatprep.subr.bf16.mxu0 0
    %2811 = vmatpush1.bf16.msra.mxu0 %v2794
    %2812 = vmatprep.subr.bf16.mxu0 0
    %2813 = vmatpush2.bf16.msra.mxu0 0
    %2814 = vmatprep.subr.bf16.mxu0 0
    %2815 = vmatpush2.bf16.msra.mxu0 0
    %2816 = vmatprep.subr.bf16.mxu0 0
    %2817 = vmatpush2.bf16.msra.mxu0 0
    %2818 = vmatprep.subr.bf16.mxu0 0
    %2819 = vmatpush2.bf16.msra.mxu0 0
    %2820 = vmatprep.subr.bf16.mxu0 0
    %2821 = vmatpush2.bf16.msra.mxu0 0
    %2822 = vmatprep.subr.bf16.mxu0 0
    %2823 = vmatpush2.bf16.msra.mxu0 0
    %2824 = vmatprep.subr.bf16.mxu0 0
    %2825 = vmatpush2.bf16.msra.mxu0 0
    %2826 = vmatprep.subr.bf16.mxu0 0
    %2827 = vmatpush2.bf16.msra.mxu0 0
    %2828 = vmatprep.mubr.bf16.mxu0 0
    %2829 = vmatmul.mubr.bf16.gmra.mxu0 %v2791
    %v2830 = vpop.f32.mrf.mxu0
    %v2831 = vadd.f32 %v2784, %v2830
    %v2832 = vpop.f32.mrf.mxu0
    %v2833 = vpop.f32.mrf.mxu0
    %v2834 = vadd.f32 %v2787, %v2833
    %v2835 = vpop.f32.mrf.mxu0
    %2836 = vdwg.mxu0
    %s2837 = scalar_lea.vmem %s4, 96
    %v2838 = vld [vmem:[%s2837] sm:$0xf]
    %v2839 = vld [vmem:[%s2837 + $0x4] sm:$0xf]
    %v2840 = vld [vmem:[%s2837 + $0x8] sm:$0xf]
    %v2841 = vld [vmem:[%s2837 + $0xc] sm:$0xf]
    %s2842 = scalar_lea.vmem %s5, 6
    %v2843 = vld [vmem:[%s2842] sm:$0x1]
    %v2845 = vlaneseq
    %v2846 = vshrl.u32 %v2845, 7
    %v2847 = vsub.s32 0, %v2846
    %v2848 = vrot.slane %v2843, %v2847
    %v2854 = vunpack.c.l.b16 %v2838
    %v2855 = vunpack.c.l.b16 %v2839
    %v2856 = vunpack.c.l.b16 %v2840
    %v2857 = vunpack.c.l.b16 %v2841
    %v2858 = vpack.c.b16 %v2855, %v2854
    %v2859 = vpack.c.b16 %v2857, %v2856
    %2862 = vmatprep.subr.bf16.mxu0 0
    %2863 = vmatpush1.bf16.msra.mxu0 0
    %2864 = vmatprep.subr.bf16.mxu0 0
    %2865 = vmatpush1.bf16.msra.mxu0 0
    %2866 = vmatprep.subr.bf16.mxu0 0
    %2867 = vmatpush1.bf16.msra.mxu0 0
    %2868 = vmatprep.subr.bf16.mxu0 0
    %2869 = vmatpush1.bf16.msra.mxu0 0
    %2870 = vmatprep.subr.bf16.mxu0 0
    %2871 = vmatpush1.bf16.msra.mxu0 0
    %2872 = vmatprep.subr.bf16.mxu0 0
    %2873 = vmatpush1.bf16.msra.mxu0 0
    %2874 = vmatprep.subr.bf16.mxu0 0
    %2875 = vmatpush1.bf16.msra.mxu0 %v2859
    %2876 = vmatprep.subr.bf16.mxu0 0
    %2877 = vmatpush1.bf16.msra.mxu0 %v2858
    %2878 = vmatprep.subr.bf16.mxu0 0
    %2879 = vmatpush2.bf16.msra.mxu0 0
    %2880 = vmatprep.subr.bf16.mxu0 0
    %2881 = vmatpush2.bf16.msra.mxu0 0
    %2882 = vmatprep.subr.bf16.mxu0 0
    %2883 = vmatpush2.bf16.msra.mxu0 0
    %2884 = vmatprep.subr.bf16.mxu0 0
    %2885 = vmatpush2.bf16.msra.mxu0 0
    %2886 = vmatprep.subr.bf16.mxu0 0
    %2887 = vmatpush2.bf16.msra.mxu0 0
    %2888 = vmatprep.subr.bf16.mxu0 0
    %2889 = vmatpush2.bf16.msra.mxu0 0
    %2890 = vmatprep.subr.bf16.mxu0 0
    %2891 = vmatpush2.bf16.msra.mxu0 0
    %2892 = vmatprep.subr.bf16.mxu0 0
    %2893 = vmatpush2.bf16.msra.mxu0 0
    %2894 = vmatprep.mubr.bf16.mxu0 0
    %2895 = vmatmul.mubr.bf16.gmra.mxu0 %v2058
    %v2896 = vpop.f32.mrf.mxu0
    %v2897 = vadd.f32 %v2848, %v2896
    %v2898 = vpop.f32.mrf.mxu0
    %v2899 = vpop.f32.mrf.mxu0
    %v2900 = vadd.f32 %v2848, %v2899
    %v2901 = vpop.f32.mrf.mxu0
    %2902 = vdwg.mxu0
    %s2903 = scalar_lea.vmem %s6, 96
    %v2904 = vld [vmem:[%s2903] sm:$0xf]
    %v2905 = vld [vmem:[%s2903 + $0x4] sm:$0xf]
    %v2906 = vld [vmem:[%s2903 + $0x8] sm:$0xf]
    %v2907 = vld [vmem:[%s2903 + $0xc] sm:$0xf]
    %s2908 = scalar_lea.vmem %s7, 6
    %v2909 = vld [vmem:[%s2908] sm:$0x1]
    %v2911 = vlaneseq
    %v2912 = vshrl.u32 %v2911, 7
    %v2913 = vsub.s32 0, %v2912
    %v2914 = vrot.slane %v2909, %v2913
    %v2920 = vunpack.c.l.b16 %v2904
    %v2921 = vunpack.c.l.b16 %v2905
    %v2922 = vunpack.c.l.b16 %v2906
    %v2923 = vunpack.c.l.b16 %v2907
    %v2924 = vpack.c.b16 %v2921, %v2920
    %v2925 = vpack.c.b16 %v2923, %v2922
    %2928 = vmatprep.subr.bf16.mxu0 0
    %2929 = vmatpush1.bf16.msra.mxu0 0
    %2930 = vmatprep.subr.bf16.mxu0 0
    %2931 = vmatpush1.bf16.msra.mxu0 0
    %2932 = vmatprep.subr.bf16.mxu0 0
    %2933 = vmatpush1.bf16.msra.mxu0 0
    %2934 = vmatprep.subr.bf16.mxu0 0
    %2935 = vmatpush1.bf16.msra.mxu0 0
    %2936 = vmatprep.subr.bf16.mxu0 0
    %2937 = vmatpush1.bf16.msra.mxu0 0
    %2938 = vmatprep.subr.bf16.mxu0 0
    %2939 = vmatpush1.bf16.msra.mxu0 0
    %2940 = vmatprep.subr.bf16.mxu0 0
    %2941 = vmatpush1.bf16.msra.mxu0 %v2925
    %2942 = vmatprep.subr.bf16.mxu0 0
    %2943 = vmatpush1.bf16.msra.mxu0 %v2924
    %2944 = vmatprep.subr.bf16.mxu0 0
    %2945 = vmatpush2.bf16.msra.mxu0 0
    %2946 = vmatprep.subr.bf16.mxu0 0
    %2947 = vmatpush2.bf16.msra.mxu0 0
    %2948 = vmatprep.subr.bf16.mxu0 0
    %2949 = vmatpush2.bf16.msra.mxu0 0
    %2950 = vmatprep.subr.bf16.mxu0 0
    %2951 = vmatpush2.bf16.msra.mxu0 0
    %2952 = vmatprep.subr.bf16.mxu0 0
    %2953 = vmatpush2.bf16.msra.mxu0 0
    %2954 = vmatprep.subr.bf16.mxu0 0
    %2955 = vmatpush2.bf16.msra.mxu0 0
    %2956 = vmatprep.subr.bf16.mxu0 0
    %2957 = vmatpush2.bf16.msra.mxu0 0
    %2958 = vmatprep.subr.bf16.mxu0 0
    %2959 = vmatpush2.bf16.msra.mxu0 0
    %2960 = vmatprep.mubr.bf16.mxu0 0
    %2961 = vmatmul.mubr.bf16.gmra.mxu0 %v2058
    %v2962 = vpop.f32.mrf.mxu0
    %v2963 = vadd.f32 %v2914, %v2962
    %v2964 = vpop.f32.mrf.mxu0
    %v2965 = vpop.f32.mrf.mxu0
    %v2966 = vadd.f32 %v2914, %v2965
    %v2967 = vpop.f32.mrf.mxu0
    %2968 = vdwg.mxu0
    %s2969 = scalar_lea.vmem %s8, 96
    %v2970 = vld [vmem:[%s2969] sm:$0xf]
    %v2971 = vld [vmem:[%s2969 + $0x4] sm:$0xf]
    %v2972 = vld [vmem:[%s2969 + $0x8] sm:$0xf]
    %v2973 = vld [vmem:[%s2969 + $0xc] sm:$0xf]
    %s2974 = scalar_lea.vmem %s9, 6
    %v2975 = vld [vmem:[%s2974] sm:$0x1]
    %v2977 = vlaneseq
    %v2978 = vshrl.u32 %v2977, 7
    %v2979 = vsub.s32 0, %v2978
    %v2980 = vrot.slane %v2975, %v2979
    %v2986 = vunpack.c.l.b16 %v2970
    %v2987 = vunpack.c.l.b16 %v2971
    %v2988 = vunpack.c.l.b16 %v2972
    %v2989 = vunpack.c.l.b16 %v2973
    %v2990 = vpack.c.b16 %v2987, %v2986
    %v2991 = vpack.c.b16 %v2989, %v2988
    %2994 = vmatprep.subr.bf16.mxu0 0
    %2995 = vmatpush1.bf16.msra.mxu0 0
    %2996 = vmatprep.subr.bf16.mxu0 0
    %2997 = vmatpush1.bf16.msra.mxu0 0
    %2998 = vmatprep.subr.bf16.mxu0 0
    %2999 = vmatpush1.bf16.msra.mxu0 0
    %3000 = vmatprep.subr.bf16.mxu0 0
    %3001 = vmatpush1.bf16.msra.mxu0 0
    %3002 = vmatprep.subr.bf16.mxu0 0
    %3003 = vmatpush1.bf16.msra.mxu0 0
    %3004 = vmatprep.subr.bf16.mxu0 0
    %3005 = vmatpush1.bf16.msra.mxu0 0
    %3006 = vmatprep.subr.bf16.mxu0 0
    %3007 = vmatpush1.bf16.msra.mxu0 %v2991
    %3008 = vmatprep.subr.bf16.mxu0 0
    %3009 = vmatpush1.bf16.msra.mxu0 %v2990
    %3010 = vmatprep.subr.bf16.mxu0 0
    %3011 = vmatpush2.bf16.msra.mxu0 0
    %3012 = vmatprep.subr.bf16.mxu0 0
    %3013 = vmatpush2.bf16.msra.mxu0 0
    %3014 = vmatprep.subr.bf16.mxu0 0
    %3015 = vmatpush2.bf16.msra.mxu0 0
    %3016 = vmatprep.subr.bf16.mxu0 0
    %3017 = vmatpush2.bf16.msra.mxu0 0
    %3018 = vmatprep.subr.bf16.mxu0 0
    %3019 = vmatpush2.bf16.msra.mxu0 0
    %3020 = vmatprep.subr.bf16.mxu0 0
    %3021 = vmatpush2.bf16.msra.mxu0 0
    %3022 = vmatprep.subr.bf16.mxu0 0
    %3023 = vmatpush2.bf16.msra.mxu0 0
    %3024 = vmatprep.subr.bf16.mxu0 0
    %3025 = vmatpush2.bf16.msra.mxu0 0
    %3026 = vmatprep.mubr.bf16.mxu0 0
    %3027 = vmatmul.mubr.bf16.gmra.mxu0 %v2058
    %v3028 = vpop.f32.mrf.mxu0
    %v3029 = vadd.f32 %v2980, %v3028
    %v3030 = vpop.f32.mrf.mxu0
    %v3031 = vpop.f32.mrf.mxu0
    %v3032 = vadd.f32 %v2980, %v3031
    %v3033 = vpop.f32.mrf.mxu0
    %3034 = vdwg.mxu0
    %v3035 = vpack.c.bf16 %v2900, %v2897
    %3036 = vxpose.xlu0.b32.start [1/16] %v2963, 128
    %3037 = vxpose.xlu0.b32.cont [2/16] %v2966, 128
    %3038 = vxpose.xlu0.b32.cont [3/16] 0.0, 128
    %3039 = vxpose.xlu0.b32.cont [4/16] 0.0, 128
    %3040 = vxpose.xlu0.b32.cont [5/16] 0.0, 128
    %3041 = vxpose.xlu0.b32.cont [6/16] 0.0, 128
    %3042 = vxpose.xlu0.b32.cont [7/16] 0.0, 128
    %3043 = vxpose.xlu0.b32.cont [8/16] 0.0, 128
    %3044 = vxpose.xlu0.b32.cont [9/16] 0.0, 128
    %3045 = vxpose.xlu0.b32.cont [10/16] 0.0, 128
    %3046 = vxpose.xlu0.b32.cont [11/16] 0.0, 128
    %3047 = vxpose.xlu0.b32.cont [12/16] 0.0, 128
    %3048 = vxpose.xlu0.b32.cont [13/16] 0.0, 128
    %3049 = vxpose.xlu0.b32.cont [14/16] 0.0, 128
    %3050 = vxpose.xlu0.b32.cont [15/16] 0.0, 128
    %3051 = vxpose.xlu0.b32.end [16/16] 0.0, 128
    %v3052 = vpop.trf.xlu0
    %v3053 = vpop.trf.xlu0
    %v3054 = vpop.trf.xlu0
    %v3055 = vpop.trf.xlu0
    %v3056 = vpop.trf.xlu0
    %v3057 = vpop.trf.xlu0
    %v3058 = vpop.trf.xlu0
    %v3059 = vpop.trf.xlu0
    %v3060 = vpop.trf.xlu0
    %v3061 = vpop.trf.xlu0
    %v3062 = vpop.trf.xlu0
    %v3063 = vpop.trf.xlu0
    %v3064 = vpop.trf.xlu0
    %v3065 = vpop.trf.xlu0
    %v3066 = vpop.trf.xlu0
    %v3067 = vpop.trf.xlu0
    %v3068 = vpack.c.bf16 %v3052, %v3052
    %v3070 = vsel %vm353, %v3035, 0
    %v3073 = vsel %vm357, %v3068, 0
    %3075 = vmatprep.subr.bf16.mxu0 0
    %3076 = vmatpush1.bf16.msra.mxu0 0
    %3077 = vmatprep.subr.bf16.mxu0 0
    %3078 = vmatpush1.bf16.msra.mxu0 0
    %3079 = vmatprep.subr.bf16.mxu0 0
    %3080 = vmatpush1.bf16.msra.mxu0 0
    %3081 = vmatprep.subr.bf16.mxu0 0
    %3082 = vmatpush1.bf16.msra.mxu0 0
    %3083 = vmatprep.subr.bf16.mxu0 0
    %3084 = vmatpush1.bf16.msra.mxu0 0
    %3085 = vmatprep.subr.bf16.mxu0 0
    %3086 = vmatpush1.bf16.msra.mxu0 0
    %3087 = vmatprep.subr.bf16.mxu0 0
    %3088 = vmatpush1.bf16.msra.mxu0 0
    %3089 = vmatprep.subr.bf16.mxu0 0
    %3090 = vmatpush1.bf16.msra.mxu0 %v3073
    %3091 = vmatprep.subr.bf16.mxu0 0
    %3092 = vmatpush2.bf16.msra.mxu0 0
    %3093 = vmatprep.subr.bf16.mxu0 0
    %3094 = vmatpush2.bf16.msra.mxu0 0
    %3095 = vmatprep.subr.bf16.mxu0 0
    %3096 = vmatpush2.bf16.msra.mxu0 0
    %3097 = vmatprep.subr.bf16.mxu0 0
    %3098 = vmatpush2.bf16.msra.mxu0 0
    %3099 = vmatprep.subr.bf16.mxu0 0
    %3100 = vmatpush2.bf16.msra.mxu0 0
    %3101 = vmatprep.subr.bf16.mxu0 0
    %3102 = vmatpush2.bf16.msra.mxu0 0
    %3103 = vmatprep.subr.bf16.mxu0 0
    %3104 = vmatpush2.bf16.msra.mxu0 0
    %3105 = vmatprep.subr.bf16.mxu0 0
    %3106 = vmatpush2.bf16.msra.mxu0 0
    %3107 = vmatprep.mubr.bf16.mxu0 0
    %3108 = vmatmul.mubr.bf16.gmra.mxu0 %v3070
    %v3109 = vpop.f32.mrf.mxu0
    %v3110 = vadd.f32 0.0, %v3109
    %v3111 = vpop.f32.mrf.mxu0
    %v3112 = vpop.f32.mrf.mxu0
    %v3113 = vadd.f32 0.0, %v3112
    %v3114 = vpop.f32.mrf.mxu0
    %3115 = vdwg.mxu0
    %v3116 = vmul.f32 %v3110, 0.35355338
    %v3117 = vmul.f32 %v3113, 0.35355338
    %v3118 = vadd.f32 %v3116, %v75
    %v3119 = vadd.f32 %v3117, %v76
    %v3120 = vsel %vm406, %v3118, -inf
    %3121 = vmax.xlane.f32.xlu0 %v3120
    %v3122 = vpop.xlane.xlu0 %3121
    %v3123 = vsel %vm406, %v3119, -inf
    %3124 = vmax.xlane.f32.xlu0 %v3123
    %v3125 = vpop.xlane.xlu0 %3124
    %v3126 = vsub.f32 %v3118, %v3122
    %v3127 = vsub.f32 %v3119, %v3125
    %v3128 = vmul.f32 %v3126, 1.442695
    %v3129 = vpow.pop %v3128
    %v3130 = vmul.f32 %v3127, 1.442695
    %v3131 = vpow.pop %v3130
    %v3132 = vsel %vm406, %v3129, 0.0
    %3133 = vadd.xlane.f32.xlu0 %v3132
    %v3134 = vpop.xlane.xlu0 %3133
    %v3135 = vsel %vm406, %v3131, 0.0
    %3136 = vadd.xlane.f32.xlu0 %v3135
    %v3137 = vpop.xlane.xlu0 %3136
    %v3138 = vrcp.pop %v3134
    %v3139 = vrcp.pop %v3137
    %v3140 = vmul.f32 %v3129, %v3138
    %v3141 = vmul.f32 %v3131, %v3139
    %v3142 = vpack.c.bf16 %v3141, %v3140
    %v3143 = vpack.c.bf16 %v3032, %v3029
    %v3145 = vsel %vm406, %v3142, 0
    %3147 = vmatprep.subr.bf16.mxu0 0
    %3148 = vmatpush1.bf16.msra.mxu0 0
    %3149 = vmatprep.subr.bf16.mxu0 0
    %3150 = vmatpush1.bf16.msra.mxu0 0
    %3151 = vmatprep.subr.bf16.mxu0 0
    %3152 = vmatpush1.bf16.msra.mxu0 0
    %3153 = vmatprep.subr.bf16.mxu0 0
    %3154 = vmatpush1.bf16.msra.mxu0 0
    %3155 = vmatprep.subr.bf16.mxu0 0
    %3156 = vmatpush1.bf16.msra.mxu0 0
    %3157 = vmatprep.subr.bf16.mxu0 0
    %3158 = vmatpush1.bf16.msra.mxu0 0
    %3159 = vmatprep.subr.bf16.mxu0 0
    %3160 = vmatpush1.bf16.msra.mxu0 0
    %3161 = vmatprep.subr.bf16.mxu0 0
    %3162 = vmatpush1.bf16.msra.mxu0 %v3143
    %3163 = vmatprep.subr.bf16.mxu0 0
    %3164 = vmatpush2.bf16.msra.mxu0 0
    %3165 = vmatprep.subr.bf16.mxu0 0
    %3166 = vmatpush2.bf16.msra.mxu0 0
    %3167 = vmatprep.subr.bf16.mxu0 0
    %3168 = vmatpush2.bf16.msra.mxu0 0
    %3169 = vmatprep.subr.bf16.mxu0 0
    %3170 = vmatpush2.bf16.msra.mxu0 0
    %3171 = vmatprep.subr.bf16.mxu0 0
    %3172 = vmatpush2.bf16.msra.mxu0 0
    %3173 = vmatprep.subr.bf16.mxu0 0
    %3174 = vmatpush2.bf16.msra.mxu0 0
    %3175 = vmatprep.subr.bf16.mxu0 0
    %3176 = vmatpush2.bf16.msra.mxu0 0
    %3177 = vmatprep.subr.bf16.mxu0 0
    %3178 = vmatpush2.bf16.msra.mxu0 0
    %3179 = vmatprep.mubr.bf16.mxu0 0
    %3180 = vmatmul.mubr.bf16.gmra.mxu0 %v3145
    %v3181 = vpop.f32.mrf.mxu0
    %v3182 = vadd.f32 0.0, %v3181
    %v3183 = vpop.f32.mrf.mxu0
    %v3184 = vpop.f32.mrf.mxu0
    %v3185 = vadd.f32 0.0, %v3184
    %v3186 = vpop.f32.mrf.mxu0
    %3187 = vdwg.mxu0
    %v3188 = vpack.c.bf16 %v3185, %v3182
    %s3189 = scalar_lea.vmem %s10, 24
    %v3190 = vld [vmem:[%s3189] sm:$0xf]
    %v3192 = vsel %vm353, %v3188, 0
    %v3195 = vsel %vm357, %v3190, 0
    %3197 = vmatprep.subr.bf16.mxu0 0
    %3198 = vmatpush1.bf16.msra.mxu0 0
    %3199 = vmatprep.subr.bf16.mxu0 0
    %3200 = vmatpush1.bf16.msra.mxu0 0
    %3201 = vmatprep.subr.bf16.mxu0 0
    %3202 = vmatpush1.bf16.msra.mxu0 0
    %3203 = vmatprep.subr.bf16.mxu0 0
    %3204 = vmatpush1.bf16.msra.mxu0 0
    %3205 = vmatprep.subr.bf16.mxu0 0
    %3206 = vmatpush1.bf16.msra.mxu0 0
    %3207 = vmatprep.subr.bf16.mxu0 0
    %3208 = vmatpush1.bf16.msra.mxu0 0
    %3209 = vmatprep.subr.bf16.mxu0 0
    %3210 = vmatpush1.bf16.msra.mxu0 0
    %3211 = vmatprep.subr.bf16.mxu0 0
    %3212 = vmatpush1.bf16.msra.mxu0 %v3195
    %3213 = vmatprep.subr.bf16.mxu0 0
    %3214 = vmatpush2.bf16.msra.mxu0 0
    %3215 = vmatprep.subr.bf16.mxu0 0
    %3216 = vmatpush2.bf16.msra.mxu0 0
    %3217 = vmatprep.subr.bf16.mxu0 0
    %3218 = vmatpush2.bf16.msra.mxu0 0
    %3219 = vmatprep.subr.bf16.mxu0 0
    %3220 = vmatpush2.bf16.msra.mxu0 0
    %3221 = vmatprep.subr.bf16.mxu0 0
    %3222 = vmatpush2.bf16.msra.mxu0 0
    %3223 = vmatprep.subr.bf16.mxu0 0
    %3224 = vmatpush2.bf16.msra.mxu0 0
    %3225 = vmatprep.subr.bf16.mxu0 0
    %3226 = vmatpush2.bf16.msra.mxu0 0
    %3227 = vmatprep.subr.bf16.mxu0 0
    %3228 = vmatpush2.bf16.msra.mxu0 0
    %3229 = vmatprep.mubr.bf16.mxu0 0
    %3230 = vmatmul.mubr.bf16.gmra.mxu0 %v3192
    %v3231 = vpop.f32.mrf.mxu0
    %v3232 = vadd.f32 0.0, %v3231
    %v3233 = vpop.f32.mrf.mxu0
    %v3234 = vpop.f32.mrf.mxu0
    %v3235 = vadd.f32 0.0, %v3234
    %v3236 = vpop.f32.mrf.mxu0
    %3237 = vdwg.mxu0
    %v3238 = vadd.f32 %v2831, %v3232
    %v3239 = vadd.f32 %v2834, %v3235
    %s3240 = scalar_lea.vmem %s4, 112
    %v3241 = vld [vmem:[%s3240] sm:$0xf]
    %v3242 = vld [vmem:[%s3240 + $0x4] sm:$0xf]
    %v3243 = vld [vmem:[%s3240 + $0x8] sm:$0xf]
    %v3244 = vld [vmem:[%s3240 + $0xc] sm:$0xf]
    %s3245 = scalar_lea.vmem %s5, 7
    %v3246 = vld [vmem:[%s3245] sm:$0x1]
    %v3248 = vlaneseq
    %v3249 = vshrl.u32 %v3248, 7
    %v3250 = vsub.s32 0, %v3249
    %v3251 = vrot.slane %v3246, %v3250
    %v3257 = vunpack.c.l.b16 %v3241
    %v3258 = vunpack.c.l.b16 %v3242
    %v3259 = vunpack.c.l.b16 %v3243
    %v3260 = vunpack.c.l.b16 %v3244
    %v3261 = vpack.c.b16 %v3258, %v3257
    %v3262 = vpack.c.b16 %v3260, %v3259
    %3265 = vmatprep.subr.bf16.mxu0 0
    %3266 = vmatpush1.bf16.msra.mxu0 0
    %3267 = vmatprep.subr.bf16.mxu0 0
    %3268 = vmatpush1.bf16.msra.mxu0 0
    %3269 = vmatprep.subr.bf16.mxu0 0
    %3270 = vmatpush1.bf16.msra.mxu0 0
    %3271 = vmatprep.subr.bf16.mxu0 0
    %3272 = vmatpush1.bf16.msra.mxu0 0
    %3273 = vmatprep.subr.bf16.mxu0 0
    %3274 = vmatpush1.bf16.msra.mxu0 0
    %3275 = vmatprep.subr.bf16.mxu0 0
    %3276 = vmatpush1.bf16.msra.mxu0 0
    %3277 = vmatprep.subr.bf16.mxu0 0
    %3278 = vmatpush1.bf16.msra.mxu0 %v3262
    %3279 = vmatprep.subr.bf16.mxu0 0
    %3280 = vmatpush1.bf16.msra.mxu0 %v3261
    %3281 = vmatprep.subr.bf16.mxu0 0
    %3282 = vmatpush2.bf16.msra.mxu0 0
    %3283 = vmatprep.subr.bf16.mxu0 0
    %3284 = vmatpush2.bf16.msra.mxu0 0
    %3285 = vmatprep.subr.bf16.mxu0 0
    %3286 = vmatpush2.bf16.msra.mxu0 0
    %3287 = vmatprep.subr.bf16.mxu0 0
    %3288 = vmatpush2.bf16.msra.mxu0 0
    %3289 = vmatprep.subr.bf16.mxu0 0
    %3290 = vmatpush2.bf16.msra.mxu0 0
    %3291 = vmatprep.subr.bf16.mxu0 0
    %3292 = vmatpush2.bf16.msra.mxu0 0
    %3293 = vmatprep.subr.bf16.mxu0 0
    %3294 = vmatpush2.bf16.msra.mxu0 0
    %3295 = vmatprep.subr.bf16.mxu0 0
    %3296 = vmatpush2.bf16.msra.mxu0 0
    %3297 = vmatprep.mubr.bf16.mxu0 0
    %3298 = vmatmul.mubr.bf16.gmra.mxu0 %v2058
    %v3299 = vpop.f32.mrf.mxu0
    %v3300 = vadd.f32 %v3251, %v3299
    %v3301 = vpop.f32.mrf.mxu0
    %v3302 = vpop.f32.mrf.mxu0
    %v3303 = vadd.f32 %v3251, %v3302
    %v3304 = vpop.f32.mrf.mxu0
    %3305 = vdwg.mxu0
    %s3306 = scalar_lea.vmem %s6, 112
    %v3307 = vld [vmem:[%s3306] sm:$0xf]
    %v3308 = vld [vmem:[%s3306 + $0x4] sm:$0xf]
    %v3309 = vld [vmem:[%s3306 + $0x8] sm:$0xf]
    %v3310 = vld [vmem:[%s3306 + $0xc] sm:$0xf]
    %s3311 = scalar_lea.vmem %s7, 7
    %v3312 = vld [vmem:[%s3311] sm:$0x1]
    %v3314 = vlaneseq
    %v3315 = vshrl.u32 %v3314, 7
    %v3316 = vsub.s32 0, %v3315
    %v3317 = vrot.slane %v3312, %v3316
    %v3323 = vunpack.c.l.b16 %v3307
    %v3324 = vunpack.c.l.b16 %v3308
    %v3325 = vunpack.c.l.b16 %v3309
    %v3326 = vunpack.c.l.b16 %v3310
    %v3327 = vpack.c.b16 %v3324, %v3323
    %v3328 = vpack.c.b16 %v3326, %v3325
    %3331 = vmatprep.subr.bf16.mxu0 0
    %3332 = vmatpush1.bf16.msra.mxu0 0
    %3333 = vmatprep.subr.bf16.mxu0 0
    %3334 = vmatpush1.bf16.msra.mxu0 0
    %3335 = vmatprep.subr.bf16.mxu0 0
    %3336 = vmatpush1.bf16.msra.mxu0 0
    %3337 = vmatprep.subr.bf16.mxu0 0
    %3338 = vmatpush1.bf16.msra.mxu0 0
    %3339 = vmatprep.subr.bf16.mxu0 0
    %3340 = vmatpush1.bf16.msra.mxu0 0
    %3341 = vmatprep.subr.bf16.mxu0 0
    %3342 = vmatpush1.bf16.msra.mxu0 0
    %3343 = vmatprep.subr.bf16.mxu0 0
    %3344 = vmatpush1.bf16.msra.mxu0 %v3328
    %3345 = vmatprep.subr.bf16.mxu0 0
    %3346 = vmatpush1.bf16.msra.mxu0 %v3327
    %3347 = vmatprep.subr.bf16.mxu0 0
    %3348 = vmatpush2.bf16.msra.mxu0 0
    %3349 = vmatprep.subr.bf16.mxu0 0
    %3350 = vmatpush2.bf16.msra.mxu0 0
    %3351 = vmatprep.subr.bf16.mxu0 0
    %3352 = vmatpush2.bf16.msra.mxu0 0
    %3353 = vmatprep.subr.bf16.mxu0 0
    %3354 = vmatpush2.bf16.msra.mxu0 0
    %3355 = vmatprep.subr.bf16.mxu0 0
    %3356 = vmatpush2.bf16.msra.mxu0 0
    %3357 = vmatprep.subr.bf16.mxu0 0
    %3358 = vmatpush2.bf16.msra.mxu0 0
    %3359 = vmatprep.subr.bf16.mxu0 0
    %3360 = vmatpush2.bf16.msra.mxu0 0
    %3361 = vmatprep.subr.bf16.mxu0 0
    %3362 = vmatpush2.bf16.msra.mxu0 0
    %3363 = vmatprep.mubr.bf16.mxu0 0
    %3364 = vmatmul.mubr.bf16.gmra.mxu0 %v2058
    %v3365 = vpop.f32.mrf.mxu0
    %v3366 = vadd.f32 %v3317, %v3365
    %v3367 = vpop.f32.mrf.mxu0
    %v3368 = vpop.f32.mrf.mxu0
    %v3369 = vadd.f32 %v3317, %v3368
    %v3370 = vpop.f32.mrf.mxu0
    %3371 = vdwg.mxu0
    %s3372 = scalar_lea.vmem %s8, 112
    %v3373 = vld [vmem:[%s3372] sm:$0xf]
    %v3374 = vld [vmem:[%s3372 + $0x4] sm:$0xf]
    %v3375 = vld [vmem:[%s3372 + $0x8] sm:$0xf]
    %v3376 = vld [vmem:[%s3372 + $0xc] sm:$0xf]
    %s3377 = scalar_lea.vmem %s9, 7
    %v3378 = vld [vmem:[%s3377] sm:$0x1]
    %v3380 = vlaneseq
    %v3381 = vshrl.u32 %v3380, 7
    %v3382 = vsub.s32 0, %v3381
    %v3383 = vrot.slane %v3378, %v3382
    %v3389 = vunpack.c.l.b16 %v3373
    %v3390 = vunpack.c.l.b16 %v3374
    %v3391 = vunpack.c.l.b16 %v3375
    %v3392 = vunpack.c.l.b16 %v3376
    %v3393 = vpack.c.b16 %v3390, %v3389
    %v3394 = vpack.c.b16 %v3392, %v3391
    %3397 = vmatprep.subr.bf16.mxu0 0
    %3398 = vmatpush1.bf16.msra.mxu0 0
    %3399 = vmatprep.subr.bf16.mxu0 0
    %3400 = vmatpush1.bf16.msra.mxu0 0
    %3401 = vmatprep.subr.bf16.mxu0 0
    %3402 = vmatpush1.bf16.msra.mxu0 0
    %3403 = vmatprep.subr.bf16.mxu0 0
    %3404 = vmatpush1.bf16.msra.mxu0 0
    %3405 = vmatprep.subr.bf16.mxu0 0
    %3406 = vmatpush1.bf16.msra.mxu0 0
    %3407 = vmatprep.subr.bf16.mxu0 0
    %3408 = vmatpush1.bf16.msra.mxu0 0
    %3409 = vmatprep.subr.bf16.mxu0 0
    %3410 = vmatpush1.bf16.msra.mxu0 %v3394
    %3411 = vmatprep.subr.bf16.mxu0 0
    %3412 = vmatpush1.bf16.msra.mxu0 %v3393
    %3413 = vmatprep.subr.bf16.mxu0 0
    %3414 = vmatpush2.bf16.msra.mxu0 0
    %3415 = vmatprep.subr.bf16.mxu0 0
    %3416 = vmatpush2.bf16.msra.mxu0 0
    %3417 = vmatprep.subr.bf16.mxu0 0
    %3418 = vmatpush2.bf16.msra.mxu0 0
    %3419 = vmatprep.subr.bf16.mxu0 0
    %3420 = vmatpush2.bf16.msra.mxu0 0
    %3421 = vmatprep.subr.bf16.mxu0 0
    %3422 = vmatpush2.bf16.msra.mxu0 0
    %3423 = vmatprep.subr.bf16.mxu0 0
    %3424 = vmatpush2.bf16.msra.mxu0 0
    %3425 = vmatprep.subr.bf16.mxu0 0
    %3426 = vmatpush2.bf16.msra.mxu0 0
    %3427 = vmatprep.subr.bf16.mxu0 0
    %3428 = vmatpush2.bf16.msra.mxu0 0
    %3429 = vmatprep.mubr.bf16.mxu0 0
    %3430 = vmatmul.mubr.bf16.gmra.mxu0 %v2058
    %v3431 = vpop.f32.mrf.mxu0
    %v3432 = vadd.f32 %v3383, %v3431
    %v3433 = vpop.f32.mrf.mxu0
    %v3434 = vpop.f32.mrf.mxu0
    %v3435 = vadd.f32 %v3383, %v3434
    %v3436 = vpop.f32.mrf.mxu0
    %3437 = vdwg.mxu0
    %v3438 = vpack.c.bf16 %v3303, %v3300
    %3439 = vxpose.xlu0.b32.start [1/16] %v3366, 128
    %3440 = vxpose.xlu0.b32.cont [2/16] %v3369, 128
    %3441 = vxpose.xlu0.b32.cont [3/16] 0.0, 128
    %3442 = vxpose.xlu0.b32.cont [4/16] 0.0, 128
    %3443 = vxpose.xlu0.b32.cont [5/16] 0.0, 128
    %3444 = vxpose.xlu0.b32.cont [6/16] 0.0, 128
    %3445 = vxpose.xlu0.b32.cont [7/16] 0.0, 128
    %3446 = vxpose.xlu0.b32.cont [8/16] 0.0, 128
    %3447 = vxpose.xlu0.b32.cont [9/16] 0.0, 128
    %3448 = vxpose.xlu0.b32.cont [10/16] 0.0, 128
    %3449 = vxpose.xlu0.b32.cont [11/16] 0.0, 128
    %3450 = vxpose.xlu0.b32.cont [12/16] 0.0, 128
    %3451 = vxpose.xlu0.b32.cont [13/16] 0.0, 128
    %3452 = vxpose.xlu0.b32.cont [14/16] 0.0, 128
    %3453 = vxpose.xlu0.b32.cont [15/16] 0.0, 128
    %3454 = vxpose.xlu0.b32.end [16/16] 0.0, 128
    %v3455 = vpop.trf.xlu0
    %v3456 = vpop.trf.xlu0
    %v3457 = vpop.trf.xlu0
    %v3458 = vpop.trf.xlu0
    %v3459 = vpop.trf.xlu0
    %v3460 = vpop.trf.xlu0
    %v3461 = vpop.trf.xlu0
    %v3462 = vpop.trf.xlu0
    %v3463 = vpop.trf.xlu0
    %v3464 = vpop.trf.xlu0
    %v3465 = vpop.trf.xlu0
    %v3466 = vpop.trf.xlu0
    %v3467 = vpop.trf.xlu0
    %v3468 = vpop.trf.xlu0
    %v3469 = vpop.trf.xlu0
    %v3470 = vpop.trf.xlu0
    %v3471 = vpack.c.bf16 %v3455, %v3455
    %v3473 = vsel %vm353, %v3438, 0
    %v3476 = vsel %vm357, %v3471, 0
    %3478 = vmatprep.subr.bf16.mxu0 0
    %3479 = vmatpush1.bf16.msra.mxu0 0
    %3480 = vmatprep.subr.bf16.mxu0 0
    %3481 = vmatpush1.bf16.msra.mxu0 0
    %3482 = vmatprep.subr.bf16.mxu0 0
    %3483 = vmatpush1.bf16.msra.mxu0 0
    %3484 = vmatprep.subr.bf16.mxu0 0
    %3485 = vmatpush1.bf16.msra.mxu0 0
    %3486 = vmatprep.subr.bf16.mxu0 0
    %3487 = vmatpush1.bf16.msra.mxu0 0
    %3488 = vmatprep.subr.bf16.mxu0 0
    %3489 = vmatpush1.bf16.msra.mxu0 0
    %3490 = vmatprep.subr.bf16.mxu0 0
    %3491 = vmatpush1.bf16.msra.mxu0 0
    %3492 = vmatprep.subr.bf16.mxu0 0
    %3493 = vmatpush1.bf16.msra.mxu0 %v3476
    %3494 = vmatprep.subr.bf16.mxu0 0
    %3495 = vmatpush2.bf16.msra.mxu0 0
    %3496 = vmatprep.subr.bf16.mxu0 0
    %3497 = vmatpush2.bf16.msra.mxu0 0
    %3498 = vmatprep.subr.bf16.mxu0 0
    %3499 = vmatpush2.bf16.msra.mxu0 0
    %3500 = vmatprep.subr.bf16.mxu0 0
    %3501 = vmatpush2.bf16.msra.mxu0 0
    %3502 = vmatprep.subr.bf16.mxu0 0
    %3503 = vmatpush2.bf16.msra.mxu0 0
    %3504 = vmatprep.subr.bf16.mxu0 0
    %3505 = vmatpush2.bf16.msra.mxu0 0
    %3506 = vmatprep.subr.bf16.mxu0 0
    %3507 = vmatpush2.bf16.msra.mxu0 0
    %3508 = vmatprep.subr.bf16.mxu0 0
    %3509 = vmatpush2.bf16.msra.mxu0 0
    %3510 = vmatprep.mubr.bf16.mxu0 0
    %3511 = vmatmul.mubr.bf16.gmra.mxu0 %v3473
    %v3512 = vpop.f32.mrf.mxu0
    %v3513 = vadd.f32 0.0, %v3512
    %v3514 = vpop.f32.mrf.mxu0
    %v3515 = vpop.f32.mrf.mxu0
    %v3516 = vadd.f32 0.0, %v3515
    %v3517 = vpop.f32.mrf.mxu0
    %3518 = vdwg.mxu0
    %v3519 = vmul.f32 %v3513, 0.35355338
    %v3520 = vmul.f32 %v3516, 0.35355338
    %v3521 = vadd.f32 %v3519, %v75
    %v3522 = vadd.f32 %v3520, %v76
    %v3523 = vsel %vm406, %v3521, -inf
    %3524 = vmax.xlane.f32.xlu0 %v3523
    %v3525 = vpop.xlane.xlu0 %3524
    %v3526 = vsel %vm406, %v3522, -inf
    %3527 = vmax.xlane.f32.xlu0 %v3526
    %v3528 = vpop.xlane.xlu0 %3527
    %v3529 = vsub.f32 %v3521, %v3525
    %v3530 = vsub.f32 %v3522, %v3528
    %v3531 = vmul.f32 %v3529, 1.442695
    %v3532 = vpow.pop %v3531
    %v3533 = vmul.f32 %v3530, 1.442695
    %v3534 = vpow.pop %v3533
    %v3535 = vsel %vm406, %v3532, 0.0
    %3536 = vadd.xlane.f32.xlu0 %v3535
    %v3537 = vpop.xlane.xlu0 %3536
    %v3538 = vsel %vm406, %v3534, 0.0
    %3539 = vadd.xlane.f32.xlu0 %v3538
    %v3540 = vpop.xlane.xlu0 %3539
    %v3541 = vrcp.pop %v3537
    %v3542 = vrcp.pop %v3540
    %v3543 = vmul.f32 %v3532, %v3541
    %v3544 = vmul.f32 %v3534, %v3542
    %v3545 = vpack.c.bf16 %v3544, %v3543
    %v3546 = vpack.c.bf16 %v3435, %v3432
    %v3548 = vsel %vm406, %v3545, 0
    %3550 = vmatprep.subr.bf16.mxu0 0
    %3551 = vmatpush1.bf16.msra.mxu0 0
    %3552 = vmatprep.subr.bf16.mxu0 0
    %3553 = vmatpush1.bf16.msra.mxu0 0
    %3554 = vmatprep.subr.bf16.mxu0 0
    %3555 = vmatpush1.bf16.msra.mxu0 0
    %3556 = vmatprep.subr.bf16.mxu0 0
    %3557 = vmatpush1.bf16.msra.mxu0 0
    %3558 = vmatprep.subr.bf16.mxu0 0
    %3559 = vmatpush1.bf16.msra.mxu0 0
    %3560 = vmatprep.subr.bf16.mxu0 0
    %3561 = vmatpush1.bf16.msra.mxu0 0
    %3562 = vmatprep.subr.bf16.mxu0 0
    %3563 = vmatpush1.bf16.msra.mxu0 0
    %3564 = vmatprep.subr.bf16.mxu0 0
    %3565 = vmatpush1.bf16.msra.mxu0 %v3546
    %3566 = vmatprep.subr.bf16.mxu0 0
    %3567 = vmatpush2.bf16.msra.mxu0 0
    %3568 = vmatprep.subr.bf16.mxu0 0
    %3569 = vmatpush2.bf16.msra.mxu0 0
    %3570 = vmatprep.subr.bf16.mxu0 0
    %3571 = vmatpush2.bf16.msra.mxu0 0
    %3572 = vmatprep.subr.bf16.mxu0 0
    %3573 = vmatpush2.bf16.msra.mxu0 0
    %3574 = vmatprep.subr.bf16.mxu0 0
    %3575 = vmatpush2.bf16.msra.mxu0 0
    %3576 = vmatprep.subr.bf16.mxu0 0
    %3577 = vmatpush2.bf16.msra.mxu0 0
    %3578 = vmatprep.subr.bf16.mxu0 0
    %3579 = vmatpush2.bf16.msra.mxu0 0
    %3580 = vmatprep.subr.bf16.mxu0 0
    %3581 = vmatpush2.bf16.msra.mxu0 0
    %3582 = vmatprep.mubr.bf16.mxu0 0
    %3583 = vmatmul.mubr.bf16.gmra.mxu0 %v3548
    %v3584 = vpop.f32.mrf.mxu0
    %v3585 = vadd.f32 0.0, %v3584
    %v3586 = vpop.f32.mrf.mxu0
    %v3587 = vpop.f32.mrf.mxu0
    %v3588 = vadd.f32 0.0, %v3587
    %v3589 = vpop.f32.mrf.mxu0
    %3590 = vdwg.mxu0
    %v3591 = vpack.c.bf16 %v3588, %v3585
    %s3592 = scalar_lea.vmem %s10, 28
    %v3593 = vld [vmem:[%s3592] sm:$0xf]
    %v3595 = vsel %vm353, %v3591, 0
    %v3598 = vsel %vm357, %v3593, 0
    %3600 = vmatprep.subr.bf16.mxu0 0
    %3601 = vmatpush1.bf16.msra.mxu0 0
    %3602 = vmatprep.subr.bf16.mxu0 0
    %3603 = vmatpush1.bf16.msra.mxu0 0
    %3604 = vmatprep.subr.bf16.mxu0 0
    %3605 = vmatpush1.bf16.msra.mxu0 0
    %3606 = vmatprep.subr.bf16.mxu0 0
    %3607 = vmatpush1.bf16.msra.mxu0 0
    %3608 = vmatprep.subr.bf16.mxu0 0
    %3609 = vmatpush1.bf16.msra.mxu0 0
    %3610 = vmatprep.subr.bf16.mxu0 0
    %3611 = vmatpush1.bf16.msra.mxu0 0
    %3612 = vmatprep.subr.bf16.mxu0 0
    %3613 = vmatpush1.bf16.msra.mxu0 0
    %3614 = vmatprep.subr.bf16.mxu0 0
    %3615 = vmatpush1.bf16.msra.mxu0 %v3598
    %3616 = vmatprep.subr.bf16.mxu0 0
    %3617 = vmatpush2.bf16.msra.mxu0 0
    %3618 = vmatprep.subr.bf16.mxu0 0
    %3619 = vmatpush2.bf16.msra.mxu0 0
    %3620 = vmatprep.subr.bf16.mxu0 0
    %3621 = vmatpush2.bf16.msra.mxu0 0
    %3622 = vmatprep.subr.bf16.mxu0 0
    %3623 = vmatpush2.bf16.msra.mxu0 0
    %3624 = vmatprep.subr.bf16.mxu0 0
    %3625 = vmatpush2.bf16.msra.mxu0 0
    %3626 = vmatprep.subr.bf16.mxu0 0
    %3627 = vmatpush2.bf16.msra.mxu0 0
    %3628 = vmatprep.subr.bf16.mxu0 0
    %3629 = vmatpush2.bf16.msra.mxu0 0
    %3630 = vmatprep.subr.bf16.mxu0 0
    %3631 = vmatpush2.bf16.msra.mxu0 0
    %3632 = vmatprep.mubr.bf16.mxu0 0
    %3633 = vmatmul.mubr.bf16.gmra.mxu0 %v3595
    %v3634 = vpop.f32.mrf.mxu0
    %v3635 = vadd.f32 0.0, %v3634
    %v3636 = vpop.f32.mrf.mxu0
    %v3637 = vpop.f32.mrf.mxu0
    %v3638 = vadd.f32 0.0, %v3637
    %v3639 = vpop.f32.mrf.mxu0
    %3640 = vdwg.mxu0
    %v3641 = vadd.f32 %v3238, %v3635
    %v3642 = vadd.f32 %v3239, %v3638
    %v3643 = vadd.f32 %v2029, %v3641
    %v3644 = vadd.f32 %v2030, %v3642
    %s3645 = scalar_lea.vmem %s11, 1
    %v3646 = vld [vmem:[%s3645] sm:$0x1]
    %v3648 = vlaneseq
    %v3649 = vshrl.u32 %v3648, 7
    %v3650 = vsub.s32 0, %v3649
    %v3651 = vrot.slane %v3646, %v3650
    %v3653 = vadd.f32 %v3643, %v3651
    %v3654 = vadd.f32 %v3644, %v3651
    %s3655 = scalar_lea.vmem %s12, 1
    %v3656 = vld [vmem:[%s3655] sm:$0x1]
    %s3657 = scalar_lea.vmem %s13, 1
    %v3658 = vld [vmem:[%s3657] sm:$0x1]
    %v3659 = vsel %vm79, %v3653, 0.0
    %3660 = vadd.xlane.f32.xlu0 %v3659
    %v3661 = vpop.xlane.xlu0 %3660
    %v3662 = vsel %vm79, %v3654, 0.0
    %3663 = vadd.xlane.f32.xlu0 %v3662
    %v3664 = vpop.xlane.xlu0 %3663
    %v3665 = vmul.f32 %v3661, %v86
    %v3666 = vmul.f32 %v3664, %v86
    %v3667 = vsub.f32 %v3653, %v3665
    %v3668 = vsub.f32 %v3654, %v3666
    %v3669 = vmul.f32 %v3667, %v3667
    %v3670 = vmul.f32 %v3668, %v3668
    %v3671 = vsel %vm79, %v3669, 0.0
    %3672 = vadd.xlane.f32.xlu0 %v3671
    %v3673 = vpop.xlane.xlu0 %3672
    %v3674 = vsel %vm79, %v3670, 0.0
    %3675 = vadd.xlane.f32.xlu0 %v3674
    %v3676 = vpop.xlane.xlu0 %3675
    %v3677 = vmul.f32 %v3673, %v86
    %v3678 = vmul.f32 %v3676, %v86
    %v3679 = vadd.f32 %v3677, 1e-05
    %v3680 = vadd.f32 %v3678, 1e-05
    %v3681 = vrsqrt.pop %v3679
    %v3682 = vrsqrt.pop %v3680
    %v3683 = vmul.f32 %v3667, %v3681
    %v3684 = vmul.f32 %v3668, %v3682
    %v3686 = vlaneseq
    %v3687 = vshrl.u32 %v3686, 7
    %v3688 = vsub.s32 0, %v3687
    %v3689 = vrot.slane %v3656, %v3688
    %v3691 = vmul.f32 %v3683, %v3689
    %v3692 = vmul.f32 %v3684, %v3689
    %v3694 = vlaneseq
    %v3695 = vshrl.u32 %v3694, 7
    %v3696 = vsub.s32 0, %v3695
    %v3697 = vrot.slane %v3658, %v3696
    %v3699 = vadd.f32 %v3691, %v3697
    %v3700 = vadd.f32 %v3692, %v3697
    %v3701 = vpack.c.bf16 %v3700, %v3699
    %s3702 = scalar_lea.vmem %s14, 16
    %v3703 = vld [vmem:[%s3702] sm:$0xf]
    %v3704 = vld [vmem:[%s3702 + $0x4] sm:$0xf]
    %v3705 = vld [vmem:[%s3702 + $0x8] sm:$0xf]
    %v3706 = vld [vmem:[%s3702 + $0xc] sm:$0xf]
    %s3707 = scalar_lea.vmem %s15, 1
    %v3708 = vld [vmem:[%s3707] sm:$0x1]
    %v3710 = vlaneseq
    %v3711 = vshrl.u32 %v3710, 7
    %v3712 = vsub.s32 0, %v3711
    %v3713 = vrot.slane %v3708, %v3712
    %v3719 = vunpack.c.l.b16 %v3703
    %v3720 = vunpack.c.l.b16 %v3704
    %v3721 = vunpack.c.l.b16 %v3705
    %v3722 = vunpack.c.l.b16 %v3706
    %v3723 = vpack.c.b16 %v3720, %v3719
    %v3724 = vpack.c.b16 %v3722, %v3721
    %v3728 = vsel %vm79, %v3701, 0
    %3730 = vmatprep.subr.bf16.mxu0 0
    %3731 = vmatpush1.bf16.msra.mxu0 0
    %3732 = vmatprep.subr.bf16.mxu0 0
    %3733 = vmatpush1.bf16.msra.mxu0 0
    %3734 = vmatprep.subr.bf16.mxu0 0
    %3735 = vmatpush1.bf16.msra.mxu0 0
    %3736 = vmatprep.subr.bf16.mxu0 0
    %3737 = vmatpush1.bf16.msra.mxu0 0
    %3738 = vmatprep.subr.bf16.mxu0 0
    %3739 = vmatpush1.bf16.msra.mxu0 0
    %3740 = vmatprep.subr.bf16.mxu0 0
    %3741 = vmatpush1.bf16.msra.mxu0 0
    %3742 = vmatprep.subr.bf16.mxu0 0
    %3743 = vmatpush1.bf16.msra.mxu0 %v3724
    %3744 = vmatprep.subr.bf16.mxu0 0
    %3745 = vmatpush1.bf16.msra.mxu0 %v3723
    %3746 = vmatprep.subr.bf16.mxu0 0
    %3747 = vmatpush2.bf16.msra.mxu0 0
    %3748 = vmatprep.subr.bf16.mxu0 0
    %3749 = vmatpush2.bf16.msra.mxu0 0
    %3750 = vmatprep.subr.bf16.mxu0 0
    %3751 = vmatpush2.bf16.msra.mxu0 0
    %3752 = vmatprep.subr.bf16.mxu0 0
    %3753 = vmatpush2.bf16.msra.mxu0 0
    %3754 = vmatprep.subr.bf16.mxu0 0
    %3755 = vmatpush2.bf16.msra.mxu0 0
    %3756 = vmatprep.subr.bf16.mxu0 0
    %3757 = vmatpush2.bf16.msra.mxu0 0
    %3758 = vmatprep.subr.bf16.mxu0 0
    %3759 = vmatpush2.bf16.msra.mxu0 0
    %3760 = vmatprep.subr.bf16.mxu0 0
    %3761 = vmatpush2.bf16.msra.mxu0 0
    %3762 = vmatprep.mubr.bf16.mxu0 0
    %3763 = vmatmul.mubr.bf16.gmra.mxu0 %v3728
    %v3764 = vpop.f32.mrf.mxu0
    %v3765 = vadd.f32 %v3713, %v3764
    %v3766 = vpop.f32.mrf.mxu0
    %v3767 = vpop.f32.mrf.mxu0
    %v3768 = vadd.f32 %v3713, %v3767
    %v3769 = vpop.f32.mrf.mxu0
    %3770 = vdwg.mxu0
    %v3771 = vmul.f32 %v3765, %v3765
    %v3772 = vmul.f32 %v3768, %v3768
    %v3773 = vmul.f32 %v3765, %v3771
    %v3774 = vmul.f32 %v3768, %v3772
    %v3775 = vmul.f32 %v3773, 0.044715
    %v3776 = vmul.f32 %v3774, 0.044715
    %v3777 = vadd.f32 %v3765, %v3775
    %v3778 = vadd.f32 %v3768, %v3776
    %v3779 = vmul.f32 %v3777, 0.7978846
    %v3780 = vmul.f32 %v3778, 0.7978846
    %v3781 = vtanh.pop %v3779
    %v3782 = vtanh.pop %v3780
    %v3783 = vadd.f32 %v3781, 1.0
    %v3784 = vadd.f32 %v3782, 1.0
    %v3785 = vmul.f32 %v3783, 0.5
    %v3786 = vmul.f32 %v3784, 0.5
    %v3787 = vmul.f32 %v3765, %v3785
    %v3788 = vmul.f32 %v3768, %v3786
    %v3789 = vpack.c.bf16 %v3788, %v3787
    %s3790 = scalar_lea.vmem %s16, 64
    %v3791 = vld [vmem:[%s3790] sm:$0xf]
    %v3792 = vld [vmem:[%s3790 + $0x4] sm:$0xf]
    %v3793 = vld [vmem:[%s3790 + $0x8] sm:$0xf]
    %v3794 = vld [vmem:[%s3790 + $0xc] sm:$0xf]
    %v3795 = vld [vmem:[%s3790 + $0x10] sm:$0xf]
    %v3796 = vld [vmem:[%s3790 + $0x14] sm:$0xf]
    %v3797 = vld [vmem:[%s3790 + $0x18] sm:$0xf]
    %v3798 = vld [vmem:[%s3790 + $0x1c] sm:$0xf]
    %v3799 = vld [vmem:[%s3790 + $0x20] sm:$0xf]
    %v3800 = vld [vmem:[%s3790 + $0x24] sm:$0xf]
    %v3801 = vld [vmem:[%s3790 + $0x28] sm:$0xf]
    %v3802 = vld [vmem:[%s3790 + $0x2c] sm:$0xf]
    %v3803 = vld [vmem:[%s3790 + $0x30] sm:$0xf]
    %v3804 = vld [vmem:[%s3790 + $0x34] sm:$0xf]
    %v3805 = vld [vmem:[%s3790 + $0x38] sm:$0xf]
    %v3806 = vld [vmem:[%s3790 + $0x3c] sm:$0xf]
    %s3807 = scalar_lea.vmem %s17, 1
    %v3808 = vld [vmem:[%s3807] sm:$0x1]
    %v3810 = vlaneseq
    %v3811 = vshrl.u32 %v3810, 7
    %v3812 = vsub.s32 0, %v3811
    %v3813 = vrot.slane %v3808, %v3812
    %v3831 = vunpack.c.l.b16 %v3791
    %v3832 = vunpack.c.l.b16 %v3792
    %v3833 = vunpack.c.l.b16 %v3793
    %v3834 = vunpack.c.l.b16 %v3794
    %v3835 = vunpack.c.l.b16 %v3795
    %v3836 = vunpack.c.l.b16 %v3796
    %v3837 = vunpack.c.l.b16 %v3797
    %v3838 = vunpack.c.l.b16 %v3798
    %v3839 = vunpack.c.l.b16 %v3799
    %v3840 = vunpack.c.l.b16 %v3800
    %v3841 = vunpack.c.l.b16 %v3801
    %v3842 = vunpack.c.l.b16 %v3802
    %v3843 = vunpack.c.l.b16 %v3803
    %v3844 = vunpack.c.l.b16 %v3804
    %v3845 = vunpack.c.l.b16 %v3805
    %v3846 = vunpack.c.l.b16 %v3806
    %v3847 = vpack.c.b16 %v3832, %v3831
    %v3848 = vpack.c.b16 %v3834, %v3833
    %v3849 = vpack.c.b16 %v3836, %v3835
    %v3850 = vpack.c.b16 %v3838, %v3837
    %v3851 = vpack.c.b16 %v3840, %v3839
    %v3852 = vpack.c.b16 %v3842, %v3841
    %v3853 = vpack.c.b16 %v3844, %v3843
    %v3854 = vpack.c.b16 %v3846, %v3845
    %3863 = vmatprep.subr.bf16.mxu0 0
    %3864 = vmatpush1.bf16.msra.mxu0 %v3854
    %3865 = vmatprep.subr.bf16.mxu0 0
    %3866 = vmatpush1.bf16.msra.mxu0 %v3853
    %3867 = vmatprep.subr.bf16.mxu0 0
    %3868 = vmatpush1.bf16.msra.mxu0 %v3852
    %3869 = vmatprep.subr.bf16.mxu0 0
    %3870 = vmatpush1.bf16.msra.mxu0 %v3851
    %3871 = vmatprep.subr.bf16.mxu0 0
    %3872 = vmatpush1.bf16.msra.mxu0 %v3850
    %3873 = vmatprep.subr.bf16.mxu0 0
    %3874 = vmatpush1.bf16.msra.mxu0 %v3849
    %3875 = vmatprep.subr.bf16.mxu0 0
    %3876 = vmatpush1.bf16.msra.mxu0 %v3848
    %3877 = vmatprep.subr.bf16.mxu0 0
    %3878 = vmatpush1.bf16.msra.mxu0 %v3847
    %3879 = vmatprep.subr.bf16.mxu0 0
    %3880 = vmatpush2.bf16.msra.mxu0 0
    %3881 = vmatprep.subr.bf16.mxu0 0
    %3882 = vmatpush2.bf16.msra.mxu0 0
    %3883 = vmatprep.subr.bf16.mxu0 0
    %3884 = vmatpush2.bf16.msra.mxu0 0
    %3885 = vmatprep.subr.bf16.mxu0 0
    %3886 = vmatpush2.bf16.msra.mxu0 0
    %3887 = vmatprep.subr.bf16.mxu0 0
    %3888 = vmatpush2.bf16.msra.mxu0 0
    %3889 = vmatprep.subr.bf16.mxu0 0
    %3890 = vmatpush2.bf16.msra.mxu0 0
    %3891 = vmatprep.subr.bf16.mxu0 0
    %3892 = vmatpush2.bf16.msra.mxu0 0
    %3893 = vmatprep.subr.bf16.mxu0 0
    %3894 = vmatpush2.bf16.msra.mxu0 0
    %3895 = vmatprep.mubr.bf16.mxu0 0
    %3896 = vmatmul.mubr.bf16.gmra.mxu0 %v3789
    %v3897 = vpop.f32.mrf.mxu0
    %v3898 = vadd.f32 %v3813, %v3897
    %v3899 = vpop.f32.mrf.mxu0
    %v3900 = vpop.f32.mrf.mxu0
    %v3901 = vadd.f32 %v3813, %v3900
    %v3902 = vpop.f32.mrf.mxu0
    %3903 = vdwg.mxu0
    %v3904 = vadd.f32 %v3699, %v3898
    %v3905 = vadd.f32 %v3700, %v3901
    %s3906 = scalar_lea.vmem %s18, 1
    %v3907 = vld [vmem:[%s3906] sm:$0x1]
    %s3908 = scalar_lea.vmem %s19, 1
    %v3909 = vld [vmem:[%s3908] sm:$0x1]
    %v3910 = vsel %vm79, %v3904, 0.0
    %3911 = vadd.xlane.f32.xlu0 %v3910
    %v3912 = vpop.xlane.xlu0 %3911
    %v3913 = vsel %vm79, %v3905, 0.0
    %3914 = vadd.xlane.f32.xlu0 %v3913
    %v3915 = vpop.xlane.xlu0 %3914
    %v3916 = vmul.f32 %v3912, %v86
    %v3917 = vmul.f32 %v3915, %v86
    %v3918 = vsub.f32 %v3904, %v3916
    %v3919 = vsub.f32 %v3905, %v3917
    %v3920 = vmul.f32 %v3918, %v3918
    %v3921 = vmul.f32 %v3919, %v3919
    %v3922 = vsel %vm79, %v3920, 0.0
    %3923 = vadd.xlane.f32.xlu0 %v3922
    %v3924 = vpop.xlane.xlu0 %3923
    %v3925 = vsel %vm79, %v3921, 0.0
    %3926 = vadd.xlane.f32.xlu0 %v3925
    %v3927 = vpop.xlane.xlu0 %3926
    %v3928 = vmul.f32 %v3924, %v86
    %v3929 = vmul.f32 %v3927, %v86
    %v3930 = vadd.f32 %v3928, 1e-05
    %v3931 = vadd.f32 %v3929, 1e-05
    %v3932 = vrsqrt.pop %v3930
    %v3933 = vrsqrt.pop %v3931
    %v3934 = vmul.f32 %v3918, %v3932
    %v3935 = vmul.f32 %v3919, %v3933
    %v3937 = vlaneseq
    %v3938 = vshrl.u32 %v3937, 7
    %v3939 = vsub.s32 0, %v3938
    %v3940 = vrot.slane %v3907, %v3939
    %v3942 = vmul.f32 %v3934, %v3940
    %v3943 = vmul.f32 %v3935, %v3940
    %v3945 = vlaneseq
    %v3946 = vshrl.u32 %v3945, 7
    %v3947 = vsub.s32 0, %v3946
    %v3948 = vrot.slane %v3909, %v3947
    %v3950 = vadd.f32 %v3942, %v3948
    %v3951 = vadd.f32 %v3943, %v3948
    %v3953 = vrot.slane %v3951, 7
    %vm3955 = vcmask 1040384
    %v3956 = vsel %vm3955, %v3950, %v3953
    %v3957 = vpack.c.bf16 %v3956, %v3956
    %v3958 = vld [vmem:[%s20] sm:$0xf]
    %v3959 = vld [vmem:[%s20 + $0x4] sm:$0xf]
    %v3960 = vld [vmem:[%s20 + $0x8] sm:$0xf]
    %v3961 = vld [vmem:[%s20 + $0xc] sm:$0xf]
    %v3962 = vld [vmem:[%s21] sm:$0x1]
    %v3964 = vlaneseq
    %v3965 = vshrl.u32 %v3964, 7
    %v3966 = vsub.s32 0, %v3965
    %v3967 = vrot.slane %v3962, %v3966
    %v3973 = vunpack.c.l.b16 %v3958
    %v3974 = vunpack.c.l.b16 %v3959
    %v3975 = vunpack.c.l.b16 %v3960
    %v3976 = vunpack.c.l.b16 %v3961
    %v3977 = vpack.c.b16 %v3974, %v3973
    %v3978 = vpack.c.b16 %v3976, %v3975
    %v3982 = vsel %vm79, %v3957, 0
    %3984 = vmatprep.subr.bf16.mxu0 0
    %3985 = vmatpush1.bf16.msra.mxu0 0
    %3986 = vmatprep.subr.bf16.mxu0 0
    %3987 = vmatpush1.bf16.msra.mxu0 0
    %3988 = vmatprep.subr.bf16.mxu0 0
    %3989 = vmatpush1.bf16.msra.mxu0 0
    %3990 = vmatprep.subr.bf16.mxu0 0
    %3991 = vmatpush1.bf16.msra.mxu0 0
    %3992 = vmatprep.subr.bf16.mxu0 0
    %3993 = vmatpush1.bf16.msra.mxu0 0
    %3994 = vmatprep.subr.bf16.mxu0 0
    %3995 = vmatpush1.bf16.msra.mxu0 0
    %3996 = vmatprep.subr.bf16.mxu0 0
    %3997 = vmatpush1.bf16.msra.mxu0 %v3978
    %3998 = vmatprep.subr.bf16.mxu0 0
    %3999 = vmatpush1.bf16.msra.mxu0 %v3977
    %4000 = vmatprep.subr.bf16.mxu0 0
    %4001 = vmatpush2.bf16.msra.mxu0 0
    %4002 = vmatprep.subr.bf16.mxu0 0
    %4003 = vmatpush2.bf16.msra.mxu0 0
    %4004 = vmatprep.subr.bf16.mxu0 0
    %4005 = vmatpush2.bf16.msra.mxu0 0
    %4006 = vmatprep.subr.bf16.mxu0 0
    %4007 = vmatpush2.bf16.msra.mxu0 0
    %4008 = vmatprep.subr.bf16.mxu0 0
    %4009 = vmatpush2.bf16.msra.mxu0 0
    %4010 = vmatprep.subr.bf16.mxu0 0
    %4011 = vmatpush2.bf16.msra.mxu0 0
    %4012 = vmatprep.subr.bf16.mxu0 0
    %4013 = vmatpush2.bf16.msra.mxu0 0
    %4014 = vmatprep.subr.bf16.mxu0 0
    %4015 = vmatpush2.bf16.msra.mxu0 0
    %4016 = vmatprep.mubr.bf16.mxu0 0
    %4017 = vmatmul.mubr.bf16.gmra.mxu0 %v3982
    %v4018 = vpop.f32.mrf.mxu0
    %v4019 = vadd.f32 %v3967, %v4018
    %v4020 = vpop.f32.mrf.mxu0
    %v4021 = vpop.f32.mrf.mxu0
    %v4022 = vpop.f32.mrf.mxu0
    %4023 = vdwg.mxu0
    %v4024 = vmul.f32 %v4019, %v4019
    %vm4025 = vcmask 1041408
    %v4026 = vsel %vm4025, %v4024, 0.0
    %4027 = vadd.xlane.f32.xlu0 %v4026
    %v4028 = vpop.xlane.xlu0 %4027
    %v4029 = vadd.f32 %v4028, 1e-12
    %v4030 = vrsqrt.pop %v4029
    %v4031 = vmul.f32 %v4019, %v4030
    %4032 = vst [vmem:[#allocation2] sm:$0x3] %v4031
    // Predicated region
    $region90: #{tpu_custom_call.1} parent=1 // pred_check
      _
    $region91: #{tpu_custom_call.1} parent=1 // pred_check_branch
      %4034 = sbr.rel (0) target = $region93
    $region92: #{tpu_custom_call.1} parent=1 // pred_region
      %s4036 = ssub.s32 32, 32
      %4037 = vsyncadd [#allocation3], %s4036
      %s4039 = sshll.u32 [#allocation2], 4
      %s4040 = int_to_ptr.vmem [resolvable:$true] %s4039
      %4042 = dma.vmem_to_hbm [thread:$0]  %s4040, 32, %s22, [#allocation3]
    $region93: #{tpu_custom_call.1} parent=1 // pred_fallthru
      _
    // Predicated region
    $region94: #{tpu_custom_call.1} parent=1 // pred_check
      _
    $region95: #{tpu_custom_call.1} parent=1 // pred_check_branch
      %4044 = sbr.rel (0) target = $region97
    $region96: #{tpu_custom_call.1} parent=1 // pred_region
      %4045 = dma.done [#allocation3], 32
    $region97: #{tpu_custom_call.1} parent=1 // pred_fallthru
      _
    %4046 = vsyncpa [#allocation3], 1

</llo_original>
